<compile_context>
chip_gen: v5e
topology: v5e:2x2
jax: 0.10.0
libtpu: 0.0.40
codegen_flags: <defaults>
</compile_context>

<pallas_src>
import math

import jax
import jax.numpy as jnp
from jax import lax
from jax.experimental import pallas as pl
from jax.experimental.pallas import tpu as pltpu

# --- model hyper-parameters (from the PyTorch script) ------------------------
INPUT_DIM = 2
N_LANDMARKS = 92
FEAT = INPUT_DIM * N_LANDMARKS      # 184
HIDDEN = 64
HEADS = 4
HEAD_DIM = HIDDEN // HEADS
NUM_LAYERS = 2
OUTPUT_DIM = 250
OUT_PAD = 256                       # lane-dense padded classifier width
FFN_DIM = 2048                      # nn.TransformerEncoderLayer default
LN_EPS = 1e-5                       # nn.LayerNorm default
MAX_SEQ_LEN = 1000

PARAMS_PER_LAYER = 12               # wqkv,bqkv,wo,bo,g1,be1,w1,b1,w2,b2,g2,be2


# --- in-kernel helpers --------------------------------------------------------
def _layernorm(x, g, b):
    mean = jnp.mean(x, axis=-1, keepdims=True)
    var = jnp.mean((x - mean) ** 2, axis=-1, keepdims=True)
    return (x - mean) * lax.rsqrt(var + LN_EPS) * g + b


def _bf16(x):
    return x.astype(jnp.bfloat16)


# --- fused per-sequence forward kernel (one grid step = one batch element) ---
def _forward_kernel(x_ref, mask_ref, pe_ref,
                    wemb_ref, bemb_ref, lng_ref, lnb_ref, *rest):
    layer_refs = rest[:PARAMS_PER_LAYER * NUM_LAYERS]
    wfc_ref, bfc_ref, out_ref = rest[PARAMS_PER_LAYER * NUM_LAYERS:]

    x = x_ref[0]                                                # (T, FEAT) f32
    T = x.shape[0]
    mask = mask_ref[0]                                          # (1, T) additive key mask

    # ---- embedding Linear + LayerNorm + positional encoding ----
    h = jnp.dot(_bf16(x), wemb_ref[...],
                preferred_element_type=jnp.float32) + bemb_ref[...]        # (T, D)
    h = _layernorm(h, lng_ref[...], lnb_ref[...])
    h = h + pe_ref[...]                                                    # direct (T,D) add

    # ---- post-norm TransformerEncoder layers ----
    for l in range(NUM_LAYERS):
        (wqkv_ref, bqkv_ref, wo_ref, bo_ref, g1_ref, be1_ref,
         w1_ref, b1_ref, w2_ref, b2_ref, g2_ref, be2_ref) = (
            layer_refs[l * PARAMS_PER_LAYER:(l + 1) * PARAMS_PER_LAYER])
        last_layer = (l == NUM_LAYERS - 1)

        # fused QKV projection on all T rows (K/V always need the full seq)
        qkv = jnp.dot(_bf16(h), wqkv_ref[...],
                      preferred_element_type=jnp.float32) + bqkv_ref[...]  # (T, 3D)
        k = qkv[:, HIDDEN:2 * HIDDEN]                                      # (T, D)
        v = qkv[:, 2 * HIDDEN:3 * HIDDEN]                                  # (T, D)
        if last_layer:
            # Algebraic cut: only the last token's output feeds the classifier,
            # so the final layer's readout / residual / FFN run on one row.
            q = qkv[T - 1:T, 0:HIDDEN]                                     # (1, D)
            h_res = h[T - 1:T, :]                                          # (1, D)
        else:
            q = qkv[:, 0:HIDDEN]                                           # (T, D)
            h_res = h
        # NOTE: 1/sqrt(HEAD_DIM) is already folded into the Q weights/bias.

        # per-head attention; assemble head contexts into one (rows, D) ctx and
        # do a single K=64 Wo matmul (review item: avoid four K=16 passes).
        ctx_parts = []
        for hd in range(HEADS):
            cs = slice(hd * HEAD_DIM, (hd + 1) * HEAD_DIM)
            s = lax.dot_general(_bf16(q[:, cs]), _bf16(k[:, cs]),
                                (((1,), (1,)), ((), ())),
                                preferred_element_type=jnp.float32)        # (rows, T)
            s = s + mask                                                   # key-padding mask
            s = s - jnp.max(s, axis=-1, keepdims=True)
            p = jnp.exp(s)
            p = p * pl.reciprocal(jnp.sum(p, axis=-1, keepdims=True),
                                  approx=True)
            ctx_parts.append(jnp.dot(_bf16(p), _bf16(v[:, cs]),
                                     preferred_element_type=jnp.float32))  # (rows, Dh)
        ctx = jnp.concatenate(ctx_parts, axis=-1)                          # (rows, D)
        attn = jnp.dot(_bf16(ctx), wo_ref[...],
                       preferred_element_type=jnp.float32) + bo_ref[...]   # (rows, D)

        h1 = _layernorm(h_res + attn, g1_ref[...], be1_ref[...])           # post-norm #1

        # FFN: bias + ReLU fused with an immediate bf16 cast (no f32+bf16 slabs)
        f = _bf16(jnp.maximum(
            jnp.dot(_bf16(h1), w1_ref[...],
                    preferred_element_type=jnp.float32) + b1_ref[...], 0.0))  # (rows, FFN)
        f = jnp.dot(f, w2_ref[...],
                    preferred_element_type=jnp.float32) + b2_ref[...]         # (rows, D)
        h = _layernorm(h1 + f, g2_ref[...], be2_ref[...])                     # post-norm #2

    # ---- classifier (h is already the last-token row after the final layer) ----
    out_ref[0] = jnp.dot(_bf16(h), wfc_ref[...],
                         preferred_element_type=jnp.float32) + bfc_ref[...]   # (1, OUT_PAD)


# --- plain-JAX glue (mask, positional encoding, params) -----------------------
def positional_encoding(max_len, d):
    pos = jnp.arange(max_len, dtype=jnp.float32)[:, None]
    div = jnp.exp(jnp.arange(0, d, 2, dtype=jnp.float32) * (-math.log(10000.0) / d))
    pe = jnp.zeros((max_len, d), jnp.float32)
    pe = pe.at[:, 0::2].set(jnp.sin(pos * div))
    pe = pe.at[:, 1::2].set(jnp.cos(pos * div))
    return pe


def compute_additive_mask(x):
    # Mirrors sequence_mask/valid_len: length = index of the first frame that
    # contains a -1, plus one (that frame itself stays valid); if no -1, T.
    B, T = x.shape[0], x.shape[1]
    has_neg1 = jnp.any(x == -1.0, axis=(2, 3))                 # (B, T)
    any_neg = jnp.any(has_neg1, axis=1)                        # (B,)
    first = jnp.argmax(has_neg1, axis=1)                       # (B,)
    length = jnp.where(any_neg, first + 1, T)
    t = jnp.arange(T)[None, :]
    pad = t >= length[:, None]                                 # True = padded key
    return jnp.where(pad, -1e30, 0.0).astype(jnp.float32)


def init_params(key):
    scale = 1.0 / math.sqrt(HEAD_DIM)

    def dense(k, fan_in, fan_out):
        w = jax.random.normal(k, (fan_in, fan_out), jnp.float32) * 0.05
        return w, jnp.zeros((1, fan_out), jnp.float32)

    keys = iter(jax.random.split(key, 12))
    w_emb, b_emb = dense(next(keys), FEAT, HIDDEN)
    w_emb = w_emb.astype(jnp.bfloat16)
    ln_g = jnp.ones((1, HIDDEN), jnp.float32)
    ln_b = jnp.zeros((1, HIDDEN), jnp.float32)

    layers = []
    for _ in range(NUM_LAYERS):
        wqkv, bqkv = dense(next(keys), HIDDEN, 3 * HIDDEN)     # fused Wq|Wk|Wv
        # fold 1/sqrt(head_dim) into the Q projection (one-time host-side fold)
        wqkv = wqkv.at[:, :HIDDEN].multiply(scale)
        bqkv = bqkv.at[:, :HIDDEN].multiply(scale)
        wqkv = wqkv.astype(jnp.bfloat16)
        wo, bo = dense(next(keys), HIDDEN, HIDDEN)
        wo = wo.astype(jnp.bfloat16)
        g1 = jnp.ones((1, HIDDEN), jnp.float32)
        be1 = jnp.zeros((1, HIDDEN), jnp.float32)
        w1, b1 = dense(next(keys), HIDDEN, FFN_DIM)
        w1 = w1.astype(jnp.bfloat16)
        w2, b2 = dense(next(keys), FFN_DIM, HIDDEN)
        w2 = w2.astype(jnp.bfloat16)
        g2 = jnp.ones((1, HIDDEN), jnp.float32)
        be2 = jnp.zeros((1, HIDDEN), jnp.float32)
        layers.append((wqkv, bqkv, wo, bo, g1, be1, w1, b1, w2, b2, g2, be2))

    # classifier padded to 256 output lanes (extra columns are zero)
    w_fc_raw = jax.random.normal(next(keys), (HIDDEN, OUTPUT_DIM), jnp.float32) * 0.05
    w_fc = jnp.zeros((HIDDEN, OUT_PAD), jnp.float32).at[:, :OUTPUT_DIM].set(w_fc_raw)
    w_fc = w_fc.astype(jnp.bfloat16)
    b_fc = jnp.zeros((1, OUT_PAD), jnp.float32)
    return {"w_emb": w_emb, "b_emb": b_emb, "ln_g": ln_g, "ln_b": ln_b,
            "layers": layers, "w_fc": w_fc, "b_fc": b_fc}


def _cost_estimate(B, T, operands):
    rows_per_layer = [T] * (NUM_LAYERS - 1) + [1]              # final-layer cut
    flops = 2 * B * T * FEAT * HIDDEN                          # embedding
    flops += 2 * NUM_LAYERS * B * T * HIDDEN * 3 * HIDDEN      # fused QKV
    for r in rows_per_layer:
        flops += 2 * B * HEADS * r * T * HEAD_DIM * 2          # scores + context
        flops += 2 * B * r * HIDDEN * HIDDEN                   # Wo
        flops += 4 * B * r * HIDDEN * FFN_DIM                  # FFN w1+w2
    flops += 2 * B * HIDDEN * OUT_PAD                          # classifier
    transcendentals = B * HEADS * sum(r * T for r in rows_per_layer)
    bytes_accessed = (sum(int(a.size) * a.dtype.itemsize for a in operands)
                      + B * OUT_PAD * 4)
    return pl.CostEstimate(flops=int(flops),
                           transcendentals=int(transcendentals),
                           bytes_accessed=int(bytes_accessed))


def transformer_forward(x, params):
    # x: (B, T, n_landmarks, input_dim) float32 (eval-mode forward: no dropout)
    B, T, L, C = x.shape
    mask_add = compute_additive_mask(x).reshape(B, 1, T)
    x3d = x.reshape(B, T, L * C)
    pe = positional_encoding(MAX_SEQ_LEN, HIDDEN)[:T]          # (T, D)

    flat_layers = []
    for lp in params["layers"]:
        flat_layers.extend(lp)

    operands = (x3d, mask_add, pe,
                params["w_emb"], params["b_emb"], params["ln_g"], params["ln_b"],
                *flat_layers,
                params["w_fc"], params["b_fc"])

    def rep(shape):
        # whole-array block, constant index -> weight stays resident across steps
        zeros = (0,) * len(shape)
        return pl.BlockSpec(shape, lambda b: zeros)

    in_specs = ([pl.BlockSpec((1, T, FEAT), lambda b: (b, 0, 0)),   # per-batch input
                 pl.BlockSpec((1, 1, T), lambda b: (b, 0, 0)),      # per-batch mask
                 rep((T, HIDDEN))]                                  # shared PE
                + [rep(tuple(a.shape)) for a in operands[3:]])      # weights/biases

    out_specs = pl.BlockSpec((1, 1, OUT_PAD), lambda b: (b, 0, 0))

    out_padded = pl.pallas_call(
        _forward_kernel,
        out_shape=jax.ShapeDtypeStruct((B, 1, OUT_PAD), jnp.float32),
        grid_spec=pltpu.PrefetchScalarGridSpec(
            num_scalar_prefetch=0,
            grid=(B,),
            in_specs=in_specs,
            out_specs=out_specs),
        compiler_params=pltpu.CompilerParams(
            dimension_semantics=("parallel",),          # v7x: batch across both TCs
            vmem_limit_bytes=32 * 1024 * 1024),
        cost_estimate=_cost_estimate(B, T, operands),
    )(*operands)
    return out_padded.reshape(B, OUT_PAD)[:, :OUTPUT_DIM]


if __name__ == "__main__":
    B, T = 2, 8
    key = jax.random.PRNGKey(0)
    kx, kp = jax.random.split(key)
    x = jax.random.uniform(kx, (B, T, N_LANDMARKS, INPUT_DIM), dtype=jnp.float32)
    # simulate padding: frames 6.. of batch element 1 are filled with -1
    x = x.at[1, 6:].set(-1.0)

    params = init_params(kp)
    out = transformer_forward(x, params)
    out = jax.block_until_ready(out)

    assert out.shape == (B, OUTPUT_DIM), out.shape
    assert not bool(jnp.any(jnp.isnan(out))), "NaN in final output"
    print("KERNEL_OK")
</pallas_src>

<mosaic_0001>
module attributes {stable_mosaic.version = 11 : i64} {
  func.func @_forward_kernel(%arg0: i32, %arg1: memref<1x8x184xf32, #tpu.memory_space<vmem>>, %arg2: memref<1x1x8xf32, #tpu.memory_space<vmem>>, %arg3: memref<8x64xf32, #tpu.memory_space<vmem>>, %arg4: memref<184x64xbf16, #tpu.memory_space<vmem>>, %arg5: memref<1x64xf32, #tpu.memory_space<vmem>>, %arg6: memref<1x64xf32, #tpu.memory_space<vmem>>, %arg7: memref<1x64xf32, #tpu.memory_space<vmem>>, %arg8: memref<64x192xbf16, #tpu.memory_space<vmem>>, %arg9: memref<1x192xf32, #tpu.memory_space<vmem>>, %arg10: memref<64x64xbf16, #tpu.memory_space<vmem>>, %arg11: memref<1x64xf32, #tpu.memory_space<vmem>>, %arg12: memref<1x64xf32, #tpu.memory_space<vmem>>, %arg13: memref<1x64xf32, #tpu.memory_space<vmem>>, %arg14: memref<64x2048xbf16, #tpu.memory_space<vmem>>, %arg15: memref<1x2048xf32, #tpu.memory_space<vmem>>, %arg16: memref<2048x64xbf16, #tpu.memory_space<vmem>>, %arg17: memref<1x64xf32, #tpu.memory_space<vmem>>, %arg18: memref<1x64xf32, #tpu.memory_space<vmem>>, %arg19: memref<1x64xf32, #tpu.memory_space<vmem>>, %arg20: memref<64x192xbf16, #tpu.memory_space<vmem>>, %arg21: memref<1x192xf32, #tpu.memory_space<vmem>>, %arg22: memref<64x64xbf16, #tpu.memory_space<vmem>>, %arg23: memref<1x64xf32, #tpu.memory_space<vmem>>, %arg24: memref<1x64xf32, #tpu.memory_space<vmem>>, %arg25: memref<1x64xf32, #tpu.memory_space<vmem>>, %arg26: memref<64x2048xbf16, #tpu.memory_space<vmem>>, %arg27: memref<1x2048xf32, #tpu.memory_space<vmem>>, %arg28: memref<2048x64xbf16, #tpu.memory_space<vmem>>, %arg29: memref<1x64xf32, #tpu.memory_space<vmem>>, %arg30: memref<1x64xf32, #tpu.memory_space<vmem>>, %arg31: memref<1x64xf32, #tpu.memory_space<vmem>>, %arg32: memref<64x256xbf16, #tpu.memory_space<vmem>>, %arg33: memref<1x256xf32, #tpu.memory_space<vmem>>, %arg34: memref<1x1x256xf32, #tpu.memory_space<vmem>>) attributes {dimension_semantics = [#tpu.dimension_semantics<parallel>], iteration_bounds = array<i64: 2>, scalar_prefetch = 0 : i64, scratch_operands = 0 : i64, tpu.core_type = #tpu.core_type<tc>, window_params = [{transform_indices = @transform_0, window_bounds = array<i64: 1, 8, 184>}, {transform_indices = @transform_1, window_bounds = array<i64: 1, 1, 8>}, {pipeline_mode = #tpu.pipeline_mode<synchronous>, transform_indices = @transform_2, window_bounds = array<i64: 8, 64>}, {pipeline_mode = #tpu.pipeline_mode<synchronous>, transform_indices = @transform_3, window_bounds = array<i64: 184, 64>}, {pipeline_mode = #tpu.pipeline_mode<synchronous>, transform_indices = @transform_4, window_bounds = array<i64: 1, 64>}, {pipeline_mode = #tpu.pipeline_mode<synchronous>, transform_indices = @transform_5, window_bounds = array<i64: 1, 64>}, {pipeline_mode = #tpu.pipeline_mode<synchronous>, transform_indices = @transform_6, window_bounds = array<i64: 1, 64>}, {pipeline_mode = #tpu.pipeline_mode<synchronous>, transform_indices = @transform_7, window_bounds = array<i64: 64, 192>}, {pipeline_mode = #tpu.pipeline_mode<synchronous>, transform_indices = @transform_8, window_bounds = array<i64: 1, 192>}, {pipeline_mode = #tpu.pipeline_mode<synchronous>, transform_indices = @transform_9, window_bounds = array<i64: 64, 64>}, {pipeline_mode = #tpu.pipeline_mode<synchronous>, transform_indices = @transform_10, window_bounds = array<i64: 1, 64>}, {pipeline_mode = #tpu.pipeline_mode<synchronous>, transform_indices = @transform_11, window_bounds = array<i64: 1, 64>}, {pipeline_mode = #tpu.pipeline_mode<synchronous>, transform_indices = @transform_12, window_bounds = array<i64: 1, 64>}, {pipeline_mode = #tpu.pipeline_mode<synchronous>, transform_indices = @transform_13, window_bounds = array<i64: 64, 2048>}, {pipeline_mode = #tpu.pipeline_mode<synchronous>, transform_indices = @transform_14, window_bounds = array<i64: 1, 2048>}, {pipeline_mode = #tpu.pipeline_mode<synchronous>, transform_indices = @transform_15, window_bounds = array<i64: 2048, 64>}, {pipeline_mode = #tpu.pipeline_mode<synchronous>, transform_indices = @transform_16, window_bounds = array<i64: 1, 64>}, {pipeline_mode = #tpu.pipeline_mode<synchronous>, transform_indices = @transform_17, window_bounds = array<i64: 1, 64>}, {pipeline_mode = #tpu.pipeline_mode<synchronous>, transform_indices = @transform_18, window_bounds = array<i64: 1, 64>}, {pipeline_mode = #tpu.pipeline_mode<synchronous>, transform_indices = @transform_19, window_bounds = array<i64: 64, 192>}, {pipeline_mode = #tpu.pipeline_mode<synchronous>, transform_indices = @transform_20, window_bounds = array<i64: 1, 192>}, {pipeline_mode = #tpu.pipeline_mode<synchronous>, transform_indices = @transform_21, window_bounds = array<i64: 64, 64>}, {pipeline_mode = #tpu.pipeline_mode<synchronous>, transform_indices = @transform_22, window_bounds = array<i64: 1, 64>}, {pipeline_mode = #tpu.pipeline_mode<synchronous>, transform_indices = @transform_23, window_bounds = array<i64: 1, 64>}, {pipeline_mode = #tpu.pipeline_mode<synchronous>, transform_indices = @transform_24, window_bounds = array<i64: 1, 64>}, {pipeline_mode = #tpu.pipeline_mode<synchronous>, transform_indices = @transform_25, window_bounds = array<i64: 64, 2048>}, {pipeline_mode = #tpu.pipeline_mode<synchronous>, transform_indices = @transform_26, window_bounds = array<i64: 1, 2048>}, {pipeline_mode = #tpu.pipeline_mode<synchronous>, transform_indices = @transform_27, window_bounds = array<i64: 2048, 64>}, {pipeline_mode = #tpu.pipeline_mode<synchronous>, transform_indices = @transform_28, window_bounds = array<i64: 1, 64>}, {pipeline_mode = #tpu.pipeline_mode<synchronous>, transform_indices = @transform_29, window_bounds = array<i64: 1, 64>}, {pipeline_mode = #tpu.pipeline_mode<synchronous>, transform_indices = @transform_30, window_bounds = array<i64: 1, 64>}, {pipeline_mode = #tpu.pipeline_mode<synchronous>, transform_indices = @transform_31, window_bounds = array<i64: 64, 256>}, {pipeline_mode = #tpu.pipeline_mode<synchronous>, transform_indices = @transform_32, window_bounds = array<i64: 1, 256>}, {transform_indices = @transform_33, window_bounds = array<i64: 1, 1, 256>}]} {
    %c0 = arith.constant 0 : index
    %c0_0 = arith.constant 0 : index
    %c0_1 = arith.constant 0 : index
    %0 = vector.load %arg1[%c0, %c0_0, %c0_1] : memref<1x8x184xf32, #tpu.memory_space<vmem>>, vector<1x8x184xf32>
    %1 = vector.shape_cast %0 : vector<1x8x184xf32> to vector<8x184xf32>
    %c0_2 = arith.constant 0 : index
    %c0_3 = arith.constant 0 : index
    %c0_4 = arith.constant 0 : index
    %2 = vector.load %arg2[%c0_2, %c0_3, %c0_4] : memref<1x1x8xf32, #tpu.memory_space<vmem>>, vector<1x1x8xf32>
    %3 = vector.shape_cast %2 : vector<1x1x8xf32> to vector<1x8xf32>
    %4 = arith.truncf %1 : vector<8x184xf32> to vector<8x184xbf16>
    %c0_5 = arith.constant 0 : index
    %c0_6 = arith.constant 0 : index
    %5 = vector.load %arg4[%c0_5, %c0_6] : memref<184x64xbf16, #tpu.memory_space<vmem>>, vector<184x64xbf16>
    %cst = arith.constant dense<0.000000e+00> : vector<8x64xf32>
    %6 = tpu.matmul %4, %5, %cst {dimension_numbers = #tpu.dot_dimension_numbers<[1], [0], [0], [1], [0, 0, 1, 1], [], []>} : vector<8x184xbf16>, vector<184x64xbf16>, vector<8x64xf32> -> vector<8x64xf32>
    %c0_7 = arith.constant 0 : index
    %c0_8 = arith.constant 0 : index
    %7 = vector.load %arg5[%c0_7, %c0_8] : memref<1x64xf32, #tpu.memory_space<vmem>>, vector<1x64xf32>
    %8 = vector.broadcast %7 : vector<1x64xf32> to vector<8x64xf32>
    %9 = arith.addf %6, %8 : vector<8x64xf32>
    %c0_9 = arith.constant 0 : index
    %c0_10 = arith.constant 0 : index
    %10 = vector.load %arg6[%c0_9, %c0_10] : memref<1x64xf32, #tpu.memory_space<vmem>>, vector<1x64xf32>
    %c0_11 = arith.constant 0 : index
    %c0_12 = arith.constant 0 : index
    %11 = vector.load %arg7[%c0_11, %c0_12] : memref<1x64xf32, #tpu.memory_space<vmem>>, vector<1x64xf32>
    %cst_13 = arith.constant dense<0.000000e+00> : vector<8xf32>
    %12 = vector.multi_reduction <add>, %9, %cst_13 [1] : vector<8x64xf32> to vector<8xf32>
    %13 = vector.shape_cast %12 : vector<8xf32> to vector<8x1xf32>
    %cst_14 = arith.constant 6.400000e+01 : f32
    %14 = vector.broadcast %cst_14 : f32 to vector<8x1xf32>
    %15 = arith.divf %13, %14 : vector<8x1xf32>
    %16 = vector.broadcast %15 : vector<8x1xf32> to vector<8x64xf32>
    %17 = arith.subf %9, %16 : vector<8x64xf32>
    %18 = arith.mulf %17, %17 : vector<8x64xf32>
    %cst_15 = arith.constant dense<0.000000e+00> : vector<8xf32>
    %19 = vector.multi_reduction <add>, %18, %cst_15 [1] : vector<8x64xf32> to vector<8xf32>
    %20 = vector.shape_cast %19 : vector<8xf32> to vector<8x1xf32>
    %cst_16 = arith.constant 6.400000e+01 : f32
    %21 = vector.broadcast %cst_16 : f32 to vector<8x1xf32>
    %22 = arith.divf %20, %21 : vector<8x1xf32>
    %23 = vector.broadcast %15 : vector<8x1xf32> to vector<8x64xf32>
    %24 = arith.subf %9, %23 : vector<8x64xf32>
    %cst_17 = arith.constant 9.99999974E-6 : f32
    %25 = vector.broadcast %cst_17 : f32 to vector<8x1xf32>
    %26 = arith.addf %22, %25 : vector<8x1xf32>
    %27 = math.rsqrt %26 : vector<8x1xf32>
    %28 = vector.broadcast %27 : vector<8x1xf32> to vector<8x64xf32>
    %29 = arith.mulf %24, %28 : vector<8x64xf32>
    %30 = vector.broadcast %10 : vector<1x64xf32> to vector<8x64xf32>
    %31 = arith.mulf %29, %30 : vector<8x64xf32>
    %32 = vector.broadcast %11 : vector<1x64xf32> to vector<8x64xf32>
    %33 = arith.addf %31, %32 : vector<8x64xf32>
    %c0_18 = arith.constant 0 : index
    %c0_19 = arith.constant 0 : index
    %34 = vector.load %arg3[%c0_18, %c0_19] : memref<8x64xf32, #tpu.memory_space<vmem>>, vector<8x64xf32>
    %35 = arith.addf %33, %34 : vector<8x64xf32>
    %36 = arith.truncf %35 : vector<8x64xf32> to vector<8x64xbf16>
    %c0_20 = arith.constant 0 : index
    %c0_21 = arith.constant 0 : index
    %37 = vector.load %arg8[%c0_20, %c0_21] : memref<64x192xbf16, #tpu.memory_space<vmem>>, vector<64x192xbf16>
    %cst_22 = arith.constant dense<0.000000e+00> : vector<8x192xf32>
    %38 = tpu.matmul %36, %37, %cst_22 {dimension_numbers = #tpu.dot_dimension_numbers<[1], [0], [0], [1], [0, 0, 1, 1], [], []>} : vector<8x64xbf16>, vector<64x192xbf16>, vector<8x192xf32> -> vector<8x192xf32>
    %c0_23 = arith.constant 0 : index
    %c0_24 = arith.constant 0 : index
    %39 = vector.load %arg9[%c0_23, %c0_24] : memref<1x192xf32, #tpu.memory_space<vmem>>, vector<1x192xf32>
    %40 = vector.broadcast %39 : vector<1x192xf32> to vector<8x192xf32>
    %41 = arith.addf %38, %40 : vector<8x192xf32>
    %42 = vector.extract_strided_slice %41 {offsets = [0, 64], sizes = [8, 64], strides = [1, 1]} : vector<8x192xf32> to vector<8x64xf32>
    %43 = vector.extract_strided_slice %41 {offsets = [0, 128], sizes = [8, 64], strides = [1, 1]} : vector<8x192xf32> to vector<8x64xf32>
    %44 = vector.extract_strided_slice %41 {offsets = [0, 0], sizes = [8, 64], strides = [1, 1]} : vector<8x192xf32> to vector<8x64xf32>
    %45 = vector.extract_strided_slice %44 {offsets = [0, 0], sizes = [8, 16], strides = [1, 1]} : vector<8x64xf32> to vector<8x16xf32>
    %46 = arith.truncf %45 : vector<8x16xf32> to vector<8x16xbf16>
    %47 = vector.extract_strided_slice %42 {offsets = [0, 0], sizes = [8, 16], strides = [1, 1]} : vector<8x64xf32> to vector<8x16xf32>
    %48 = arith.truncf %47 : vector<8x16xf32> to vector<8x16xbf16>
    %cst_25 = arith.constant dense<0.000000e+00> : vector<8x8xf32>
    %49 = tpu.matmul %46, %48, %cst_25 {dimension_numbers = #tpu.dot_dimension_numbers<[1], [1], [0], [0], [0, 0, 1, 0], [], []>} : vector<8x16xbf16>, vector<8x16xbf16>, vector<8x8xf32> -> vector<8x8xf32>
    %50 = vector.broadcast %3 : vector<1x8xf32> to vector<8x8xf32>
    %51 = arith.addf %49, %50 : vector<8x8xf32>
    %cst_26 = arith.constant dense<0xFF800000> : vector<8xf32>
    %52 = vector.multi_reduction <maximumf>, %51, %cst_26 [1] : vector<8x8xf32> to vector<8xf32>
    %53 = vector.shape_cast %52 : vector<8xf32> to vector<8x1xf32>
    %54 = vector.broadcast %53 : vector<8x1xf32> to vector<8x8xf32>
    %55 = arith.subf %51, %54 : vector<8x8xf32>
    %56 = math.exp %55 : vector<8x8xf32>
    %cst_27 = arith.constant dense<0.000000e+00> : vector<8xf32>
    %57 = vector.multi_reduction <add>, %56, %cst_27 [1] : vector<8x8xf32> to vector<8xf32>
    %58 = vector.shape_cast %57 : vector<8xf32> to vector<8x1xf32>
    %59 = tpu.reciprocal %58 {approx = true} : vector<8x1xf32> -> vector<8x1xf32>
    %60 = vector.broadcast %59 : vector<8x1xf32> to vector<8x8xf32>
    %61 = arith.mulf %56, %60 : vector<8x8xf32>
    %62 = arith.truncf %61 : vector<8x8xf32> to vector<8x8xbf16>
    %63 = vector.extract_strided_slice %43 {offsets = [0, 0], sizes = [8, 16], strides = [1, 1]} : vector<8x64xf32> to vector<8x16xf32>
    %64 = arith.truncf %63 : vector<8x16xf32> to vector<8x16xbf16>
    %cst_28 = arith.constant dense<0.000000e+00> : vector<8x16xf32>
    %65 = tpu.matmul %62, %64, %cst_28 {dimension_numbers = #tpu.dot_dimension_numbers<[1], [0], [0], [1], [0, 0, 1, 1], [], []>} : vector<8x8xbf16>, vector<8x16xbf16>, vector<8x16xf32> -> vector<8x16xf32>
    %66 = vector.extract_strided_slice %44 {offsets = [0, 16], sizes = [8, 16], strides = [1, 1]} : vector<8x64xf32> to vector<8x16xf32>
    %67 = arith.truncf %66 : vector<8x16xf32> to vector<8x16xbf16>
    %68 = vector.extract_strided_slice %42 {offsets = [0, 16], sizes = [8, 16], strides = [1, 1]} : vector<8x64xf32> to vector<8x16xf32>
    %69 = arith.truncf %68 : vector<8x16xf32> to vector<8x16xbf16>
    %cst_29 = arith.constant dense<0.000000e+00> : vector<8x8xf32>
    %70 = tpu.matmul %67, %69, %cst_29 {dimension_numbers = #tpu.dot_dimension_numbers<[1], [1], [0], [0], [0, 0, 1, 0], [], []>} : vector<8x16xbf16>, vector<8x16xbf16>, vector<8x8xf32> -> vector<8x8xf32>
    %71 = vector.broadcast %3 : vector<1x8xf32> to vector<8x8xf32>
    %72 = arith.addf %70, %71 : vector<8x8xf32>
    %cst_30 = arith.constant dense<0xFF800000> : vector<8xf32>
    %73 = vector.multi_reduction <maximumf>, %72, %cst_30 [1] : vector<8x8xf32> to vector<8xf32>
    %74 = vector.shape_cast %73 : vector<8xf32> to vector<8x1xf32>
    %75 = vector.broadcast %74 : vector<8x1xf32> to vector<8x8xf32>
    %76 = arith.subf %72, %75 : vector<8x8xf32>
    %77 = math.exp %76 : vector<8x8xf32>
    %cst_31 = arith.constant dense<0.000000e+00> : vector<8xf32>
    %78 = vector.multi_reduction <add>, %77, %cst_31 [1] : vector<8x8xf32> to vector<8xf32>
    %79 = vector.shape_cast %78 : vector<8xf32> to vector<8x1xf32>
    %80 = tpu.reciprocal %79 {approx = true} : vector<8x1xf32> -> vector<8x1xf32>
    %81 = vector.broadcast %80 : vector<8x1xf32> to vector<8x8xf32>
    %82 = arith.mulf %77, %81 : vector<8x8xf32>
    %83 = arith.truncf %82 : vector<8x8xf32> to vector<8x8xbf16>
    %84 = vector.extract_strided_slice %43 {offsets = [0, 16], sizes = [8, 16], strides = [1, 1]} : vector<8x64xf32> to vector<8x16xf32>
    %85 = arith.truncf %84 : vector<8x16xf32> to vector<8x16xbf16>
    %cst_32 = arith.constant dense<0.000000e+00> : vector<8x16xf32>
    %86 = tpu.matmul %83, %85, %cst_32 {dimension_numbers = #tpu.dot_dimension_numbers<[1], [0], [0], [1], [0, 0, 1, 1], [], []>} : vector<8x8xbf16>, vector<8x16xbf16>, vector<8x16xf32> -> vector<8x16xf32>
    %87 = vector.extract_strided_slice %44 {offsets = [0, 32], sizes = [8, 16], strides = [1, 1]} : vector<8x64xf32> to vector<8x16xf32>
    %88 = arith.truncf %87 : vector<8x16xf32> to vector<8x16xbf16>
    %89 = vector.extract_strided_slice %42 {offsets = [0, 32], sizes = [8, 16], strides = [1, 1]} : vector<8x64xf32> to vector<8x16xf32>
    %90 = arith.truncf %89 : vector<8x16xf32> to vector<8x16xbf16>
    %cst_33 = arith.constant dense<0.000000e+00> : vector<8x8xf32>
    %91 = tpu.matmul %88, %90, %cst_33 {dimension_numbers = #tpu.dot_dimension_numbers<[1], [1], [0], [0], [0, 0, 1, 0], [], []>} : vector<8x16xbf16>, vector<8x16xbf16>, vector<8x8xf32> -> vector<8x8xf32>
    %92 = vector.broadcast %3 : vector<1x8xf32> to vector<8x8xf32>
    %93 = arith.addf %91, %92 : vector<8x8xf32>
    %cst_34 = arith.constant dense<0xFF800000> : vector<8xf32>
    %94 = vector.multi_reduction <maximumf>, %93, %cst_34 [1] : vector<8x8xf32> to vector<8xf32>
    %95 = vector.shape_cast %94 : vector<8xf32> to vector<8x1xf32>
    %96 = vector.broadcast %95 : vector<8x1xf32> to vector<8x8xf32>
    %97 = arith.subf %93, %96 : vector<8x8xf32>
    %98 = math.exp %97 : vector<8x8xf32>
    %cst_35 = arith.constant dense<0.000000e+00> : vector<8xf32>
    %99 = vector.multi_reduction <add>, %98, %cst_35 [1] : vector<8x8xf32> to vector<8xf32>
    %100 = vector.shape_cast %99 : vector<8xf32> to vector<8x1xf32>
    %101 = tpu.reciprocal %100 {approx = true} : vector<8x1xf32> -> vector<8x1xf32>
    %102 = vector.broadcast %101 : vector<8x1xf32> to vector<8x8xf32>
    %103 = arith.mulf %98, %102 : vector<8x8xf32>
    %104 = arith.truncf %103 : vector<8x8xf32> to vector<8x8xbf16>
    %105 = vector.extract_strided_slice %43 {offsets = [0, 32], sizes = [8, 16], strides = [1, 1]} : vector<8x64xf32> to vector<8x16xf32>
    %106 = arith.truncf %105 : vector<8x16xf32> to vector<8x16xbf16>
    %cst_36 = arith.constant dense<0.000000e+00> : vector<8x16xf32>
    %107 = tpu.matmul %104, %106, %cst_36 {dimension_numbers = #tpu.dot_dimension_numbers<[1], [0], [0], [1], [0, 0, 1, 1], [], []>} : vector<8x8xbf16>, vector<8x16xbf16>, vector<8x16xf32> -> vector<8x16xf32>
    %108 = vector.extract_strided_slice %44 {offsets = [0, 48], sizes = [8, 16], strides = [1, 1]} : vector<8x64xf32> to vector<8x16xf32>
    %109 = arith.truncf %108 : vector<8x16xf32> to vector<8x16xbf16>
    %110 = vector.extract_strided_slice %42 {offsets = [0, 48], sizes = [8, 16], strides = [1, 1]} : vector<8x64xf32> to vector<8x16xf32>
    %111 = arith.truncf %110 : vector<8x16xf32> to vector<8x16xbf16>
    %cst_37 = arith.constant dense<0.000000e+00> : vector<8x8xf32>
    %112 = tpu.matmul %109, %111, %cst_37 {dimension_numbers = #tpu.dot_dimension_numbers<[1], [1], [0], [0], [0, 0, 1, 0], [], []>} : vector<8x16xbf16>, vector<8x16xbf16>, vector<8x8xf32> -> vector<8x8xf32>
    %113 = vector.broadcast %3 : vector<1x8xf32> to vector<8x8xf32>
    %114 = arith.addf %112, %113 : vector<8x8xf32>
    %cst_38 = arith.constant dense<0xFF800000> : vector<8xf32>
    %115 = vector.multi_reduction <maximumf>, %114, %cst_38 [1] : vector<8x8xf32> to vector<8xf32>
    %116 = vector.shape_cast %115 : vector<8xf32> to vector<8x1xf32>
    %117 = vector.broadcast %116 : vector<8x1xf32> to vector<8x8xf32>
    %118 = arith.subf %114, %117 : vector<8x8xf32>
    %119 = math.exp %118 : vector<8x8xf32>
    %cst_39 = arith.constant dense<0.000000e+00> : vector<8xf32>
    %120 = vector.multi_reduction <add>, %119, %cst_39 [1] : vector<8x8xf32> to vector<8xf32>
    %121 = vector.shape_cast %120 : vector<8xf32> to vector<8x1xf32>
    %122 = tpu.reciprocal %121 {approx = true} : vector<8x1xf32> -> vector<8x1xf32>
    %123 = vector.broadcast %122 : vector<8x1xf32> to vector<8x8xf32>
    %124 = arith.mulf %119, %123 : vector<8x8xf32>
    %125 = arith.truncf %124 : vector<8x8xf32> to vector<8x8xbf16>
    %126 = vector.extract_strided_slice %43 {offsets = [0, 48], sizes = [8, 16], strides = [1, 1]} : vector<8x64xf32> to vector<8x16xf32>
    %127 = arith.truncf %126 : vector<8x16xf32> to vector<8x16xbf16>
    %cst_40 = arith.constant dense<0.000000e+00> : vector<8x16xf32>
    %128 = tpu.matmul %125, %127, %cst_40 {dimension_numbers = #tpu.dot_dimension_numbers<[1], [0], [0], [1], [0, 0, 1, 1], [], []>} : vector<8x8xbf16>, vector<8x16xbf16>, vector<8x16xf32> -> vector<8x16xf32>
    %129 = tpu.concatenate %65, %86, %107, %128 in 1 : vector<8x16xf32>, vector<8x16xf32>, vector<8x16xf32>, vector<8x16xf32> -> vector<8x64xf32>
    %130 = arith.truncf %129 : vector<8x64xf32> to vector<8x64xbf16>
    %c0_41 = arith.constant 0 : index
    %c0_42 = arith.constant 0 : index
    %131 = vector.load %arg10[%c0_41, %c0_42] : memref<64x64xbf16, #tpu.memory_space<vmem>>, vector<64x64xbf16>
    %cst_43 = arith.constant dense<0.000000e+00> : vector<8x64xf32>
    %132 = tpu.matmul %130, %131, %cst_43 {dimension_numbers = #tpu.dot_dimension_numbers<[1], [0], [0], [1], [0, 0, 1, 1], [], []>} : vector<8x64xbf16>, vector<64x64xbf16>, vector<8x64xf32> -> vector<8x64xf32>
    %c0_44 = arith.constant 0 : index
    %c0_45 = arith.constant 0 : index
    %133 = vector.load %arg11[%c0_44, %c0_45] : memref<1x64xf32, #tpu.memory_space<vmem>>, vector<1x64xf32>
    %134 = vector.broadcast %133 : vector<1x64xf32> to vector<8x64xf32>
    %135 = arith.addf %132, %134 : vector<8x64xf32>
    %136 = arith.addf %35, %135 : vector<8x64xf32>
    %c0_46 = arith.constant 0 : index
    %c0_47 = arith.constant 0 : index
    %137 = vector.load %arg12[%c0_46, %c0_47] : memref<1x64xf32, #tpu.memory_space<vmem>>, vector<1x64xf32>
    %c0_48 = arith.constant 0 : index
    %c0_49 = arith.constant 0 : index
    %138 = vector.load %arg13[%c0_48, %c0_49] : memref<1x64xf32, #tpu.memory_space<vmem>>, vector<1x64xf32>
    %cst_50 = arith.constant dense<0.000000e+00> : vector<8xf32>
    %139 = vector.multi_reduction <add>, %136, %cst_50 [1] : vector<8x64xf32> to vector<8xf32>
    %140 = vector.shape_cast %139 : vector<8xf32> to vector<8x1xf32>
    %cst_51 = arith.constant 6.400000e+01 : f32
    %141 = vector.broadcast %cst_51 : f32 to vector<8x1xf32>
    %142 = arith.divf %140, %141 : vector<8x1xf32>
    %143 = vector.broadcast %142 : vector<8x1xf32> to vector<8x64xf32>
    %144 = arith.subf %136, %143 : vector<8x64xf32>
    %145 = arith.mulf %144, %144 : vector<8x64xf32>
    %cst_52 = arith.constant dense<0.000000e+00> : vector<8xf32>
    %146 = vector.multi_reduction <add>, %145, %cst_52 [1] : vector<8x64xf32> to vector<8xf32>
    %147 = vector.shape_cast %146 : vector<8xf32> to vector<8x1xf32>
    %cst_53 = arith.constant 6.400000e+01 : f32
    %148 = vector.broadcast %cst_53 : f32 to vector<8x1xf32>
    %149 = arith.divf %147, %148 : vector<8x1xf32>
    %150 = vector.broadcast %142 : vector<8x1xf32> to vector<8x64xf32>
    %151 = arith.subf %136, %150 : vector<8x64xf32>
    %cst_54 = arith.constant 9.99999974E-6 : f32
    %152 = vector.broadcast %cst_54 : f32 to vector<8x1xf32>
    %153 = arith.addf %149, %152 : vector<8x1xf32>
    %154 = math.rsqrt %153 : vector<8x1xf32>
    %155 = vector.broadcast %154 : vector<8x1xf32> to vector<8x64xf32>
    %156 = arith.mulf %151, %155 : vector<8x64xf32>
    %157 = vector.broadcast %137 : vector<1x64xf32> to vector<8x64xf32>
    %158 = arith.mulf %156, %157 : vector<8x64xf32>
    %159 = vector.broadcast %138 : vector<1x64xf32> to vector<8x64xf32>
    %160 = arith.addf %158, %159 : vector<8x64xf32>
    %161 = arith.truncf %160 : vector<8x64xf32> to vector<8x64xbf16>
    %c0_55 = arith.constant 0 : index
    %c0_56 = arith.constant 0 : index
    %162 = vector.load %arg14[%c0_55, %c0_56] : memref<64x2048xbf16, #tpu.memory_space<vmem>>, vector<64x2048xbf16>
    %cst_57 = arith.constant dense<0.000000e+00> : vector<8x2048xf32>
    %163 = tpu.matmul %161, %162, %cst_57 {dimension_numbers = #tpu.dot_dimension_numbers<[1], [0], [0], [1], [0, 0, 1, 1], [], []>} : vector<8x64xbf16>, vector<64x2048xbf16>, vector<8x2048xf32> -> vector<8x2048xf32>
    %c0_58 = arith.constant 0 : index
    %c0_59 = arith.constant 0 : index
    %164 = vector.load %arg15[%c0_58, %c0_59] : memref<1x2048xf32, #tpu.memory_space<vmem>>, vector<1x2048xf32>
    %165 = vector.broadcast %164 : vector<1x2048xf32> to vector<8x2048xf32>
    %166 = arith.addf %163, %165 : vector<8x2048xf32>
    %cst_60 = arith.constant 0.000000e+00 : f32
    %167 = vector.broadcast %cst_60 : f32 to vector<8x2048xf32>
    %168 = arith.maximumf %166, %167 : vector<8x2048xf32>
    %169 = arith.truncf %168 : vector<8x2048xf32> to vector<8x2048xbf16>
    %c0_61 = arith.constant 0 : index
    %c0_62 = arith.constant 0 : index
    %170 = vector.load %arg16[%c0_61, %c0_62] : memref<2048x64xbf16, #tpu.memory_space<vmem>>, vector<2048x64xbf16>
    %cst_63 = arith.constant dense<0.000000e+00> : vector<8x64xf32>
    %171 = tpu.matmul %169, %170, %cst_63 {dimension_numbers = #tpu.dot_dimension_numbers<[1], [0], [0], [1], [0, 0, 1, 1], [], []>} : vector<8x2048xbf16>, vector<2048x64xbf16>, vector<8x64xf32> -> vector<8x64xf32>
    %c0_64 = arith.constant 0 : index
    %c0_65 = arith.constant 0 : index
    %172 = vector.load %arg17[%c0_64, %c0_65] : memref<1x64xf32, #tpu.memory_space<vmem>>, vector<1x64xf32>
    %173 = vector.broadcast %172 : vector<1x64xf32> to vector<8x64xf32>
    %174 = arith.addf %171, %173 : vector<8x64xf32>
    %175 = arith.addf %160, %174 : vector<8x64xf32>
    %c0_66 = arith.constant 0 : index
    %c0_67 = arith.constant 0 : index
    %176 = vector.load %arg18[%c0_66, %c0_67] : memref<1x64xf32, #tpu.memory_space<vmem>>, vector<1x64xf32>
    %c0_68 = arith.constant 0 : index
    %c0_69 = arith.constant 0 : index
    %177 = vector.load %arg19[%c0_68, %c0_69] : memref<1x64xf32, #tpu.memory_space<vmem>>, vector<1x64xf32>
    %cst_70 = arith.constant dense<0.000000e+00> : vector<8xf32>
    %178 = vector.multi_reduction <add>, %175, %cst_70 [1] : vector<8x64xf32> to vector<8xf32>
    %179 = vector.shape_cast %178 : vector<8xf32> to vector<8x1xf32>
    %cst_71 = arith.constant 6.400000e+01 : f32
    %180 = vector.broadcast %cst_71 : f32 to vector<8x1xf32>
    %181 = arith.divf %179, %180 : vector<8x1xf32>
    %182 = vector.broadcast %181 : vector<8x1xf32> to vector<8x64xf32>
    %183 = arith.subf %175, %182 : vector<8x64xf32>
    %184 = arith.mulf %183, %183 : vector<8x64xf32>
    %cst_72 = arith.constant dense<0.000000e+00> : vector<8xf32>
    %185 = vector.multi_reduction <add>, %184, %cst_72 [1] : vector<8x64xf32> to vector<8xf32>
    %186 = vector.shape_cast %185 : vector<8xf32> to vector<8x1xf32>
    %cst_73 = arith.constant 6.400000e+01 : f32
    %187 = vector.broadcast %cst_73 : f32 to vector<8x1xf32>
    %188 = arith.divf %186, %187 : vector<8x1xf32>
    %189 = vector.broadcast %181 : vector<8x1xf32> to vector<8x64xf32>
    %190 = arith.subf %175, %189 : vector<8x64xf32>
    %cst_74 = arith.constant 9.99999974E-6 : f32
    %191 = vector.broadcast %cst_74 : f32 to vector<8x1xf32>
    %192 = arith.addf %188, %191 : vector<8x1xf32>
    %193 = math.rsqrt %192 : vector<8x1xf32>
    %194 = vector.broadcast %193 : vector<8x1xf32> to vector<8x64xf32>
    %195 = arith.mulf %190, %194 : vector<8x64xf32>
    %196 = vector.broadcast %176 : vector<1x64xf32> to vector<8x64xf32>
    %197 = arith.mulf %195, %196 : vector<8x64xf32>
    %198 = vector.broadcast %177 : vector<1x64xf32> to vector<8x64xf32>
    %199 = arith.addf %197, %198 : vector<8x64xf32>
    %200 = arith.truncf %199 : vector<8x64xf32> to vector<8x64xbf16>
    %c0_75 = arith.constant 0 : index
    %c0_76 = arith.constant 0 : index
    %201 = vector.load %arg20[%c0_75, %c0_76] : memref<64x192xbf16, #tpu.memory_space<vmem>>, vector<64x192xbf16>
    %cst_77 = arith.constant dense<0.000000e+00> : vector<8x192xf32>
    %202 = tpu.matmul %200, %201, %cst_77 {dimension_numbers = #tpu.dot_dimension_numbers<[1], [0], [0], [1], [0, 0, 1, 1], [], []>} : vector<8x64xbf16>, vector<64x192xbf16>, vector<8x192xf32> -> vector<8x192xf32>
    %c0_78 = arith.constant 0 : index
    %c0_79 = arith.constant 0 : index
    %203 = vector.load %arg21[%c0_78, %c0_79] : memref<1x192xf32, #tpu.memory_space<vmem>>, vector<1x192xf32>
    %204 = vector.broadcast %203 : vector<1x192xf32> to vector<8x192xf32>
    %205 = arith.addf %202, %204 : vector<8x192xf32>
    %206 = vector.extract_strided_slice %205 {offsets = [0, 64], sizes = [8, 64], strides = [1, 1]} : vector<8x192xf32> to vector<8x64xf32>
    %207 = vector.extract_strided_slice %205 {offsets = [0, 128], sizes = [8, 64], strides = [1, 1]} : vector<8x192xf32> to vector<8x64xf32>
    %208 = vector.extract_strided_slice %205 {offsets = [7, 0], sizes = [1, 64], strides = [1, 1]} : vector<8x192xf32> to vector<1x64xf32>
    %209 = vector.extract_strided_slice %199 {offsets = [7, 0], sizes = [1, 64], strides = [1, 1]} : vector<8x64xf32> to vector<1x64xf32>
    %210 = vector.extract_strided_slice %208 {offsets = [0, 0], sizes = [1, 16], strides = [1, 1]} : vector<1x64xf32> to vector<1x16xf32>
    %211 = arith.truncf %210 : vector<1x16xf32> to vector<1x16xbf16>
    %212 = vector.extract_strided_slice %206 {offsets = [0, 0], sizes = [8, 16], strides = [1, 1]} : vector<8x64xf32> to vector<8x16xf32>
    %213 = arith.truncf %212 : vector<8x16xf32> to vector<8x16xbf16>
    %cst_80 = arith.constant dense<0.000000e+00> : vector<1x8xf32>
    %214 = tpu.matmul %211, %213, %cst_80 {dimension_numbers = #tpu.dot_dimension_numbers<[1], [1], [0], [0], [0, 0, 1, 0], [], []>} : vector<1x16xbf16>, vector<8x16xbf16>, vector<1x8xf32> -> vector<1x8xf32>
    %215 = arith.addf %214, %3 : vector<1x8xf32>
    %cst_81 = arith.constant dense<0xFF800000> : vector<1xf32>
    %216 = vector.multi_reduction <maximumf>, %215, %cst_81 [1] : vector<1x8xf32> to vector<1xf32>
    %217 = vector.shape_cast %216 : vector<1xf32> to vector<1x1xf32>
    %218 = vector.broadcast %217 : vector<1x1xf32> to vector<1x8xf32>
    %219 = arith.subf %215, %218 : vector<1x8xf32>
    %220 = math.exp %219 : vector<1x8xf32>
    %cst_82 = arith.constant dense<0.000000e+00> : vector<1xf32>
    %221 = vector.multi_reduction <add>, %220, %cst_82 [1] : vector<1x8xf32> to vector<1xf32>
    %222 = vector.shape_cast %221 : vector<1xf32> to vector<1x1xf32>
    %223 = tpu.reciprocal %222 {approx = true} : vector<1x1xf32> -> vector<1x1xf32>
    %224 = vector.broadcast %223 : vector<1x1xf32> to vector<1x8xf32>
    %225 = arith.mulf %220, %224 : vector<1x8xf32>
    %226 = arith.truncf %225 : vector<1x8xf32> to vector<1x8xbf16>
    %227 = vector.extract_strided_slice %207 {offsets = [0, 0], sizes = [8, 16], strides = [1, 1]} : vector<8x64xf32> to vector<8x16xf32>
    %228 = arith.truncf %227 : vector<8x16xf32> to vector<8x16xbf16>
    %cst_83 = arith.constant dense<0.000000e+00> : vector<1x16xf32>
    %229 = tpu.matmul %226, %228, %cst_83 {dimension_numbers = #tpu.dot_dimension_numbers<[1], [0], [0], [1], [0, 0, 1, 1], [], []>} : vector<1x8xbf16>, vector<8x16xbf16>, vector<1x16xf32> -> vector<1x16xf32>
    %230 = vector.extract_strided_slice %208 {offsets = [0, 16], sizes = [1, 16], strides = [1, 1]} : vector<1x64xf32> to vector<1x16xf32>
    %231 = arith.truncf %230 : vector<1x16xf32> to vector<1x16xbf16>
    %232 = vector.extract_strided_slice %206 {offsets = [0, 16], sizes = [8, 16], strides = [1, 1]} : vector<8x64xf32> to vector<8x16xf32>
    %233 = arith.truncf %232 : vector<8x16xf32> to vector<8x16xbf16>
    %cst_84 = arith.constant dense<0.000000e+00> : vector<1x8xf32>
    %234 = tpu.matmul %231, %233, %cst_84 {dimension_numbers = #tpu.dot_dimension_numbers<[1], [1], [0], [0], [0, 0, 1, 0], [], []>} : vector<1x16xbf16>, vector<8x16xbf16>, vector<1x8xf32> -> vector<1x8xf32>
    %235 = arith.addf %234, %3 : vector<1x8xf32>
    %cst_85 = arith.constant dense<0xFF800000> : vector<1xf32>
    %236 = vector.multi_reduction <maximumf>, %235, %cst_85 [1] : vector<1x8xf32> to vector<1xf32>
    %237 = vector.shape_cast %236 : vector<1xf32> to vector<1x1xf32>
    %238 = vector.broadcast %237 : vector<1x1xf32> to vector<1x8xf32>
    %239 = arith.subf %235, %238 : vector<1x8xf32>
    %240 = math.exp %239 : vector<1x8xf32>
    %cst_86 = arith.constant dense<0.000000e+00> : vector<1xf32>
    %241 = vector.multi_reduction <add>, %240, %cst_86 [1] : vector<1x8xf32> to vector<1xf32>
    %242 = vector.shape_cast %241 : vector<1xf32> to vector<1x1xf32>
    %243 = tpu.reciprocal %242 {approx = true} : vector<1x1xf32> -> vector<1x1xf32>
    %244 = vector.broadcast %243 : vector<1x1xf32> to vector<1x8xf32>
    %245 = arith.mulf %240, %244 : vector<1x8xf32>
    %246 = arith.truncf %245 : vector<1x8xf32> to vector<1x8xbf16>
    %247 = vector.extract_strided_slice %207 {offsets = [0, 16], sizes = [8, 16], strides = [1, 1]} : vector<8x64xf32> to vector<8x16xf32>
    %248 = arith.truncf %247 : vector<8x16xf32> to vector<8x16xbf16>
    %cst_87 = arith.constant dense<0.000000e+00> : vector<1x16xf32>
    %249 = tpu.matmul %246, %248, %cst_87 {dimension_numbers = #tpu.dot_dimension_numbers<[1], [0], [0], [1], [0, 0, 1, 1], [], []>} : vector<1x8xbf16>, vector<8x16xbf16>, vector<1x16xf32> -> vector<1x16xf32>
    %250 = vector.extract_strided_slice %208 {offsets = [0, 32], sizes = [1, 16], strides = [1, 1]} : vector<1x64xf32> to vector<1x16xf32>
    %251 = arith.truncf %250 : vector<1x16xf32> to vector<1x16xbf16>
    %252 = vector.extract_strided_slice %206 {offsets = [0, 32], sizes = [8, 16], strides = [1, 1]} : vector<8x64xf32> to vector<8x16xf32>
    %253 = arith.truncf %252 : vector<8x16xf32> to vector<8x16xbf16>
    %cst_88 = arith.constant dense<0.000000e+00> : vector<1x8xf32>
    %254 = tpu.matmul %251, %253, %cst_88 {dimension_numbers = #tpu.dot_dimension_numbers<[1], [1], [0], [0], [0, 0, 1, 0], [], []>} : vector<1x16xbf16>, vector<8x16xbf16>, vector<1x8xf32> -> vector<1x8xf32>
    %255 = arith.addf %254, %3 : vector<1x8xf32>
    %cst_89 = arith.constant dense<0xFF800000> : vector<1xf32>
    %256 = vector.multi_reduction <maximumf>, %255, %cst_89 [1] : vector<1x8xf32> to vector<1xf32>
    %257 = vector.shape_cast %256 : vector<1xf32> to vector<1x1xf32>
    %258 = vector.broadcast %257 : vector<1x1xf32> to vector<1x8xf32>
    %259 = arith.subf %255, %258 : vector<1x8xf32>
    %260 = math.exp %259 : vector<1x8xf32>
    %cst_90 = arith.constant dense<0.000000e+00> : vector<1xf32>
    %261 = vector.multi_reduction <add>, %260, %cst_90 [1] : vector<1x8xf32> to vector<1xf32>
    %262 = vector.shape_cast %261 : vector<1xf32> to vector<1x1xf32>
    %263 = tpu.reciprocal %262 {approx = true} : vector<1x1xf32> -> vector<1x1xf32>
    %264 = vector.broadcast %263 : vector<1x1xf32> to vector<1x8xf32>
    %265 = arith.mulf %260, %264 : vector<1x8xf32>
    %266 = arith.truncf %265 : vector<1x8xf32> to vector<1x8xbf16>
    %267 = vector.extract_strided_slice %207 {offsets = [0, 32], sizes = [8, 16], strides = [1, 1]} : vector<8x64xf32> to vector<8x16xf32>
    %268 = arith.truncf %267 : vector<8x16xf32> to vector<8x16xbf16>
    %cst_91 = arith.constant dense<0.000000e+00> : vector<1x16xf32>
    %269 = tpu.matmul %266, %268, %cst_91 {dimension_numbers = #tpu.dot_dimension_numbers<[1], [0], [0], [1], [0, 0, 1, 1], [], []>} : vector<1x8xbf16>, vector<8x16xbf16>, vector<1x16xf32> -> vector<1x16xf32>
    %270 = vector.extract_strided_slice %208 {offsets = [0, 48], sizes = [1, 16], strides = [1, 1]} : vector<1x64xf32> to vector<1x16xf32>
    %271 = arith.truncf %270 : vector<1x16xf32> to vector<1x16xbf16>
    %272 = vector.extract_strided_slice %206 {offsets = [0, 48], sizes = [8, 16], strides = [1, 1]} : vector<8x64xf32> to vector<8x16xf32>
    %273 = arith.truncf %272 : vector<8x16xf32> to vector<8x16xbf16>
    %cst_92 = arith.constant dense<0.000000e+00> : vector<1x8xf32>
    %274 = tpu.matmul %271, %273, %cst_92 {dimension_numbers = #tpu.dot_dimension_numbers<[1], [1], [0], [0], [0, 0, 1, 0], [], []>} : vector<1x16xbf16>, vector<8x16xbf16>, vector<1x8xf32> -> vector<1x8xf32>
    %275 = arith.addf %274, %3 : vector<1x8xf32>
    %cst_93 = arith.constant dense<0xFF800000> : vector<1xf32>
    %276 = vector.multi_reduction <maximumf>, %275, %cst_93 [1] : vector<1x8xf32> to vector<1xf32>
    %277 = vector.shape_cast %276 : vector<1xf32> to vector<1x1xf32>
    %278 = vector.broadcast %277 : vector<1x1xf32> to vector<1x8xf32>
    %279 = arith.subf %275, %278 : vector<1x8xf32>
    %280 = math.exp %279 : vector<1x8xf32>
    %cst_94 = arith.constant dense<0.000000e+00> : vector<1xf32>
    %281 = vector.multi_reduction <add>, %280, %cst_94 [1] : vector<1x8xf32> to vector<1xf32>
    %282 = vector.shape_cast %281 : vector<1xf32> to vector<1x1xf32>
    %283 = tpu.reciprocal %282 {approx = true} : vector<1x1xf32> -> vector<1x1xf32>
    %284 = vector.broadcast %283 : vector<1x1xf32> to vector<1x8xf32>
    %285 = arith.mulf %280, %284 : vector<1x8xf32>
    %286 = arith.truncf %285 : vector<1x8xf32> to vector<1x8xbf16>
    %287 = vector.extract_strided_slice %207 {offsets = [0, 48], sizes = [8, 16], strides = [1, 1]} : vector<8x64xf32> to vector<8x16xf32>
    %288 = arith.truncf %287 : vector<8x16xf32> to vector<8x16xbf16>
    %cst_95 = arith.constant dense<0.000000e+00> : vector<1x16xf32>
    %289 = tpu.matmul %286, %288, %cst_95 {dimension_numbers = #tpu.dot_dimension_numbers<[1], [0], [0], [1], [0, 0, 1, 1], [], []>} : vector<1x8xbf16>, vector<8x16xbf16>, vector<1x16xf32> -> vector<1x16xf32>
    %290 = tpu.concatenate %229, %249, %269, %289 in 1 : vector<1x16xf32>, vector<1x16xf32>, vector<1x16xf32>, vector<1x16xf32> -> vector<1x64xf32>
    %291 = arith.truncf %290 : vector<1x64xf32> to vector<1x64xbf16>
    %c0_96 = arith.constant 0 : index
    %c0_97 = arith.constant 0 : index
    %292 = vector.load %arg22[%c0_96, %c0_97] : memref<64x64xbf16, #tpu.memory_space<vmem>>, vector<64x64xbf16>
    %cst_98 = arith.constant dense<0.000000e+00> : vector<1x64xf32>
    %293 = tpu.matmul %291, %292, %cst_98 {dimension_numbers = #tpu.dot_dimension_numbers<[1], [0], [0], [1], [0, 0, 1, 1], [], []>} : vector<1x64xbf16>, vector<64x64xbf16>, vector<1x64xf32> -> vector<1x64xf32>
    %c0_99 = arith.constant 0 : index
    %c0_100 = arith.constant 0 : index
    %294 = vector.load %arg23[%c0_99, %c0_100] : memref<1x64xf32, #tpu.memory_space<vmem>>, vector<1x64xf32>
    %295 = arith.addf %293, %294 : vector<1x64xf32>
    %296 = arith.addf %209, %295 : vector<1x64xf32>
    %c0_101 = arith.constant 0 : index
    %c0_102 = arith.constant 0 : index
    %297 = vector.load %arg24[%c0_101, %c0_102] : memref<1x64xf32, #tpu.memory_space<vmem>>, vector<1x64xf32>
    %c0_103 = arith.constant 0 : index
    %c0_104 = arith.constant 0 : index
    %298 = vector.load %arg25[%c0_103, %c0_104] : memref<1x64xf32, #tpu.memory_space<vmem>>, vector<1x64xf32>
    %cst_105 = arith.constant dense<0.000000e+00> : vector<1xf32>
    %299 = vector.multi_reduction <add>, %296, %cst_105 [1] : vector<1x64xf32> to vector<1xf32>
    %300 = vector.shape_cast %299 : vector<1xf32> to vector<1x1xf32>
    %cst_106 = arith.constant 6.400000e+01 : f32
    %301 = vector.broadcast %cst_106 : f32 to vector<1x1xf32>
    %302 = arith.divf %300, %301 : vector<1x1xf32>
    %303 = vector.broadcast %302 : vector<1x1xf32> to vector<1x64xf32>
    %304 = arith.subf %296, %303 : vector<1x64xf32>
    %305 = arith.mulf %304, %304 : vector<1x64xf32>
    %cst_107 = arith.constant dense<0.000000e+00> : vector<1xf32>
    %306 = vector.multi_reduction <add>, %305, %cst_107 [1] : vector<1x64xf32> to vector<1xf32>
    %307 = vector.shape_cast %306 : vector<1xf32> to vector<1x1xf32>
    %cst_108 = arith.constant 6.400000e+01 : f32
    %308 = vector.broadcast %cst_108 : f32 to vector<1x1xf32>
    %309 = arith.divf %307, %308 : vector<1x1xf32>
    %310 = vector.broadcast %302 : vector<1x1xf32> to vector<1x64xf32>
    %311 = arith.subf %296, %310 : vector<1x64xf32>
    %cst_109 = arith.constant 9.99999974E-6 : f32
    %312 = vector.broadcast %cst_109 : f32 to vector<1x1xf32>
    %313 = arith.addf %309, %312 : vector<1x1xf32>
    %314 = math.rsqrt %313 : vector<1x1xf32>
    %315 = vector.broadcast %314 : vector<1x1xf32> to vector<1x64xf32>
    %316 = arith.mulf %311, %315 : vector<1x64xf32>
    %317 = arith.mulf %316, %297 : vector<1x64xf32>
    %318 = arith.addf %317, %298 : vector<1x64xf32>
    %319 = arith.truncf %318 : vector<1x64xf32> to vector<1x64xbf16>
    %c0_110 = arith.constant 0 : index
    %c0_111 = arith.constant 0 : index
    %320 = vector.load %arg26[%c0_110, %c0_111] : memref<64x2048xbf16, #tpu.memory_space<vmem>>, vector<64x2048xbf16>
    %cst_112 = arith.constant dense<0.000000e+00> : vector<1x2048xf32>
    %321 = tpu.matmul %319, %320, %cst_112 {dimension_numbers = #tpu.dot_dimension_numbers<[1], [0], [0], [1], [0, 0, 1, 1], [], []>} : vector<1x64xbf16>, vector<64x2048xbf16>, vector<1x2048xf32> -> vector<1x2048xf32>
    %c0_113 = arith.constant 0 : index
    %c0_114 = arith.constant 0 : index
    %322 = vector.load %arg27[%c0_113, %c0_114] : memref<1x2048xf32, #tpu.memory_space<vmem>>, vector<1x2048xf32>
    %323 = arith.addf %321, %322 : vector<1x2048xf32>
    %cst_115 = arith.constant 0.000000e+00 : f32
    %324 = vector.broadcast %cst_115 : f32 to vector<1x2048xf32>
    %325 = arith.maximumf %323, %324 : vector<1x2048xf32>
    %326 = arith.truncf %325 : vector<1x2048xf32> to vector<1x2048xbf16>
    %c0_116 = arith.constant 0 : index
    %c0_117 = arith.constant 0 : index
    %327 = vector.load %arg28[%c0_116, %c0_117] : memref<2048x64xbf16, #tpu.memory_space<vmem>>, vector<2048x64xbf16>
    %cst_118 = arith.constant dense<0.000000e+00> : vector<1x64xf32>
    %328 = tpu.matmul %326, %327, %cst_118 {dimension_numbers = #tpu.dot_dimension_numbers<[1], [0], [0], [1], [0, 0, 1, 1], [], []>} : vector<1x2048xbf16>, vector<2048x64xbf16>, vector<1x64xf32> -> vector<1x64xf32>
    %c0_119 = arith.constant 0 : index
    %c0_120 = arith.constant 0 : index
    %329 = vector.load %arg29[%c0_119, %c0_120] : memref<1x64xf32, #tpu.memory_space<vmem>>, vector<1x64xf32>
    %330 = arith.addf %328, %329 : vector<1x64xf32>
    %331 = arith.addf %318, %330 : vector<1x64xf32>
    %c0_121 = arith.constant 0 : index
    %c0_122 = arith.constant 0 : index
    %332 = vector.load %arg30[%c0_121, %c0_122] : memref<1x64xf32, #tpu.memory_space<vmem>>, vector<1x64xf32>
    %c0_123 = arith.constant 0 : index
    %c0_124 = arith.constant 0 : index
    %333 = vector.load %arg31[%c0_123, %c0_124] : memref<1x64xf32, #tpu.memory_space<vmem>>, vector<1x64xf32>
    %cst_125 = arith.constant dense<0.000000e+00> : vector<1xf32>
    %334 = vector.multi_reduction <add>, %331, %cst_125 [1] : vector<1x64xf32> to vector<1xf32>
    %335 = vector.shape_cast %334 : vector<1xf32> to vector<1x1xf32>
    %cst_126 = arith.constant 6.400000e+01 : f32
    %336 = vector.broadcast %cst_126 : f32 to vector<1x1xf32>
    %337 = arith.divf %335, %336 : vector<1x1xf32>
    %338 = vector.broadcast %337 : vector<1x1xf32> to vector<1x64xf32>
    %339 = arith.subf %331, %338 : vector<1x64xf32>
    %340 = arith.mulf %339, %339 : vector<1x64xf32>
    %cst_127 = arith.constant dense<0.000000e+00> : vector<1xf32>
    %341 = vector.multi_reduction <add>, %340, %cst_127 [1] : vector<1x64xf32> to vector<1xf32>
    %342 = vector.shape_cast %341 : vector<1xf32> to vector<1x1xf32>
    %cst_128 = arith.constant 6.400000e+01 : f32
    %343 = vector.broadcast %cst_128 : f32 to vector<1x1xf32>
    %344 = arith.divf %342, %343 : vector<1x1xf32>
    %345 = vector.broadcast %337 : vector<1x1xf32> to vector<1x64xf32>
    %346 = arith.subf %331, %345 : vector<1x64xf32>
    %cst_129 = arith.constant 9.99999974E-6 : f32
    %347 = vector.broadcast %cst_129 : f32 to vector<1x1xf32>
    %348 = arith.addf %344, %347 : vector<1x1xf32>
    %349 = math.rsqrt %348 : vector<1x1xf32>
    %350 = vector.broadcast %349 : vector<1x1xf32> to vector<1x64xf32>
    %351 = arith.mulf %346, %350 : vector<1x64xf32>
    %352 = arith.mulf %351, %332 : vector<1x64xf32>
    %353 = arith.addf %352, %333 : vector<1x64xf32>
    %354 = arith.truncf %353 : vector<1x64xf32> to vector<1x64xbf16>
    %c0_130 = arith.constant 0 : index
    %c0_131 = arith.constant 0 : index
    %355 = vector.load %arg32[%c0_130, %c0_131] : memref<64x256xbf16, #tpu.memory_space<vmem>>, vector<64x256xbf16>
    %cst_132 = arith.constant dense<0.000000e+00> : vector<1x256xf32>
    %356 = tpu.matmul %354, %355, %cst_132 {dimension_numbers = #tpu.dot_dimension_numbers<[1], [0], [0], [1], [0, 0, 1, 1], [], []>} : vector<1x64xbf16>, vector<64x256xbf16>, vector<1x256xf32> -> vector<1x256xf32>
    %c0_133 = arith.constant 0 : index
    %c0_134 = arith.constant 0 : index
    %357 = vector.load %arg33[%c0_133, %c0_134] : memref<1x256xf32, #tpu.memory_space<vmem>>, vector<1x256xf32>
    %358 = arith.addf %356, %357 : vector<1x256xf32>
    %c0_135 = arith.constant 0 : index
    %c0_136 = arith.constant 0 : index
    %c0_137 = arith.constant 0 : index
    %359 = vector.load %arg34[%c0_135, %c0_136, %c0_137] : memref<1x1x256xf32, #tpu.memory_space<vmem>>, vector<1x1x256xf32>
    %360 = vector.shape_cast %359 : vector<1x1x256xf32> to vector<1x256xf32>
    %361 = vector.shape_cast %358 : vector<1x256xf32> to vector<1x1x256xf32>
    tpu.vector_store %arg34[%c0_135, %c0_136, %c0_137], %361 {strides = array<i32>} : memref<1x1x256xf32, #tpu.memory_space<vmem>>, vector<1x1x256xf32>,
    return
  }
  func.func @transform_0(%arg0: i32) -> (i32, i32, i32) {
    %c0_i32 = arith.constant 0 : i32
    %c0_i32_0 = arith.constant 0 : i32
    %c0_i32_1 = arith.constant 0 : i32
    return %arg0, %c0_i32, %c0_i32_0 : i32, i32, i32
  }
  func.func @transform_1(%arg0: i32) -> (i32, i32, i32) {
    %c0_i32 = arith.constant 0 : i32
    %c0_i32_0 = arith.constant 0 : i32
    %c0_i32_1 = arith.constant 0 : i32
    return %arg0, %c0_i32, %c0_i32_0 : i32, i32, i32
  }
  func.func @transform_2(%arg0: i32) -> (i32, i32) {
    %c0_i32 = arith.constant 0 : i32
    %c0_i32_0 = arith.constant 0 : i32
    %c0_i32_1 = arith.constant 0 : i32
    return %c0_i32, %c0_i32_0 : i32, i32
  }
  func.func @transform_3(%arg0: i32) -> (i32, i32) {
    %c0_i32 = arith.constant 0 : i32
    %c0_i32_0 = arith.constant 0 : i32
    %c0_i32_1 = arith.constant 0 : i32
    return %c0_i32, %c0_i32_0 : i32, i32
  }
  func.func @transform_4(%arg0: i32) -> (i32, i32) {
    %c0_i32 = arith.constant 0 : i32
    %c0_i32_0 = arith.constant 0 : i32
    %c0_i32_1 = arith.constant 0 : i32
    return %c0_i32, %c0_i32_0 : i32, i32
  }
  func.func @transform_5(%arg0: i32) -> (i32, i32) {
    %c0_i32 = arith.constant 0 : i32
    %c0_i32_0 = arith.constant 0 : i32
    %c0_i32_1 = arith.constant 0 : i32
    return %c0_i32, %c0_i32_0 : i32, i32
  }
  func.func @transform_6(%arg0: i32) -> (i32, i32) {
    %c0_i32 = arith.constant 0 : i32
    %c0_i32_0 = arith.constant 0 : i32
    %c0_i32_1 = arith.constant 0 : i32
    return %c0_i32, %c0_i32_0 : i32, i32
  }
  func.func @transform_7(%arg0: i32) -> (i32, i32) {
    %c0_i32 = arith.constant 0 : i32
    %c0_i32_0 = arith.constant 0 : i32
    %c0_i32_1 = arith.constant 0 : i32
    return %c0_i32, %c0_i32_0 : i32, i32
  }
  func.func @transform_8(%arg0: i32) -> (i32, i32) {
    %c0_i32 = arith.constant 0 : i32
    %c0_i32_0 = arith.constant 0 : i32
    %c0_i32_1 = arith.constant 0 : i32
    return %c0_i32, %c0_i32_0 : i32, i32
  }
  func.func @transform_9(%arg0: i32) -> (i32, i32) {
    %c0_i32 = arith.constant 0 : i32
    %c0_i32_0 = arith.constant 0 : i32
    %c0_i32_1 = arith.constant 0 : i32
    return %c0_i32, %c0_i32_0 : i32, i32
  }
  func.func @transform_10(%arg0: i32) -> (i32, i32) {
    %c0_i32 = arith.constant 0 : i32
    %c0_i32_0 = arith.constant 0 : i32
    %c0_i32_1 = arith.constant 0 : i32
    return %c0_i32, %c0_i32_0 : i32, i32
  }
  func.func @transform_11(%arg0: i32) -> (i32, i32) {
    %c0_i32 = arith.constant 0 : i32
    %c0_i32_0 = arith.constant 0 : i32
    %c0_i32_1 = arith.constant 0 : i32
    return %c0_i32, %c0_i32_0 : i32, i32
  }
  func.func @transform_12(%arg0: i32) -> (i32, i32) {
    %c0_i32 = arith.constant 0 : i32
    %c0_i32_0 = arith.constant 0 : i32
    %c0_i32_1 = arith.constant 0 : i32
    return %c0_i32, %c0_i32_0 : i32, i32
  }
  func.func @transform_13(%arg0: i32) -> (i32, i32) {
    %c0_i32 = arith.constant 0 : i32
    %c0_i32_0 = arith.constant 0 : i32
    %c0_i32_1 = arith.constant 0 : i32
    return %c0_i32, %c0_i32_0 : i32, i32
  }
  func.func @transform_14(%arg0: i32) -> (i32, i32) {
    %c0_i32 = arith.constant 0 : i32
    %c0_i32_0 = arith.constant 0 : i32
    %c0_i32_1 = arith.constant 0 : i32
    return %c0_i32, %c0_i32_0 : i32, i32
  }
  func.func @transform_15(%arg0: i32) -> (i32, i32) {
    %c0_i32 = arith.constant 0 : i32
    %c0_i32_0 = arith.constant 0 : i32
    %c0_i32_1 = arith.constant 0 : i32
    return %c0_i32, %c0_i32_0 : i32, i32
  }
  func.func @transform_16(%arg0: i32) -> (i32, i32) {
    %c0_i32 = arith.constant 0 : i32
    %c0_i32_0 = arith.constant 0 : i32
    %c0_i32_1 = arith.constant 0 : i32
    return %c0_i32, %c0_i32_0 : i32, i32
  }
  func.func @transform_17(%arg0: i32) -> (i32, i32) {
    %c0_i32 = arith.constant 0 : i32
    %c0_i32_0 = arith.constant 0 : i32
    %c0_i32_1 = arith.constant 0 : i32
    return %c0_i32, %c0_i32_0 : i32, i32
  }
  func.func @transform_18(%arg0: i32) -> (i32, i32) {
    %c0_i32 = arith.constant 0 : i32
    %c0_i32_0 = arith.constant 0 : i32
    %c0_i32_1 = arith.constant 0 : i32
    return %c0_i32, %c0_i32_0 : i32, i32
  }
  func.func @transform_19(%arg0: i32) -> (i32, i32) {
    %c0_i32 = arith.constant 0 : i32
    %c0_i32_0 = arith.constant 0 : i32
    %c0_i32_1 = arith.constant 0 : i32
    return %c0_i32, %c0_i32_0 : i32, i32
  }
  func.func @transform_20(%arg0: i32) -> (i32, i32) {
    %c0_i32 = arith.constant 0 : i32
    %c0_i32_0 = arith.constant 0 : i32
    %c0_i32_1 = arith.constant 0 : i32
    return %c0_i32, %c0_i32_0 : i32, i32
  }
  func.func @transform_21(%arg0: i32) -> (i32, i32) {
    %c0_i32 = arith.constant 0 : i32
    %c0_i32_0 = arith.constant 0 : i32
    %c0_i32_1 = arith.constant 0 : i32
    return %c0_i32, %c0_i32_0 : i32, i32
  }
  func.func @transform_22(%arg0: i32) -> (i32, i32) {
    %c0_i32 = arith.constant 0 : i32
    %c0_i32_0 = arith.constant 0 : i32
    %c0_i32_1 = arith.constant 0 : i32
    return %c0_i32, %c0_i32_0 : i32, i32
  }
  func.func @transform_23(%arg0: i32) -> (i32, i32) {
    %c0_i32 = arith.constant 0 : i32
    %c0_i32_0 = arith.constant 0 : i32
    %c0_i32_1 = arith.constant 0 : i32
    return %c0_i32, %c0_i32_0 : i32, i32
  }
  func.func @transform_24(%arg0: i32) -> (i32, i32) {
    %c0_i32 = arith.constant 0 : i32
    %c0_i32_0 = arith.constant 0 : i32
    %c0_i32_1 = arith.constant 0 : i32
    return %c0_i32, %c0_i32_0 : i32, i32
  }
  func.func @transform_25(%arg0: i32) -> (i32, i32) {
    %c0_i32 = arith.constant 0 : i32
    %c0_i32_0 = arith.constant 0 : i32
    %c0_i32_1 = arith.constant 0 : i32
    return %c0_i32, %c0_i32_0 : i32, i32
  }
  func.func @transform_26(%arg0: i32) -> (i32, i32) {
    %c0_i32 = arith.constant 0 : i32
    %c0_i32_0 = arith.constant 0 : i32
    %c0_i32_1 = arith.constant 0 : i32
    return %c0_i32, %c0_i32_0 : i32, i32
  }
  func.func @transform_27(%arg0: i32) -> (i32, i32) {
    %c0_i32 = arith.constant 0 : i32
    %c0_i32_0 = arith.constant 0 : i32
    %c0_i32_1 = arith.constant 0 : i32
    return %c0_i32, %c0_i32_0 : i32, i32
  }
  func.func @transform_28(%arg0: i32) -> (i32, i32) {
    %c0_i32 = arith.constant 0 : i32
    %c0_i32_0 = arith.constant 0 : i32
    %c0_i32_1 = arith.constant 0 : i32
    return %c0_i32, %c0_i32_0 : i32, i32
  }
  func.func @transform_29(%arg0: i32) -> (i32, i32) {
    %c0_i32 = arith.constant 0 : i32
    %c0_i32_0 = arith.constant 0 : i32
    %c0_i32_1 = arith.constant 0 : i32
    return %c0_i32, %c0_i32_0 : i32, i32
  }
  func.func @transform_30(%arg0: i32) -> (i32, i32) {
    %c0_i32 = arith.constant 0 : i32
    %c0_i32_0 = arith.constant 0 : i32
    %c0_i32_1 = arith.constant 0 : i32
    return %c0_i32, %c0_i32_0 : i32, i32
  }
  func.func @transform_31(%arg0: i32) -> (i32, i32) {
    %c0_i32 = arith.constant 0 : i32
    %c0_i32_0 = arith.constant 0 : i32
    %c0_i32_1 = arith.constant 0 : i32
    return %c0_i32, %c0_i32_0 : i32, i32
  }
  func.func @transform_32(%arg0: i32) -> (i32, i32) {
    %c0_i32 = arith.constant 0 : i32
    %c0_i32_0 = arith.constant 0 : i32
    %c0_i32_1 = arith.constant 0 : i32
    return %c0_i32, %c0_i32_0 : i32, i32
  }
  func.func @transform_33(%arg0: i32) -> (i32, i32, i32) {
    %c0_i32 = arith.constant 0 : i32
    %c0_i32_0 = arith.constant 0 : i32
    %c0_i32_1 = arith.constant 0 : i32
    return %arg0, %c0_i32, %c0_i32_0 : i32, i32, i32
  }
}

</mosaic_0001>

<llo_original>
// kernel: tpu_custom_call.1
$region0: #{tpu_custom_call.1}
  #allocation0 [shape = 'u32[]', space=smem, size = 0x4, offset = 0x4, fixed_abs, tag = 'smem constant byte address 0x4 - core index']
  #allocation1 [shape = 'u32[72,128]{1,0:T(1,128)}', space=vmem, size = 0x9000, scoped, tag = 'internal scratch']
  %s0 = inlined_call_operand.smem [shape: u32[34], index: -1, kind: input, shape index: {}]
  %s1 = sld [smem:[%s0]]
  %s2 = scalar_lea.smem %s0, 1
  %s3 = sld [smem:[%s2]]
  %s4 = scalar_lea.smem %s0, 2
  %s5 = sld [smem:[%s4]]
  %s6 = scalar_lea.smem %s0, 3
  %s7 = sld [smem:[%s6]]
  %s8 = scalar_lea.smem %s0, 4
  %s9 = sld [smem:[%s8]]
  %s10 = scalar_lea.smem %s0, 5
  %s11 = sld [smem:[%s10]]
  %s12 = scalar_lea.smem %s0, 6
  %s13 = sld [smem:[%s12]]
  %s14 = scalar_lea.smem %s0, 7
  %s15 = sld [smem:[%s14]]
  %s16 = scalar_lea.smem %s0, 8
  %s17 = sld [smem:[%s16]]
  %s18 = scalar_lea.smem %s0, 9
  %s19 = sld [smem:[%s18]]
  %s20 = scalar_lea.smem %s0, 10
  %s21 = sld [smem:[%s20]]
  %s22 = scalar_lea.smem %s0, 11
  %s23 = sld [smem:[%s22]]
  %s24 = scalar_lea.smem %s0, 12
  %s25 = sld [smem:[%s24]]
  %s26 = scalar_lea.smem %s0, 13
  %s27 = sld [smem:[%s26]]
  %s28 = scalar_lea.smem %s0, 14
  %s29 = sld [smem:[%s28]]
  %s30 = scalar_lea.smem %s0, 15
  %s31 = sld [smem:[%s30]]
  %s32 = scalar_lea.smem %s0, 16
  %s33 = sld [smem:[%s32]]
  %s34 = scalar_lea.smem %s0, 17
  %s35 = sld [smem:[%s34]]
  %s36 = scalar_lea.smem %s0, 18
  %s37 = sld [smem:[%s36]]
  %s38 = scalar_lea.smem %s0, 19
  %s39 = sld [smem:[%s38]]
  %s40 = scalar_lea.smem %s0, 20
  %s41 = sld [smem:[%s40]]
  %s42 = scalar_lea.smem %s0, 21
  %s43 = sld [smem:[%s42]]
  %s44 = scalar_lea.smem %s0, 22
  %s45 = sld [smem:[%s44]]
  %s46 = scalar_lea.smem %s0, 23
  %s47 = sld [smem:[%s46]]
  %s48 = scalar_lea.smem %s0, 24
  %s49 = sld [smem:[%s48]]
  %s50 = scalar_lea.smem %s0, 25
  %s51 = sld [smem:[%s50]]
  %s52 = scalar_lea.smem %s0, 26
  %s53 = sld [smem:[%s52]]
  %s54 = scalar_lea.smem %s0, 27
  %s55 = sld [smem:[%s54]]
  %s56 = scalar_lea.smem %s0, 28
  %s57 = sld [smem:[%s56]]
  %s58 = scalar_lea.smem %s0, 29
  %s59 = sld [smem:[%s58]]
  %s60 = scalar_lea.smem %s0, 30
  %s61 = sld [smem:[%s60]]
  %s62 = scalar_lea.smem %s0, 31
  %s63 = sld [smem:[%s62]]
  %s64 = scalar_lea.smem %s0, 32
  %s65 = sld [smem:[%s64]]
  %s66 = scalar_lea.smem %s0, 33
  %s67 = sld [smem:[%s66]]
  %s68 = sld [smem:[#allocation0]]
  $region165: #{tpu_custom_call.1} parent=0
    _
  %s70 = ssub.s32 1, %s68
  %s71 = scalar_select 0, %s70, %s68
  $region1: #{tpu_custom_call.1} parent=0
    #allocation2 [shape = 'u8[2048]{0}', space=vmem, size = 0x800, scoped, tag = 'output window, operand 0']
    #allocation3 [shape = 's32[2]{0}', space=sflag, size = 0x8, scoped, tag = 'scoped memory for tpu_custom_call.1']
    %72 = vsyncpa [#allocation3], 0
    %s73 = scalar_lea.sflag [#allocation3], 1
    %74 = vsyncpa %s73, 0
    loop: start=0, step=1, limit=4
    $region2: #{tpu_custom_call.1} parent=1 // loop_pre_header
      _
    $region3: #{tpu_custom_call.1} parent=1 // loop_header
      %s76 = sphi 0, %s80
      %p77 = scmp.ge.s32.totalorder %s76, 4
      %s86 = sphi 0, %s88
      %s89 = sphi 0, %s86
      %s90 = sphi 0, %s89
      %s106 = sphi 0, %s90
      %s112 = sphi 0, %s114
      %s115 = sphi 0, %s112
      %s116 = sphi 0, %s115
      %s132 = sphi 0, %s116
      %s136 = sphi 0, %s136
      %s138 = sphi 0, %s136
      %s139 = sphi 0, %s138
      %s153 = sphi 0, %s139
      %s157 = sphi 0, %s157
      %s159 = sphi 0, %s157
      %s160 = sphi 0, %s159
      %s174 = sphi 0, %s160
      %s178 = sphi 0, %s178
      %s180 = sphi 0, %s178
      %s181 = sphi 0, %s180
      %s195 = sphi 0, %s181
      %s199 = sphi 0, %s199
      %s201 = sphi 0, %s199
      %s202 = sphi 0, %s201
      %s216 = sphi 0, %s202
      %s220 = sphi 0, %s220
      %s222 = sphi 0, %s220
      %s223 = sphi 0, %s222
      %s237 = sphi 0, %s223
      %s241 = sphi 0, %s241
      %s243 = sphi 0, %s241
      %s244 = sphi 0, %s243
      %s258 = sphi 0, %s244
      %s262 = sphi 0, %s262
      %s264 = sphi 0, %s262
      %s265 = sphi 0, %s264
      %s279 = sphi 0, %s265
      %s283 = sphi 0, %s283
      %s285 = sphi 0, %s283
      %s286 = sphi 0, %s285
      %s300 = sphi 0, %s286
      %s304 = sphi 0, %s304
      %s306 = sphi 0, %s304
      %s307 = sphi 0, %s306
      %s321 = sphi 0, %s307
      %s325 = sphi 0, %s325
      %s327 = sphi 0, %s325
      %s328 = sphi 0, %s327
      %s342 = sphi 0, %s328
      %s346 = sphi 0, %s346
      %s348 = sphi 0, %s346
      %s349 = sphi 0, %s348
      %s363 = sphi 0, %s349
      %s367 = sphi 0, %s367
      %s369 = sphi 0, %s367
      %s370 = sphi 0, %s369
      %s384 = sphi 0, %s370
      %s388 = sphi 0, %s388
      %s390 = sphi 0, %s388
      %s391 = sphi 0, %s390
      %s405 = sphi 0, %s391
      %s409 = sphi 0, %s409
      %s411 = sphi 0, %s409
      %s412 = sphi 0, %s411
      %s426 = sphi 0, %s412
      %s430 = sphi 0, %s430
      %s432 = sphi 0, %s430
      %s433 = sphi 0, %s432
      %s447 = sphi 0, %s433
      %s451 = sphi 0, %s451
      %s453 = sphi 0, %s451
      %s454 = sphi 0, %s453
      %s468 = sphi 0, %s454
      %s472 = sphi 0, %s472
      %s474 = sphi 0, %s472
      %s475 = sphi 0, %s474
      %s489 = sphi 0, %s475
      %s493 = sphi 0, %s493
      %s495 = sphi 0, %s493
      %s496 = sphi 0, %s495
      %s510 = sphi 0, %s496
      %s514 = sphi 0, %s514
      %s516 = sphi 0, %s514
      %s517 = sphi 0, %s516
      %s531 = sphi 0, %s517
      %s535 = sphi 0, %s535
      %s537 = sphi 0, %s535
      %s538 = sphi 0, %s537
      %s552 = sphi 0, %s538
      %s556 = sphi 0, %s556
      %s558 = sphi 0, %s556
      %s559 = sphi 0, %s558
      %s573 = sphi 0, %s559
      %s577 = sphi 0, %s577
      %s579 = sphi 0, %s577
      %s580 = sphi 0, %s579
      %s594 = sphi 0, %s580
      %s598 = sphi 0, %s598
      %s600 = sphi 0, %s598
      %s601 = sphi 0, %s600
      %s615 = sphi 0, %s601
      %s619 = sphi 0, %s619
      %s621 = sphi 0, %s619
      %s622 = sphi 0, %s621
      %s636 = sphi 0, %s622
      %s640 = sphi 0, %s640
      %s642 = sphi 0, %s640
      %s643 = sphi 0, %s642
      %s657 = sphi 0, %s643
      %s661 = sphi 0, %s661
      %s663 = sphi 0, %s661
      %s664 = sphi 0, %s663
      %s678 = sphi 0, %s664
      %s682 = sphi 0, %s682
      %s684 = sphi 0, %s682
      %s685 = sphi 0, %s684
      %s699 = sphi 0, %s685
      %s703 = sphi 0, %s703
      %s705 = sphi 0, %s703
      %s706 = sphi 0, %s705
      %s720 = sphi 0, %s706
      %s724 = sphi 0, %s724
      %s726 = sphi 0, %s724
      %s727 = sphi 0, %s726
      %s741 = sphi 0, %s727
      %s745 = sphi 0, %s745
      %s747 = sphi 0, %s745
      %s748 = sphi 0, %s747
      %s762 = sphi 0, %s748
      %s766 = sphi 0, %s766
      %s768 = sphi 0, %s766
      %s769 = sphi 0, %s768
      %s783 = sphi 0, %s769
      %s789 = sphi 0, %s791
      %s792 = sphi 0, %s789
      %s793 = sphi 0, %s792
      %s809 = sphi 0, %s793
    $region4: #{tpu_custom_call.1} parent=1 // loop_header_branch
      %79 = sbr.rel (%p77) target = $region8
    $region5: #{tpu_custom_call.1} parent=1 // loop_body
      %s81 = ssub.s32 %s76, 1
      %s82 = ssub.s32 %s76, 2
      %s83 = sadd.s32 %s76, 1
      %s84 = ssub.s32 %s76, %s83
      %p85 = scmp.eq.s32.totalorder %s84, 0
      %s87 = sadd.s32 %s86, 1
      %s88 = scalar_select %p85, %s86, %s87
      %p91 = pneg %p85
      %p92 = scmp.eq.s32.totalorder %s76, 1
      %p93 = por %p91, %p92
      %p94 = scmp.ne.s32.totalorder %s86, %s89
      %p95 = scmp.eq.s32.totalorder %s76, 0
      %p96 = por %p94, %p95
      %p97 = scmp.ne.s32.totalorder %s86, %s89
      %p98 = scmp.eq.s32.totalorder %s81, 1
      %p99 = por %p97, %p98
      %p100 = scmp.ne.s32.totalorder %s89, %s90
      %p101 = scmp.eq.s32.totalorder %s81, 0
      %p102 = por %p100, %p101
      %p103 = scmp.ne.s32.totalorder %s89, %s90
      %p104 = scmp.eq.s32.totalorder %s82, 1
      %p105 = por %p103, %p104
      %p107 = scmp.ne.s32.totalorder %s90, %s106
      %p108 = scmp.eq.s32.totalorder %s82, 0
      %p109 = por %p107, %p108
      %s110 = ssub.s32 %s76, %s83
      %p111 = scmp.eq.s32.totalorder %s110, 0
      %s113 = sadd.s32 %s112, 1
      %s114 = scalar_select %p111, %s112, %s113
      %p117 = pneg %p111
      %p118 = scmp.eq.s32.totalorder %s76, 1
      %p119 = por %p117, %p118
      %p120 = scmp.ne.s32.totalorder %s112, %s115
      %p121 = scmp.eq.s32.totalorder %s76, 0
      %p122 = por %p120, %p121
      %p123 = scmp.ne.s32.totalorder %s112, %s115
      %p124 = scmp.eq.s32.totalorder %s81, 1
      %p125 = por %p123, %p124
      %p126 = scmp.ne.s32.totalorder %s115, %s116
      %p127 = scmp.eq.s32.totalorder %s81, 0
      %p128 = por %p126, %p127
      %p129 = scmp.ne.s32.totalorder %s115, %s116
      %p130 = scmp.eq.s32.totalorder %s82, 1
      %p131 = por %p129, %p130
      %p133 = scmp.ne.s32.totalorder %s116, %s132
      %p134 = scmp.eq.s32.totalorder %s82, 0
      %p135 = por %p133, %p134
      %s137 = sadd.s32 %s136, 1
      %p140 = scmp.eq.s32.totalorder %s76, 1
      %p141 = scmp.ne.s32.totalorder %s136, %s138
      %p142 = scmp.eq.s32.totalorder %s76, 0
      %p143 = por %p141, %p142
      %p144 = scmp.ne.s32.totalorder %s136, %s138
      %p145 = scmp.eq.s32.totalorder %s81, 1
      %p146 = por %p144, %p145
      %p147 = scmp.ne.s32.totalorder %s138, %s139
      %p148 = scmp.eq.s32.totalorder %s81, 0
      %p149 = por %p147, %p148
      %p150 = scmp.ne.s32.totalorder %s138, %s139
      %p151 = scmp.eq.s32.totalorder %s82, 1
      %p152 = por %p150, %p151
      %p154 = scmp.ne.s32.totalorder %s139, %s153
      %p155 = scmp.eq.s32.totalorder %s82, 0
      %p156 = por %p154, %p155
      %s158 = sadd.s32 %s157, 1
      %p161 = scmp.eq.s32.totalorder %s76, 1
      %p162 = scmp.ne.s32.totalorder %s157, %s159
      %p163 = scmp.eq.s32.totalorder %s76, 0
      %p164 = por %p162, %p163
      %p165 = scmp.ne.s32.totalorder %s157, %s159
      %p166 = scmp.eq.s32.totalorder %s81, 1
      %p167 = por %p165, %p166
      %p168 = scmp.ne.s32.totalorder %s159, %s160
      %p169 = scmp.eq.s32.totalorder %s81, 0
      %p170 = por %p168, %p169
      %p171 = scmp.ne.s32.totalorder %s159, %s160
      %p172 = scmp.eq.s32.totalorder %s82, 1
      %p173 = por %p171, %p172
      %p175 = scmp.ne.s32.totalorder %s160, %s174
      %p176 = scmp.eq.s32.totalorder %s82, 0
      %p177 = por %p175, %p176
      %s179 = sadd.s32 %s178, 1
      %p182 = scmp.eq.s32.totalorder %s76, 1
      %p183 = scmp.ne.s32.totalorder %s178, %s180
      %p184 = scmp.eq.s32.totalorder %s76, 0
      %p185 = por %p183, %p184
      %p186 = scmp.ne.s32.totalorder %s178, %s180
      %p187 = scmp.eq.s32.totalorder %s81, 1
      %p188 = por %p186, %p187
      %p189 = scmp.ne.s32.totalorder %s180, %s181
      %p190 = scmp.eq.s32.totalorder %s81, 0
      %p191 = por %p189, %p190
      %p192 = scmp.ne.s32.totalorder %s180, %s181
      %p193 = scmp.eq.s32.totalorder %s82, 1
      %p194 = por %p192, %p193
      %p196 = scmp.ne.s32.totalorder %s181, %s195
      %p197 = scmp.eq.s32.totalorder %s82, 0
      %p198 = por %p196, %p197
      %s200 = sadd.s32 %s199, 1
      %p203 = scmp.eq.s32.totalorder %s76, 1
      %p204 = scmp.ne.s32.totalorder %s199, %s201
      %p205 = scmp.eq.s32.totalorder %s76, 0
      %p206 = por %p204, %p205
      %p207 = scmp.ne.s32.totalorder %s199, %s201
      %p208 = scmp.eq.s32.totalorder %s81, 1
      %p209 = por %p207, %p208
      %p210 = scmp.ne.s32.totalorder %s201, %s202
      %p211 = scmp.eq.s32.totalorder %s81, 0
      %p212 = por %p210, %p211
      %p213 = scmp.ne.s32.totalorder %s201, %s202
      %p214 = scmp.eq.s32.totalorder %s82, 1
      %p215 = por %p213, %p214
      %p217 = scmp.ne.s32.totalorder %s202, %s216
      %p218 = scmp.eq.s32.totalorder %s82, 0
      %p219 = por %p217, %p218
      %s221 = sadd.s32 %s220, 1
      %p224 = scmp.eq.s32.totalorder %s76, 1
      %p225 = scmp.ne.s32.totalorder %s220, %s222
      %p226 = scmp.eq.s32.totalorder %s76, 0
      %p227 = por %p225, %p226
      %p228 = scmp.ne.s32.totalorder %s220, %s222
      %p229 = scmp.eq.s32.totalorder %s81, 1
      %p230 = por %p228, %p229
      %p231 = scmp.ne.s32.totalorder %s222, %s223
      %p232 = scmp.eq.s32.totalorder %s81, 0
      %p233 = por %p231, %p232
      %p234 = scmp.ne.s32.totalorder %s222, %s223
      %p235 = scmp.eq.s32.totalorder %s82, 1
      %p236 = por %p234, %p235
      %p238 = scmp.ne.s32.totalorder %s223, %s237
      %p239 = scmp.eq.s32.totalorder %s82, 0
      %p240 = por %p238, %p239
      %s242 = sadd.s32 %s241, 1
      %p245 = scmp.eq.s32.totalorder %s76, 1
      %p246 = scmp.ne.s32.totalorder %s241, %s243
      %p247 = scmp.eq.s32.totalorder %s76, 0
      %p248 = por %p246, %p247
      %p249 = scmp.ne.s32.totalorder %s241, %s243
      %p250 = scmp.eq.s32.totalorder %s81, 1
      %p251 = por %p249, %p250
      %p252 = scmp.ne.s32.totalorder %s243, %s244
      %p253 = scmp.eq.s32.totalorder %s81, 0
      %p254 = por %p252, %p253
      %p255 = scmp.ne.s32.totalorder %s243, %s244
      %p256 = scmp.eq.s32.totalorder %s82, 1
      %p257 = por %p255, %p256
      %p259 = scmp.ne.s32.totalorder %s244, %s258
      %p260 = scmp.eq.s32.totalorder %s82, 0
      %p261 = por %p259, %p260
      %s263 = sadd.s32 %s262, 1
      %p266 = scmp.eq.s32.totalorder %s76, 1
      %p267 = scmp.ne.s32.totalorder %s262, %s264
      %p268 = scmp.eq.s32.totalorder %s76, 0
      %p269 = por %p267, %p268
      %p270 = scmp.ne.s32.totalorder %s262, %s264
      %p271 = scmp.eq.s32.totalorder %s81, 1
      %p272 = por %p270, %p271
      %p273 = scmp.ne.s32.totalorder %s264, %s265
      %p274 = scmp.eq.s32.totalorder %s81, 0
      %p275 = por %p273, %p274
      %p276 = scmp.ne.s32.totalorder %s264, %s265
      %p277 = scmp.eq.s32.totalorder %s82, 1
      %p278 = por %p276, %p277
      %p280 = scmp.ne.s32.totalorder %s265, %s279
      %p281 = scmp.eq.s32.totalorder %s82, 0
      %p282 = por %p280, %p281
      %s284 = sadd.s32 %s283, 1
      %p287 = scmp.eq.s32.totalorder %s76, 1
      %p288 = scmp.ne.s32.totalorder %s283, %s285
      %p289 = scmp.eq.s32.totalorder %s76, 0
      %p290 = por %p288, %p289
      %p291 = scmp.ne.s32.totalorder %s283, %s285
      %p292 = scmp.eq.s32.totalorder %s81, 1
      %p293 = por %p291, %p292
      %p294 = scmp.ne.s32.totalorder %s285, %s286
      %p295 = scmp.eq.s32.totalorder %s81, 0
      %p296 = por %p294, %p295
      %p297 = scmp.ne.s32.totalorder %s285, %s286
      %p298 = scmp.eq.s32.totalorder %s82, 1
      %p299 = por %p297, %p298
      %p301 = scmp.ne.s32.totalorder %s286, %s300
      %p302 = scmp.eq.s32.totalorder %s82, 0
      %p303 = por %p301, %p302
      %s305 = sadd.s32 %s304, 1
      %p308 = scmp.eq.s32.totalorder %s76, 1
      %p309 = scmp.ne.s32.totalorder %s304, %s306
      %p310 = scmp.eq.s32.totalorder %s76, 0
      %p311 = por %p309, %p310
      %p312 = scmp.ne.s32.totalorder %s304, %s306
      %p313 = scmp.eq.s32.totalorder %s81, 1
      %p314 = por %p312, %p313
      %p315 = scmp.ne.s32.totalorder %s306, %s307
      %p316 = scmp.eq.s32.totalorder %s81, 0
      %p317 = por %p315, %p316
      %p318 = scmp.ne.s32.totalorder %s306, %s307
      %p319 = scmp.eq.s32.totalorder %s82, 1
      %p320 = por %p318, %p319
      %p322 = scmp.ne.s32.totalorder %s307, %s321
      %p323 = scmp.eq.s32.totalorder %s82, 0
      %p324 = por %p322, %p323
      %s326 = sadd.s32 %s325, 1
      %p329 = scmp.eq.s32.totalorder %s76, 1
      %p330 = scmp.ne.s32.totalorder %s325, %s327
      %p331 = scmp.eq.s32.totalorder %s76, 0
      %p332 = por %p330, %p331
      %p333 = scmp.ne.s32.totalorder %s325, %s327
      %p334 = scmp.eq.s32.totalorder %s81, 1
      %p335 = por %p333, %p334
      %p336 = scmp.ne.s32.totalorder %s327, %s328
      %p337 = scmp.eq.s32.totalorder %s81, 0
      %p338 = por %p336, %p337
      %p339 = scmp.ne.s32.totalorder %s327, %s328
      %p340 = scmp.eq.s32.totalorder %s82, 1
      %p341 = por %p339, %p340
      %p343 = scmp.ne.s32.totalorder %s328, %s342
      %p344 = scmp.eq.s32.totalorder %s82, 0
      %p345 = por %p343, %p344
      %s347 = sadd.s32 %s346, 1
      %p350 = scmp.eq.s32.totalorder %s76, 1
      %p351 = scmp.ne.s32.totalorder %s346, %s348
      %p352 = scmp.eq.s32.totalorder %s76, 0
      %p353 = por %p351, %p352
      %p354 = scmp.ne.s32.totalorder %s346, %s348
      %p355 = scmp.eq.s32.totalorder %s81, 1
      %p356 = por %p354, %p355
      %p357 = scmp.ne.s32.totalorder %s348, %s349
      %p358 = scmp.eq.s32.totalorder %s81, 0
      %p359 = por %p357, %p358
      %p360 = scmp.ne.s32.totalorder %s348, %s349
      %p361 = scmp.eq.s32.totalorder %s82, 1
      %p362 = por %p360, %p361
      %p364 = scmp.ne.s32.totalorder %s349, %s363
      %p365 = scmp.eq.s32.totalorder %s82, 0
      %p366 = por %p364, %p365
      %s368 = sadd.s32 %s367, 1
      %p371 = scmp.eq.s32.totalorder %s76, 1
      %p372 = scmp.ne.s32.totalorder %s367, %s369
      %p373 = scmp.eq.s32.totalorder %s76, 0
      %p374 = por %p372, %p373
      %p375 = scmp.ne.s32.totalorder %s367, %s369
      %p376 = scmp.eq.s32.totalorder %s81, 1
      %p377 = por %p375, %p376
      %p378 = scmp.ne.s32.totalorder %s369, %s370
      %p379 = scmp.eq.s32.totalorder %s81, 0
      %p380 = por %p378, %p379
      %p381 = scmp.ne.s32.totalorder %s369, %s370
      %p382 = scmp.eq.s32.totalorder %s82, 1
      %p383 = por %p381, %p382
      %p385 = scmp.ne.s32.totalorder %s370, %s384
      %p386 = scmp.eq.s32.totalorder %s82, 0
      %p387 = por %p385, %p386
      %s389 = sadd.s32 %s388, 1
      %p392 = scmp.eq.s32.totalorder %s76, 1
      %p393 = scmp.ne.s32.totalorder %s388, %s390
      %p394 = scmp.eq.s32.totalorder %s76, 0
      %p395 = por %p393, %p394
      %p396 = scmp.ne.s32.totalorder %s388, %s390
      %p397 = scmp.eq.s32.totalorder %s81, 1
      %p398 = por %p396, %p397
      %p399 = scmp.ne.s32.totalorder %s390, %s391
      %p400 = scmp.eq.s32.totalorder %s81, 0
      %p401 = por %p399, %p400
      %p402 = scmp.ne.s32.totalorder %s390, %s391
      %p403 = scmp.eq.s32.totalorder %s82, 1
      %p404 = por %p402, %p403
      %p406 = scmp.ne.s32.totalorder %s391, %s405
      %p407 = scmp.eq.s32.totalorder %s82, 0
      %p408 = por %p406, %p407
      %s410 = sadd.s32 %s409, 1
      %p413 = scmp.eq.s32.totalorder %s76, 1
      %p414 = scmp.ne.s32.totalorder %s409, %s411
      %p415 = scmp.eq.s32.totalorder %s76, 0
      %p416 = por %p414, %p415
      %p417 = scmp.ne.s32.totalorder %s409, %s411
      %p418 = scmp.eq.s32.totalorder %s81, 1
      %p419 = por %p417, %p418
      %p420 = scmp.ne.s32.totalorder %s411, %s412
      %p421 = scmp.eq.s32.totalorder %s81, 0
      %p422 = por %p420, %p421
      %p423 = scmp.ne.s32.totalorder %s411, %s412
      %p424 = scmp.eq.s32.totalorder %s82, 1
      %p425 = por %p423, %p424
      %p427 = scmp.ne.s32.totalorder %s412, %s426
      %p428 = scmp.eq.s32.totalorder %s82, 0
      %p429 = por %p427, %p428
      %s431 = sadd.s32 %s430, 1
      %p434 = scmp.eq.s32.totalorder %s76, 1
      %p435 = scmp.ne.s32.totalorder %s430, %s432
      %p436 = scmp.eq.s32.totalorder %s76, 0
      %p437 = por %p435, %p436
      %p438 = scmp.ne.s32.totalorder %s430, %s432
      %p439 = scmp.eq.s32.totalorder %s81, 1
      %p440 = por %p438, %p439
      %p441 = scmp.ne.s32.totalorder %s432, %s433
      %p442 = scmp.eq.s32.totalorder %s81, 0
      %p443 = por %p441, %p442
      %p444 = scmp.ne.s32.totalorder %s432, %s433
      %p445 = scmp.eq.s32.totalorder %s82, 1
      %p446 = por %p444, %p445
      %p448 = scmp.ne.s32.totalorder %s433, %s447
      %p449 = scmp.eq.s32.totalorder %s82, 0
      %p450 = por %p448, %p449
      %s452 = sadd.s32 %s451, 1
      %p455 = scmp.eq.s32.totalorder %s76, 1
      %p456 = scmp.ne.s32.totalorder %s451, %s453
      %p457 = scmp.eq.s32.totalorder %s76, 0
      %p458 = por %p456, %p457
      %p459 = scmp.ne.s32.totalorder %s451, %s453
      %p460 = scmp.eq.s32.totalorder %s81, 1
      %p461 = por %p459, %p460
      %p462 = scmp.ne.s32.totalorder %s453, %s454
      %p463 = scmp.eq.s32.totalorder %s81, 0
      %p464 = por %p462, %p463
      %p465 = scmp.ne.s32.totalorder %s453, %s454
      %p466 = scmp.eq.s32.totalorder %s82, 1
      %p467 = por %p465, %p466
      %p469 = scmp.ne.s32.totalorder %s454, %s468
      %p470 = scmp.eq.s32.totalorder %s82, 0
      %p471 = por %p469, %p470
      %s473 = sadd.s32 %s472, 1
      %p476 = scmp.eq.s32.totalorder %s76, 1
      %p477 = scmp.ne.s32.totalorder %s472, %s474
      %p478 = scmp.eq.s32.totalorder %s76, 0
      %p479 = por %p477, %p478
      %p480 = scmp.ne.s32.totalorder %s472, %s474
      %p481 = scmp.eq.s32.totalorder %s81, 1
      %p482 = por %p480, %p481
      %p483 = scmp.ne.s32.totalorder %s474, %s475
      %p484 = scmp.eq.s32.totalorder %s81, 0
      %p485 = por %p483, %p484
      %p486 = scmp.ne.s32.totalorder %s474, %s475
      %p487 = scmp.eq.s32.totalorder %s82, 1
      %p488 = por %p486, %p487
      %p490 = scmp.ne.s32.totalorder %s475, %s489
      %p491 = scmp.eq.s32.totalorder %s82, 0
      %p492 = por %p490, %p491
      %s494 = sadd.s32 %s493, 1
      %p497 = scmp.eq.s32.totalorder %s76, 1
      %p498 = scmp.ne.s32.totalorder %s493, %s495
      %p499 = scmp.eq.s32.totalorder %s76, 0
      %p500 = por %p498, %p499
      %p501 = scmp.ne.s32.totalorder %s493, %s495
      %p502 = scmp.eq.s32.totalorder %s81, 1
      %p503 = por %p501, %p502
      %p504 = scmp.ne.s32.totalorder %s495, %s496
      %p505 = scmp.eq.s32.totalorder %s81, 0
      %p506 = por %p504, %p505
      %p507 = scmp.ne.s32.totalorder %s495, %s496
      %p508 = scmp.eq.s32.totalorder %s82, 1
      %p509 = por %p507, %p508
      %p511 = scmp.ne.s32.totalorder %s496, %s510
      %p512 = scmp.eq.s32.totalorder %s82, 0
      %p513 = por %p511, %p512
      %s515 = sadd.s32 %s514, 1
      %p518 = scmp.eq.s32.totalorder %s76, 1
      %p519 = scmp.ne.s32.totalorder %s514, %s516
      %p520 = scmp.eq.s32.totalorder %s76, 0
      %p521 = por %p519, %p520
      %p522 = scmp.ne.s32.totalorder %s514, %s516
      %p523 = scmp.eq.s32.totalorder %s81, 1
      %p524 = por %p522, %p523
      %p525 = scmp.ne.s32.totalorder %s516, %s517
      %p526 = scmp.eq.s32.totalorder %s81, 0
      %p527 = por %p525, %p526
      %p528 = scmp.ne.s32.totalorder %s516, %s517
      %p529 = scmp.eq.s32.totalorder %s82, 1
      %p530 = por %p528, %p529
      %p532 = scmp.ne.s32.totalorder %s517, %s531
      %p533 = scmp.eq.s32.totalorder %s82, 0
      %p534 = por %p532, %p533
      %s536 = sadd.s32 %s535, 1
      %p539 = scmp.eq.s32.totalorder %s76, 1
      %p540 = scmp.ne.s32.totalorder %s535, %s537
      %p541 = scmp.eq.s32.totalorder %s76, 0
      %p542 = por %p540, %p541
      %p543 = scmp.ne.s32.totalorder %s535, %s537
      %p544 = scmp.eq.s32.totalorder %s81, 1
      %p545 = por %p543, %p544
      %p546 = scmp.ne.s32.totalorder %s537, %s538
      %p547 = scmp.eq.s32.totalorder %s81, 0
      %p548 = por %p546, %p547
      %p549 = scmp.ne.s32.totalorder %s537, %s538
      %p550 = scmp.eq.s32.totalorder %s82, 1
      %p551 = por %p549, %p550
      %p553 = scmp.ne.s32.totalorder %s538, %s552
      %p554 = scmp.eq.s32.totalorder %s82, 0
      %p555 = por %p553, %p554
      %s557 = sadd.s32 %s556, 1
      %p560 = scmp.eq.s32.totalorder %s76, 1
      %p561 = scmp.ne.s32.totalorder %s556, %s558
      %p562 = scmp.eq.s32.totalorder %s76, 0
      %p563 = por %p561, %p562
      %p564 = scmp.ne.s32.totalorder %s556, %s558
      %p565 = scmp.eq.s32.totalorder %s81, 1
      %p566 = por %p564, %p565
      %p567 = scmp.ne.s32.totalorder %s558, %s559
      %p568 = scmp.eq.s32.totalorder %s81, 0
      %p569 = por %p567, %p568
      %p570 = scmp.ne.s32.totalorder %s558, %s559
      %p571 = scmp.eq.s32.totalorder %s82, 1
      %p572 = por %p570, %p571
      %p574 = scmp.ne.s32.totalorder %s559, %s573
      %p575 = scmp.eq.s32.totalorder %s82, 0
      %p576 = por %p574, %p575
      %s578 = sadd.s32 %s577, 1
      %p581 = scmp.eq.s32.totalorder %s76, 1
      %p582 = scmp.ne.s32.totalorder %s577, %s579
      %p583 = scmp.eq.s32.totalorder %s76, 0
      %p584 = por %p582, %p583
      %p585 = scmp.ne.s32.totalorder %s577, %s579
      %p586 = scmp.eq.s32.totalorder %s81, 1
      %p587 = por %p585, %p586
      %p588 = scmp.ne.s32.totalorder %s579, %s580
      %p589 = scmp.eq.s32.totalorder %s81, 0
      %p590 = por %p588, %p589
      %p591 = scmp.ne.s32.totalorder %s579, %s580
      %p592 = scmp.eq.s32.totalorder %s82, 1
      %p593 = por %p591, %p592
      %p595 = scmp.ne.s32.totalorder %s580, %s594
      %p596 = scmp.eq.s32.totalorder %s82, 0
      %p597 = por %p595, %p596
      %s599 = sadd.s32 %s598, 1
      %p602 = scmp.eq.s32.totalorder %s76, 1
      %p603 = scmp.ne.s32.totalorder %s598, %s600
      %p604 = scmp.eq.s32.totalorder %s76, 0
      %p605 = por %p603, %p604
      %p606 = scmp.ne.s32.totalorder %s598, %s600
      %p607 = scmp.eq.s32.totalorder %s81, 1
      %p608 = por %p606, %p607
      %p609 = scmp.ne.s32.totalorder %s600, %s601
      %p610 = scmp.eq.s32.totalorder %s81, 0
      %p611 = por %p609, %p610
      %p612 = scmp.ne.s32.totalorder %s600, %s601
      %p613 = scmp.eq.s32.totalorder %s82, 1
      %p614 = por %p612, %p613
      %p616 = scmp.ne.s32.totalorder %s601, %s615
      %p617 = scmp.eq.s32.totalorder %s82, 0
      %p618 = por %p616, %p617
      %s620 = sadd.s32 %s619, 1
      %p623 = scmp.eq.s32.totalorder %s76, 1
      %p624 = scmp.ne.s32.totalorder %s619, %s621
      %p625 = scmp.eq.s32.totalorder %s76, 0
      %p626 = por %p624, %p625
      %p627 = scmp.ne.s32.totalorder %s619, %s621
      %p628 = scmp.eq.s32.totalorder %s81, 1
      %p629 = por %p627, %p628
      %p630 = scmp.ne.s32.totalorder %s621, %s622
      %p631 = scmp.eq.s32.totalorder %s81, 0
      %p632 = por %p630, %p631
      %p633 = scmp.ne.s32.totalorder %s621, %s622
      %p634 = scmp.eq.s32.totalorder %s82, 1
      %p635 = por %p633, %p634
      %p637 = scmp.ne.s32.totalorder %s622, %s636
      %p638 = scmp.eq.s32.totalorder %s82, 0
      %p639 = por %p637, %p638
      %s641 = sadd.s32 %s640, 1
      %p644 = scmp.eq.s32.totalorder %s76, 1
      %p645 = scmp.ne.s32.totalorder %s640, %s642
      %p646 = scmp.eq.s32.totalorder %s76, 0
      %p647 = por %p645, %p646
      %p648 = scmp.ne.s32.totalorder %s640, %s642
      %p649 = scmp.eq.s32.totalorder %s81, 1
      %p650 = por %p648, %p649
      %p651 = scmp.ne.s32.totalorder %s642, %s643
      %p652 = scmp.eq.s32.totalorder %s81, 0
      %p653 = por %p651, %p652
      %p654 = scmp.ne.s32.totalorder %s642, %s643
      %p655 = scmp.eq.s32.totalorder %s82, 1
      %p656 = por %p654, %p655
      %p658 = scmp.ne.s32.totalorder %s643, %s657
      %p659 = scmp.eq.s32.totalorder %s82, 0
      %p660 = por %p658, %p659
      %s662 = sadd.s32 %s661, 1
      %p665 = scmp.eq.s32.totalorder %s76, 1
      %p666 = scmp.ne.s32.totalorder %s661, %s663
      %p667 = scmp.eq.s32.totalorder %s76, 0
      %p668 = por %p666, %p667
      %p669 = scmp.ne.s32.totalorder %s661, %s663
      %p670 = scmp.eq.s32.totalorder %s81, 1
      %p671 = por %p669, %p670
      %p672 = scmp.ne.s32.totalorder %s663, %s664
      %p673 = scmp.eq.s32.totalorder %s81, 0
      %p674 = por %p672, %p673
      %p675 = scmp.ne.s32.totalorder %s663, %s664
      %p676 = scmp.eq.s32.totalorder %s82, 1
      %p677 = por %p675, %p676
      %p679 = scmp.ne.s32.totalorder %s664, %s678
      %p680 = scmp.eq.s32.totalorder %s82, 0
      %p681 = por %p679, %p680
      %s683 = sadd.s32 %s682, 1
      %p686 = scmp.eq.s32.totalorder %s76, 1
      %p687 = scmp.ne.s32.totalorder %s682, %s684
      %p688 = scmp.eq.s32.totalorder %s76, 0
      %p689 = por %p687, %p688
      %p690 = scmp.ne.s32.totalorder %s682, %s684
      %p691 = scmp.eq.s32.totalorder %s81, 1
      %p692 = por %p690, %p691
      %p693 = scmp.ne.s32.totalorder %s684, %s685
      %p694 = scmp.eq.s32.totalorder %s81, 0
      %p695 = por %p693, %p694
      %p696 = scmp.ne.s32.totalorder %s684, %s685
      %p697 = scmp.eq.s32.totalorder %s82, 1
      %p698 = por %p696, %p697
      %p700 = scmp.ne.s32.totalorder %s685, %s699
      %p701 = scmp.eq.s32.totalorder %s82, 0
      %p702 = por %p700, %p701
      %s704 = sadd.s32 %s703, 1
      %p707 = scmp.eq.s32.totalorder %s76, 1
      %p708 = scmp.ne.s32.totalorder %s703, %s705
      %p709 = scmp.eq.s32.totalorder %s76, 0
      %p710 = por %p708, %p709
      %p711 = scmp.ne.s32.totalorder %s703, %s705
      %p712 = scmp.eq.s32.totalorder %s81, 1
      %p713 = por %p711, %p712
      %p714 = scmp.ne.s32.totalorder %s705, %s706
      %p715 = scmp.eq.s32.totalorder %s81, 0
      %p716 = por %p714, %p715
      %p717 = scmp.ne.s32.totalorder %s705, %s706
      %p718 = scmp.eq.s32.totalorder %s82, 1
      %p719 = por %p717, %p718
      %p721 = scmp.ne.s32.totalorder %s706, %s720
      %p722 = scmp.eq.s32.totalorder %s82, 0
      %p723 = por %p721, %p722
      %s725 = sadd.s32 %s724, 1
      %p728 = scmp.eq.s32.totalorder %s76, 1
      %p729 = scmp.ne.s32.totalorder %s724, %s726
      %p730 = scmp.eq.s32.totalorder %s76, 0
      %p731 = por %p729, %p730
      %p732 = scmp.ne.s32.totalorder %s724, %s726
      %p733 = scmp.eq.s32.totalorder %s81, 1
      %p734 = por %p732, %p733
      %p735 = scmp.ne.s32.totalorder %s726, %s727
      %p736 = scmp.eq.s32.totalorder %s81, 0
      %p737 = por %p735, %p736
      %p738 = scmp.ne.s32.totalorder %s726, %s727
      %p739 = scmp.eq.s32.totalorder %s82, 1
      %p740 = por %p738, %p739
      %p742 = scmp.ne.s32.totalorder %s727, %s741
      %p743 = scmp.eq.s32.totalorder %s82, 0
      %p744 = por %p742, %p743
      %s746 = sadd.s32 %s745, 1
      %p749 = scmp.eq.s32.totalorder %s76, 1
      %p750 = scmp.ne.s32.totalorder %s745, %s747
      %p751 = scmp.eq.s32.totalorder %s76, 0
      %p752 = por %p750, %p751
      %p753 = scmp.ne.s32.totalorder %s745, %s747
      %p754 = scmp.eq.s32.totalorder %s81, 1
      %p755 = por %p753, %p754
      %p756 = scmp.ne.s32.totalorder %s747, %s748
      %p757 = scmp.eq.s32.totalorder %s81, 0
      %p758 = por %p756, %p757
      %p759 = scmp.ne.s32.totalorder %s747, %s748
      %p760 = scmp.eq.s32.totalorder %s82, 1
      %p761 = por %p759, %p760
      %p763 = scmp.ne.s32.totalorder %s748, %s762
      %p764 = scmp.eq.s32.totalorder %s82, 0
      %p765 = por %p763, %p764
      %s767 = sadd.s32 %s766, 1
      %p770 = scmp.eq.s32.totalorder %s76, 1
      %p771 = scmp.ne.s32.totalorder %s766, %s768
      %p772 = scmp.eq.s32.totalorder %s76, 0
      %p773 = por %p771, %p772
      %p774 = scmp.ne.s32.totalorder %s766, %s768
      %p775 = scmp.eq.s32.totalorder %s81, 1
      %p776 = por %p774, %p775
      %p777 = scmp.ne.s32.totalorder %s768, %s769
      %p778 = scmp.eq.s32.totalorder %s81, 0
      %p779 = por %p777, %p778
      %p780 = scmp.ne.s32.totalorder %s768, %s769
      %p781 = scmp.eq.s32.totalorder %s82, 1
      %p782 = por %p780, %p781
      %p784 = scmp.ne.s32.totalorder %s769, %s783
      %p785 = scmp.eq.s32.totalorder %s82, 0
      %p786 = por %p784, %p785
      %s787 = ssub.s32 %s76, %s83
      %p788 = scmp.eq.s32.totalorder %s787, 0
      %s790 = sadd.s32 %s789, 1
      %s791 = scalar_select %p788, %s789, %s790
      %p794 = pneg %p788
      %p795 = scmp.eq.s32.totalorder %s76, 1
      %p796 = por %p794, %p795
      %p797 = scmp.ne.s32.totalorder %s789, %s792
      %p798 = scmp.eq.s32.totalorder %s76, 0
      %p799 = por %p797, %p798
      %p800 = scmp.ne.s32.totalorder %s789, %s792
      %p801 = scmp.eq.s32.totalorder %s81, 1
      %p802 = por %p800, %p801
      %p803 = scmp.ne.s32.totalorder %s792, %s793
      %p804 = scmp.eq.s32.totalorder %s81, 0
      %p805 = por %p803, %p804
      %p806 = scmp.ne.s32.totalorder %s792, %s793
      %p807 = scmp.eq.s32.totalorder %s82, 1
      %p808 = por %p806, %p807
      %p810 = scmp.ne.s32.totalorder %s793, %s809
      %p811 = scmp.eq.s32.totalorder %s82, 0
      %p812 = por %p810, %p811
      %p813 = scmp.le.s32.totalorder 1, %s76
      %p814 = scmp.lt.s32.totalorder %s76, 3
      %p815 = pnand %p813, %p814
      %p816 = pneg %p815
      // Predicated region
      $region9: #{tpu_custom_call.1} parent=5 // pred_check
        _
      $region10: #{tpu_custom_call.1} parent=5 // pred_check_branch
        %818 = sbr.rel (%p815) target = $region12
      $region11: #{tpu_custom_call.1} parent=5 // pred_region
        %s819 = ssub.s32 %s76, 1
        // Predicated region
        $region13: #{tpu_custom_call.1} parent=11 // pred_check
          %p820 = pneg %p149
        $region14: #{tpu_custom_call.1} parent=11 // pred_check_branch
          %822 = sbr.rel (%p820) target = $region16
        $region15: #{tpu_custom_call.1} parent=11 // pred_region
          _
        $region16: #{tpu_custom_call.1} parent=11 // pred_fallthru
          _
        // Predicated region
        $region17: #{tpu_custom_call.1} parent=11 // pred_check
          %p823 = pneg %p170
        $region18: #{tpu_custom_call.1} parent=11 // pred_check_branch
          %825 = sbr.rel (%p823) target = $region20
        $region19: #{tpu_custom_call.1} parent=11 // pred_region
          _
        $region20: #{tpu_custom_call.1} parent=11 // pred_fallthru
          _
        // Predicated region
        $region21: #{tpu_custom_call.1} parent=11 // pred_check
          %p826 = pneg %p191
        $region22: #{tpu_custom_call.1} parent=11 // pred_check_branch
          %828 = sbr.rel (%p826) target = $region24
        $region23: #{tpu_custom_call.1} parent=11 // pred_region
          _
        $region24: #{tpu_custom_call.1} parent=11 // pred_fallthru
          _
        // Predicated region
        $region25: #{tpu_custom_call.1} parent=11 // pred_check
          %p829 = pneg %p212
        $region26: #{tpu_custom_call.1} parent=11 // pred_check_branch
          %831 = sbr.rel (%p829) target = $region28
        $region27: #{tpu_custom_call.1} parent=11 // pred_region
          _
        $region28: #{tpu_custom_call.1} parent=11 // pred_fallthru
          _
        // Predicated region
        $region29: #{tpu_custom_call.1} parent=11 // pred_check
          %p832 = pneg %p233
        $region30: #{tpu_custom_call.1} parent=11 // pred_check_branch
          %834 = sbr.rel (%p832) target = $region32
        $region31: #{tpu_custom_call.1} parent=11 // pred_region
          _
        $region32: #{tpu_custom_call.1} parent=11 // pred_fallthru
          _
        // Predicated region
        $region33: #{tpu_custom_call.1} parent=11 // pred_check
          %p835 = pneg %p254
        $region34: #{tpu_custom_call.1} parent=11 // pred_check_branch
          %837 = sbr.rel (%p835) target = $region36
        $region35: #{tpu_custom_call.1} parent=11 // pred_region
          _
        $region36: #{tpu_custom_call.1} parent=11 // pred_fallthru
          _
        // Predicated region
        $region37: #{tpu_custom_call.1} parent=11 // pred_check
          %p838 = pneg %p275
        $region38: #{tpu_custom_call.1} parent=11 // pred_check_branch
          %840 = sbr.rel (%p838) target = $region40
        $region39: #{tpu_custom_call.1} parent=11 // pred_region
          _
        $region40: #{tpu_custom_call.1} parent=11 // pred_fallthru
          _
        // Predicated region
        $region41: #{tpu_custom_call.1} parent=11 // pred_check
          %p841 = pneg %p296
        $region42: #{tpu_custom_call.1} parent=11 // pred_check_branch
          %843 = sbr.rel (%p841) target = $region44
        $region43: #{tpu_custom_call.1} parent=11 // pred_region
          _
        $region44: #{tpu_custom_call.1} parent=11 // pred_fallthru
          _
        // Predicated region
        $region45: #{tpu_custom_call.1} parent=11 // pred_check
          %p844 = pneg %p317
        $region46: #{tpu_custom_call.1} parent=11 // pred_check_branch
          %846 = sbr.rel (%p844) target = $region48
        $region47: #{tpu_custom_call.1} parent=11 // pred_region
          _
        $region48: #{tpu_custom_call.1} parent=11 // pred_fallthru
          _
        // Predicated region
        $region49: #{tpu_custom_call.1} parent=11 // pred_check
          %p847 = pneg %p338
        $region50: #{tpu_custom_call.1} parent=11 // pred_check_branch
          %849 = sbr.rel (%p847) target = $region52
        $region51: #{tpu_custom_call.1} parent=11 // pred_region
          _
        $region52: #{tpu_custom_call.1} parent=11 // pred_fallthru
          _
        // Predicated region
        $region53: #{tpu_custom_call.1} parent=11 // pred_check
          %p850 = pneg %p359
        $region54: #{tpu_custom_call.1} parent=11 // pred_check_branch
          %852 = sbr.rel (%p850) target = $region56
        $region55: #{tpu_custom_call.1} parent=11 // pred_region
          _
        $region56: #{tpu_custom_call.1} parent=11 // pred_fallthru
          _
        // Predicated region
        $region57: #{tpu_custom_call.1} parent=11 // pred_check
          %p853 = pneg %p380
        $region58: #{tpu_custom_call.1} parent=11 // pred_check_branch
          %855 = sbr.rel (%p853) target = $region60
        $region59: #{tpu_custom_call.1} parent=11 // pred_region
          _
        $region60: #{tpu_custom_call.1} parent=11 // pred_fallthru
          _
        // Predicated region
        $region61: #{tpu_custom_call.1} parent=11 // pred_check
          %p856 = pneg %p401
        $region62: #{tpu_custom_call.1} parent=11 // pred_check_branch
          %858 = sbr.rel (%p856) target = $region64
        $region63: #{tpu_custom_call.1} parent=11 // pred_region
          _
        $region64: #{tpu_custom_call.1} parent=11 // pred_fallthru
          _
        // Predicated region
        $region65: #{tpu_custom_call.1} parent=11 // pred_check
          %p859 = pneg %p422
        $region66: #{tpu_custom_call.1} parent=11 // pred_check_branch
          %861 = sbr.rel (%p859) target = $region68
        $region67: #{tpu_custom_call.1} parent=11 // pred_region
          _
        $region68: #{tpu_custom_call.1} parent=11 // pred_fallthru
          _
        // Predicated region
        $region69: #{tpu_custom_call.1} parent=11 // pred_check
          %p862 = pneg %p443
        $region70: #{tpu_custom_call.1} parent=11 // pred_check_branch
          %864 = sbr.rel (%p862) target = $region72
        $region71: #{tpu_custom_call.1} parent=11 // pred_region
          _
        $region72: #{tpu_custom_call.1} parent=11 // pred_fallthru
          _
        // Predicated region
        $region73: #{tpu_custom_call.1} parent=11 // pred_check
          %p865 = pneg %p464
        $region74: #{tpu_custom_call.1} parent=11 // pred_check_branch
          %867 = sbr.rel (%p865) target = $region76
        $region75: #{tpu_custom_call.1} parent=11 // pred_region
          _
        $region76: #{tpu_custom_call.1} parent=11 // pred_fallthru
          _
        // Predicated region
        $region77: #{tpu_custom_call.1} parent=11 // pred_check
          %p868 = pneg %p485
        $region78: #{tpu_custom_call.1} parent=11 // pred_check_branch
          %870 = sbr.rel (%p868) target = $region80
        $region79: #{tpu_custom_call.1} parent=11 // pred_region
          _
        $region80: #{tpu_custom_call.1} parent=11 // pred_fallthru
          _
        // Predicated region
        $region81: #{tpu_custom_call.1} parent=11 // pred_check
          %p871 = pneg %p506
        $region82: #{tpu_custom_call.1} parent=11 // pred_check_branch
          %873 = sbr.rel (%p871) target = $region84
        $region83: #{tpu_custom_call.1} parent=11 // pred_region
          _
        $region84: #{tpu_custom_call.1} parent=11 // pred_fallthru
          _
        // Predicated region
        $region85: #{tpu_custom_call.1} parent=11 // pred_check
          %p874 = pneg %p527
        $region86: #{tpu_custom_call.1} parent=11 // pred_check_branch
          %876 = sbr.rel (%p874) target = $region88
        $region87: #{tpu_custom_call.1} parent=11 // pred_region
          _
        $region88: #{tpu_custom_call.1} parent=11 // pred_fallthru
          _
        // Predicated region
        $region89: #{tpu_custom_call.1} parent=11 // pred_check
          %p877 = pneg %p548
        $region90: #{tpu_custom_call.1} parent=11 // pred_check_branch
          %879 = sbr.rel (%p877) target = $region92
        $region91: #{tpu_custom_call.1} parent=11 // pred_region
          _
        $region92: #{tpu_custom_call.1} parent=11 // pred_fallthru
          _
        // Predicated region
        $region93: #{tpu_custom_call.1} parent=11 // pred_check
          %p880 = pneg %p569
        $region94: #{tpu_custom_call.1} parent=11 // pred_check_branch
          %882 = sbr.rel (%p880) target = $region96
        $region95: #{tpu_custom_call.1} parent=11 // pred_region
          _
        $region96: #{tpu_custom_call.1} parent=11 // pred_fallthru
          _
        // Predicated region
        $region97: #{tpu_custom_call.1} parent=11 // pred_check
          %p883 = pneg %p590
        $region98: #{tpu_custom_call.1} parent=11 // pred_check_branch
          %885 = sbr.rel (%p883) target = $region100
        $region99: #{tpu_custom_call.1} parent=11 // pred_region
          _
        $region100: #{tpu_custom_call.1} parent=11 // pred_fallthru
          _
        // Predicated region
        $region101: #{tpu_custom_call.1} parent=11 // pred_check
          %p886 = pneg %p611
        $region102: #{tpu_custom_call.1} parent=11 // pred_check_branch
          %888 = sbr.rel (%p886) target = $region104
        $region103: #{tpu_custom_call.1} parent=11 // pred_region
          _
        $region104: #{tpu_custom_call.1} parent=11 // pred_fallthru
          _
        // Predicated region
        $region105: #{tpu_custom_call.1} parent=11 // pred_check
          %p889 = pneg %p632
        $region106: #{tpu_custom_call.1} parent=11 // pred_check_branch
          %891 = sbr.rel (%p889) target = $region108
        $region107: #{tpu_custom_call.1} parent=11 // pred_region
          _
        $region108: #{tpu_custom_call.1} parent=11 // pred_fallthru
          _
        // Predicated region
        $region109: #{tpu_custom_call.1} parent=11 // pred_check
          %p892 = pneg %p653
        $region110: #{tpu_custom_call.1} parent=11 // pred_check_branch
          %894 = sbr.rel (%p892) target = $region112
        $region111: #{tpu_custom_call.1} parent=11 // pred_region
          _
        $region112: #{tpu_custom_call.1} parent=11 // pred_fallthru
          _
        // Predicated region
        $region113: #{tpu_custom_call.1} parent=11 // pred_check
          %p895 = pneg %p674
        $region114: #{tpu_custom_call.1} parent=11 // pred_check_branch
          %897 = sbr.rel (%p895) target = $region116
        $region115: #{tpu_custom_call.1} parent=11 // pred_region
          _
        $region116: #{tpu_custom_call.1} parent=11 // pred_fallthru
          _
        // Predicated region
        $region117: #{tpu_custom_call.1} parent=11 // pred_check
          %p898 = pneg %p695
        $region118: #{tpu_custom_call.1} parent=11 // pred_check_branch
          %900 = sbr.rel (%p898) target = $region120
        $region119: #{tpu_custom_call.1} parent=11 // pred_region
          _
        $region120: #{tpu_custom_call.1} parent=11 // pred_fallthru
          _
        // Predicated region
        $region121: #{tpu_custom_call.1} parent=11 // pred_check
          %p901 = pneg %p716
        $region122: #{tpu_custom_call.1} parent=11 // pred_check_branch
          %903 = sbr.rel (%p901) target = $region124
        $region123: #{tpu_custom_call.1} parent=11 // pred_region
          _
        $region124: #{tpu_custom_call.1} parent=11 // pred_fallthru
          _
        // Predicated region
        $region125: #{tpu_custom_call.1} parent=11 // pred_check
          %p904 = pneg %p737
        $region126: #{tpu_custom_call.1} parent=11 // pred_check_branch
          %906 = sbr.rel (%p904) target = $region128
        $region127: #{tpu_custom_call.1} parent=11 // pred_region
          _
        $region128: #{tpu_custom_call.1} parent=11 // pred_fallthru
          _
        // Predicated region
        $region129: #{tpu_custom_call.1} parent=11 // pred_check
          %p907 = pneg %p758
        $region130: #{tpu_custom_call.1} parent=11 // pred_check_branch
          %909 = sbr.rel (%p907) target = $region132
        $region131: #{tpu_custom_call.1} parent=11 // pred_region
          _
        $region132: #{tpu_custom_call.1} parent=11 // pred_fallthru
          _
        // Predicated region
        $region133: #{tpu_custom_call.1} parent=11 // pred_check
          %p910 = pneg %p779
        $region134: #{tpu_custom_call.1} parent=11 // pred_check_branch
          %912 = sbr.rel (%p910) target = $region136
        $region135: #{tpu_custom_call.1} parent=11 // pred_region
          _
        $region136: #{tpu_custom_call.1} parent=11 // pred_fallthru
          _
      $region12: #{tpu_custom_call.1} parent=5 // pred_fallthru
        _
      %p913 = scmp.lt.s32.totalorder %s76, 2
      // Predicated region
      $region137: #{tpu_custom_call.1} parent=5 // pred_check
        %p914 = pneg %p913
      $region138: #{tpu_custom_call.1} parent=5 // pred_check_branch
        %916 = sbr.rel (%p914) target = $region140
      $region139: #{tpu_custom_call.1} parent=5 // pred_region
        // Predicated region
        $region141: #{tpu_custom_call.1} parent=139 // pred_check
          %p917 = pneg %p96
        $region142: #{tpu_custom_call.1} parent=139 // pred_check_branch
          %919 = sbr.rel (%p917) target = $region144
        $region143: #{tpu_custom_call.1} parent=139 // pred_region
          %p920 = scmp.lt.s32.totalorder %s76, 1
          %s921 = scalar_select %p920, %s76, 1
          %s922 = smul.addr %s921, 2
          %s923 = smul.addr %s922, 8
          %s924 = scalar_lea.vmem %s1, %s923
        $region144: #{tpu_custom_call.1} parent=139 // pred_fallthru
          _
        // Predicated region
        $region145: #{tpu_custom_call.1} parent=139 // pred_check
          %p925 = pneg %p122
        $region146: #{tpu_custom_call.1} parent=139 // pred_check_branch
          %927 = sbr.rel (%p925) target = $region148
        $region147: #{tpu_custom_call.1} parent=139 // pred_region
          %p928 = scmp.lt.s32.totalorder %s76, 1
          %s929 = scalar_select %p928, %s76, 1
          %s930 = scalar_lea.vmem %s3, %s929
        $region148: #{tpu_custom_call.1} parent=139 // pred_fallthru
          _
      $region140: #{tpu_custom_call.1} parent=5 // pred_fallthru
        _
      %p931 = scmp.le.s32.totalorder 1, %s76
      %p932 = scmp.lt.s32.totalorder %s76, 3
      %p933 = pnand %p931, %p932
      %p934 = pneg %p933
      // Predicated region
      $region149: #{tpu_custom_call.1} parent=5 // pred_check
        _
      $region150: #{tpu_custom_call.1} parent=5 // pred_check_branch
        %936 = sbr.rel (%p933) target = $region152
      $region151: #{tpu_custom_call.1} parent=5 // pred_region
        %s937 = ssub.s32 %s76, 1
        %p938 = scmp.lt.s32.totalorder %s81, 1
        %s939 = scalar_select %p938, %s81, 1
        %s940 = smul.addr %s939, 2
        %s941 = smul.addr %s940, 8
        %s942 = scalar_lea.vmem %s1, %s941
        %p943 = pneg %p102
        %p944 = pneg %p99
        %p945 = scmp.lt.s32.totalorder %s81, 1
        %s946 = scalar_select %p945, %s81, 1
        %s947 = scalar_lea.vmem %s3, %s946
        %p948 = pneg %p128
        %p949 = pneg %p125
        %p950 = pneg %p149
        %p951 = pneg %p146
        %p952 = pneg %p170
        %p953 = pneg %p167
        %p954 = pneg %p191
        %p955 = pneg %p188
        %p956 = pneg %p212
        %p957 = pneg %p209
        %p958 = pneg %p233
        %p959 = pneg %p230
        %p960 = pneg %p254
        %p961 = pneg %p251
        %p962 = pneg %p275
        %p963 = pneg %p272
        %p964 = pneg %p296
        %p965 = pneg %p293
        %p966 = pneg %p317
        %p967 = pneg %p314
        %p968 = pneg %p338
        %p969 = pneg %p335
        %p970 = pneg %p359
        %p971 = pneg %p356
        %p972 = pneg %p380
        %p973 = pneg %p377
        %p974 = pneg %p401
        %p975 = pneg %p398
        %p976 = pneg %p422
        %p977 = pneg %p419
        %p978 = pneg %p443
        %p979 = pneg %p440
        %p980 = pneg %p464
        %p981 = pneg %p461
        %p982 = pneg %p485
        %p983 = pneg %p482
        %p984 = pneg %p506
        %p985 = pneg %p503
        %p986 = pneg %p527
        %p987 = pneg %p524
        %p988 = pneg %p548
        %p989 = pneg %p545
        %p990 = pneg %p569
        %p991 = pneg %p566
        %p992 = pneg %p590
        %p993 = pneg %p587
        %p994 = pneg %p611
        %p995 = pneg %p608
        %p996 = pneg %p632
        %p997 = pneg %p629
        %p998 = pneg %p653
        %p999 = pneg %p650
        %p1000 = pneg %p674
        %p1001 = pneg %p671
        %p1002 = pneg %p695
        %p1003 = pneg %p692
        %p1004 = pneg %p716
        %p1005 = pneg %p713
        %p1006 = pneg %p737
        %p1007 = pneg %p734
        %p1008 = pneg %p758
        %p1009 = pneg %p755
        %p1010 = pneg %p779
        %p1011 = pneg %p776
        %p1012 = pneg %p805
        %p1013 = pneg %p802
        %s1014 = sand.u32 %s792, 1
        %s1015 = scalar_lea.sflag [#allocation3], %s1014
        %s1016 = sand.u32 %s792, 1
        %s1017 = smul.addr %s1016, 2
        %s1018 = scalar_lea.vmem [#allocation2], %s1017
        %p1019 = scmp.lt.s32.totalorder %s81, 1
        %s1020 = scalar_select %p1019, %s81, 1
        %s1021 = smul.addr %s1020, 2
        %s1022 = smul.addr %s1021, 8
        %s1023 = scalar_lea.vmem %s1, %s1022
        %p1024 = scmp.lt.s32.totalorder %s81, 1
        %s1025 = scalar_select %p1024, %s81, 1
        %s1026 = scalar_lea.vmem %s3, %s1025
        %v1028 = vld [vmem:[%s1023] sm:$0xff]
        %v1029 = vld [vmem:[%s1023 + $0x8] sm:$0xff]
        %v1030 = vld [vmem:[%s1026] sm:$0x1]
        %v1031 = vpack.c.bf16 %v1028, %v1028
        %v1032 = vpack.c.bf16 %v1029, %v1029
        %v1033 = vld [vmem:[%s7] sm:$0xf]
        %v1034 = vld [vmem:[%s7 + $0x4] sm:$0xf]
        %v1035 = vld [vmem:[%s7 + $0x8] sm:$0xf]
        %v1036 = vld [vmem:[%s7 + $0xc] sm:$0xf]
        %v1037 = vld [vmem:[%s7 + $0x10] sm:$0xf]
        %v1038 = vld [vmem:[%s7 + $0x14] sm:$0xf]
        %v1039 = vld [vmem:[%s7 + $0x18] sm:$0xf]
        %v1040 = vld [vmem:[%s7 + $0x1c] sm:$0xf]
        %v1041 = vld [vmem:[%s7 + $0x20] sm:$0xf]
        %v1042 = vld [vmem:[%s7 + $0x24] sm:$0xf]
        %v1043 = vld [vmem:[%s7 + $0x28] sm:$0xf]
        %v1044 = vld [vmem:[%s7 + $0x2c] sm:$0xf]
        %v1045 = vld [vmem:[%s7 + $0x30] sm:$0xf]
        %v1046 = vld [vmem:[%s7 + $0x34] sm:$0xf]
        %v1047 = vld [vmem:[%s7 + $0x38] sm:$0xf]
        %v1048 = vld [vmem:[%s7 + $0x3c] sm:$0xf]
        %v1049 = vld [vmem:[%s7 + $0x40] sm:$0xf]
        %v1050 = vld [vmem:[%s7 + $0x44] sm:$0xf]
        %v1051 = vld [vmem:[%s7 + $0x48] sm:$0xf]
        %v1052 = vld [vmem:[%s7 + $0x4c] sm:$0xf]
        %v1053 = vld [vmem:[%s7 + $0x50] sm:$0xf]
        %v1054 = vld [vmem:[%s7 + $0x54] sm:$0xf]
        %v1055 = vld [vmem:[%s7 + $0x58] sm:$0xf]
        %v1056 = vld [vmem:[%s9] sm:$0x1]
        %v1058 = vperm.slane %v1056, 0
        %v1083 = vunpack.c.l.b16 %v1033
        %v1084 = vunpack.c.l.b16 %v1034
        %v1085 = vunpack.c.l.b16 %v1035
        %v1086 = vunpack.c.l.b16 %v1036
        %v1087 = vunpack.c.l.b16 %v1037
        %v1088 = vunpack.c.l.b16 %v1038
        %v1089 = vunpack.c.l.b16 %v1039
        %v1090 = vunpack.c.l.b16 %v1040
        %v1091 = vunpack.c.l.b16 %v1041
        %v1092 = vunpack.c.l.b16 %v1042
        %v1093 = vunpack.c.l.b16 %v1043
        %v1094 = vunpack.c.l.b16 %v1044
        %v1095 = vunpack.c.l.b16 %v1045
        %v1096 = vunpack.c.l.b16 %v1046
        %v1097 = vunpack.c.l.b16 %v1047
        %v1098 = vunpack.c.l.b16 %v1048
        %v1099 = vunpack.c.l.b16 %v1049
        %v1100 = vunpack.c.l.b16 %v1050
        %v1101 = vunpack.c.l.b16 %v1051
        %v1102 = vunpack.c.l.b16 %v1052
        %v1103 = vunpack.c.l.b16 %v1053
        %v1104 = vunpack.c.l.b16 %v1054
        %v1105 = vunpack.c.l.b16 %v1055
        %v1106 = vpack.c.b16 %v1084, %v1083
        %v1107 = vpack.c.b16 %v1086, %v1085
        %v1108 = vpack.c.b16 %v1088, %v1087
        %v1109 = vpack.c.b16 %v1090, %v1089
        %v1110 = vpack.c.b16 %v1092, %v1091
        %v1111 = vpack.c.b16 %v1094, %v1093
        %v1112 = vpack.c.b16 %v1096, %v1095
        %v1113 = vpack.c.b16 %v1098, %v1097
        %v1114 = vpack.c.b16 %v1100, %v1099
        %v1115 = vpack.c.b16 %v1102, %v1101
        %v1116 = vpack.c.b16 %v1104, %v1103
        %v1117 = vpack.c.b16 %v1105, %v1105
        %vm1129 = vcmask 457728
        %v1131 = vsel %vm1129, %v1032, 0
        %vm1133 = vcmask 1043456
        %v1135 = vsel %vm1133, %v1117, 0
        %1137 = vmatpush.bf16.msra.mxu0 %v1113
        %1138 = vmatpush.bf16.msra.mxu0 %v1112
        %1139 = vmatpush.bf16.msra.mxu0 %v1111
        %1140 = vmatpush.bf16.msra.mxu0 %v1110
        %1141 = vmatpush.bf16.msra.mxu0 %v1109
        %1142 = vmatpush.bf16.msra.mxu0 %v1108
        %1143 = vmatpush.bf16.msra.mxu0 %v1107
        %1144 = vmatpush.bf16.msra.mxu0 %v1106
        %1145 = vmatmul.bf16.gmra.mxu0 %v1031
        %v1146 = vpop.f32.mrf.mxu0
        %v1147 = vadd.f32 %v1058, %v1146
        %v1148 = vpop.f32.mrf.mxu0
        %1149 = vdwg.mxu0
        %1150 = vmatpush.bf16.msra.mxu0 0
        %1151 = vmatpush.bf16.msra.mxu0 0
        %1152 = vmatpush.bf16.msra.mxu0 0
        %1153 = vmatpush.bf16.msra.mxu0 0
        %1154 = vmatpush.bf16.msra.mxu0 %v1135
        %1155 = vmatpush.bf16.msra.mxu0 %v1116
        %1156 = vmatpush.bf16.msra.mxu0 %v1115
        %1157 = vmatpush.bf16.msra.mxu0 %v1114
        %1158 = vmatmul.bf16.gmra.mxu0 %v1131
        %v1159 = vpop.f32.mrf.mxu0
        %v1160 = vadd.f32 %v1147, %v1159
        %v1161 = vpop.f32.mrf.mxu0
        %1162 = vdwg.mxu0
        %v1163 = vld [vmem:[%s11] sm:$0x1]
        %v1164 = vld [vmem:[%s13] sm:$0x1]
        %vm1165 = vcmask 523264
        %v1166 = vsel %vm1165, %v1160, 0.0
        %1167 = vadd.xlane.f32.xlu0 %v1166
        %v1168 = vpop.xlane.xlu0 %1167
        %v1169 = vrcp.pop 64.0
        %v1170 = vmul.f32 64.0, %v1169
        %v1171 = vsub.f32 1.0, %v1170
        %v1172 = vmul.f32 %v1169, %v1171
        %v1173 = vadd.f32 %v1169, %v1172
        %vm1174 = vweird.f32 %v1169
        %v1175 = vsel %vm1174, %v1169, %v1173
        %v1176 = vmul.f32 %v1168, %v1175
        %v1177 = vsub.f32 %v1160, %v1176
        %v1178 = vmul.f32 %v1177, %v1177
        %v1179 = vsel %vm1165, %v1178, 0.0
        %1180 = vadd.xlane.f32.xlu0 %v1179
        %v1181 = vpop.xlane.xlu0 %1180
        %v1182 = vmul.f32 %v1181, %v1175
        %v1183 = vadd.f32 %v1182, 1e-05
        %v1184 = vrsqrt.pop %v1183
        %v1185 = vmul.f32 %v1184, %v1183
        %v1186 = vmul.f32 %v1185, %v1184
        %v1187 = vmul.f32 0.5, %v1186
        %v1188 = vsub.f32 1.5, %v1187
        %v1189 = vmul.f32 %v1184, %v1188
        %vm1190 = vweird.f32 %v1183
        %vm1191 = vweird.f32 %v1184
        %vm1192 = vmor %vm1190, %vm1191
        %v1193 = vsel %vm1192, %v1184, %v1189
        %v1194 = vmul.f32 %v1177, %v1193
        %v1196 = vperm.slane %v1163, 0
        %v1198 = vmul.f32 %v1194, %v1196
        %v1200 = vperm.slane %v1164, 0
        %v1202 = vadd.f32 %v1198, %v1200
        %v1203 = vld [vmem:[%s5] sm:$0xff]
        %v1204 = vadd.f32 %v1202, %v1203
        %v1205 = vpack.c.bf16 %v1204, %v1204
        %v1206 = vld [vmem:[%s15] sm:$0xff]
        %v1207 = vld [vmem:[%s15 + $0x8] sm:$0xff]
        %v1208 = vld [vmem:[%s15 + $0x10] sm:$0xff]
        %v1209 = vld [vmem:[%s15 + $0x18] sm:$0xff]
        %v1210 = vld [vmem:[%s15 + $0x20] sm:$0xff]
        %v1211 = vld [vmem:[%s15 + $0x28] sm:$0xff]
        %v1212 = vld [vmem:[%s15 + $0x30] sm:$0xff]
        %v1213 = vld [vmem:[%s15 + $0x38] sm:$0xff]
        %v1214 = vld [vmem:[%s17] sm:$0x3]
        %v1216 = vperm.slane %v1214, 0
        %v1217 = vperm.slane %v1214, 1
        %v1228 = vunpack.c.l.b16 %v1206
        %v1229 = vunpack.c.h.b16 %v1206
        %v1230 = vunpack.c.l.b16 %v1207
        %v1231 = vunpack.c.h.b16 %v1207
        %v1232 = vunpack.c.l.b16 %v1208
        %v1233 = vunpack.c.h.b16 %v1208
        %v1234 = vunpack.c.l.b16 %v1209
        %v1235 = vunpack.c.h.b16 %v1209
        %v1236 = vunpack.c.l.b16 %v1210
        %v1237 = vunpack.c.h.b16 %v1210
        %v1238 = vunpack.c.l.b16 %v1211
        %v1239 = vunpack.c.h.b16 %v1211
        %v1240 = vunpack.c.l.b16 %v1212
        %v1241 = vunpack.c.h.b16 %v1212
        %v1242 = vunpack.c.l.b16 %v1213
        %v1243 = vunpack.c.h.b16 %v1213
        %v1244 = vpack.c.b16 %v1230, %v1228
        %v1245 = vpack.c.b16 %v1231, %v1229
        %v1246 = vpack.c.b16 %v1234, %v1232
        %v1247 = vpack.c.b16 %v1235, %v1233
        %v1248 = vpack.c.b16 %v1238, %v1236
        %v1249 = vpack.c.b16 %v1239, %v1237
        %v1250 = vpack.c.b16 %v1242, %v1240
        %v1251 = vpack.c.b16 %v1243, %v1241
        %v1261 = vsel %vm1165, %v1205, 0
        %1263 = vmatpush.bf16.msra.mxu0 0
        %1264 = vmatpush.bf16.msra.mxu0 0
        %1265 = vmatpush.bf16.msra.mxu0 0
        %1266 = vmatpush.bf16.msra.mxu0 0
        %1267 = vmatpush.bf16.msra.mxu0 %v1250
        %1268 = vmatpush.bf16.msra.mxu0 %v1248
        %1269 = vmatpush.bf16.msra.mxu0 %v1246
        %1270 = vmatpush.bf16.msra.mxu0 %v1244
        %1271 = vmatmul.bf16.gmra.mxu0 %v1261
        %v1272 = vpop.f32.mrf.mxu0
        %v1273 = vadd.f32 %v1216, %v1272
        %v1274 = vpop.f32.mrf.mxu0
        %1275 = vdwg.mxu0
        %1276 = vmatpush.bf16.msra.mxu0 0
        %1277 = vmatpush.bf16.msra.mxu0 0
        %1278 = vmatpush.bf16.msra.mxu0 0
        %1279 = vmatpush.bf16.msra.mxu0 0
        %1280 = vmatpush.bf16.msra.mxu0 %v1251
        %1281 = vmatpush.bf16.msra.mxu0 %v1249
        %1282 = vmatpush.bf16.msra.mxu0 %v1247
        %1283 = vmatpush.bf16.msra.mxu0 %v1245
        %1284 = vmatmul.bf16.gmra.mxu0 %v1261
        %v1285 = vpop.f32.mrf.mxu0
        %v1286 = vadd.f32 %v1217, %v1285
        %v1287 = vpop.f32.mrf.mxu0
        %1288 = vdwg.mxu0
        %v1289 = vpack.c.bf16 %v1273, %v1273
        %v1291 = vperm.slane %v1030, 0
        %1294 = vrot.lane.b32.xlu0 %v1289, 64
        %v1295 = vpop.permute.xlu0 %1294
        %vm1296 = vcmask 130048
        %v1298 = vsel %vm1296, %v1289, 0
        %v1301 = vsel %vm1296, %v1295, 0
        %1303 = vmatpush.bf16.xpose.msra.mxu0 0
        %1304 = vmatpush.bf16.xpose.msra.mxu0 0
        %1305 = vmatpush.bf16.xpose.msra.mxu0 0
        %1306 = vmatpush.bf16.xpose.msra.mxu0 0
        %1307 = vmatpush.bf16.xpose.msra.mxu0 0
        %1308 = vmatpush.bf16.xpose.msra.mxu0 0
        %1309 = vmatpush.bf16.xpose.msra.mxu0 0
        %1310 = vmatpush.bf16.xpose.msra.mxu0 %v1301
        %1311 = vmatmul.bf16.gmra.mxu0 %v1298
        %v1312 = vpop.f32.mrf.mxu0
        %v1313 = vadd.f32 %v1291, %v1312
        %v1314 = vpop.f32.mrf.mxu0
        %1315 = vdwg.mxu0
        %vm1316 = vcmask 64512
        %v1317 = vsel %vm1316, %v1313, -inf
        %1318 = vmax.xlane.f32.xlu0 %v1317
        %v1319 = vpop.xlane.xlu0 %1318
        %v1320 = vsub.f32 %v1313, %v1319
        %v1321 = vmul.f32 %v1320, 1.442695
        %v1322 = vpow.pop %v1321
        %v1323 = vsel %vm1316, %v1322, 0.0
        %1324 = vadd.xlane.f32.xlu0 %v1323
        %v1325 = vpop.xlane.xlu0 %1324
        %v1326 = vrcp.pop %v1325
        %v1327 = vmul.f32 %v1322, %v1326
        %v1328 = vpack.c.bf16 %v1327, %v1327
        %v1329 = vpack.c.bf16 %v1286, %v1286
        %v1331 = vsel %vm1316, %v1328, 0
        %v1334 = vsel %vm1133, %v1329, 0
        %1336 = vmatpush.bf16.msra.mxu0 0
        %1337 = vmatpush.bf16.msra.mxu0 0
        %1338 = vmatpush.bf16.msra.mxu0 0
        %1339 = vmatpush.bf16.msra.mxu0 0
        %1340 = vmatpush.bf16.msra.mxu0 0
        %1341 = vmatpush.bf16.msra.mxu0 0
        %1342 = vmatpush.bf16.msra.mxu0 0
        %1343 = vmatpush.bf16.msra.mxu0 %v1334
        %1344 = vmatmul.bf16.gmra.mxu0 %v1331
        %v1345 = vpop.f32.mrf.mxu0
        %v1346 = vadd.f32 0.0, %v1345
        %v1347 = vpop.f32.mrf.mxu0
        %1348 = vdwg.mxu0
        %1349 = vrot.lane.b32.xlu0 %v1289, 112
        %v1350 = vpop.permute.xlu0 %1349
        %1351 = vrot.lane.b32.xlu0 %v1289, 48
        %v1352 = vpop.permute.xlu0 %1351
        %v1354 = vsel %vm1296, %v1350, 0
        %v1357 = vsel %vm1296, %v1352, 0
        %1359 = vmatpush.bf16.xpose.msra.mxu0 0
        %1360 = vmatpush.bf16.xpose.msra.mxu0 0
        %1361 = vmatpush.bf16.xpose.msra.mxu0 0
        %1362 = vmatpush.bf16.xpose.msra.mxu0 0
        %1363 = vmatpush.bf16.xpose.msra.mxu0 0
        %1364 = vmatpush.bf16.xpose.msra.mxu0 0
        %1365 = vmatpush.bf16.xpose.msra.mxu0 0
        %1366 = vmatpush.bf16.xpose.msra.mxu0 %v1357
        %1367 = vmatmul.bf16.gmra.mxu0 %v1354
        %v1368 = vpop.f32.mrf.mxu0
        %v1369 = vadd.f32 %v1291, %v1368
        %v1370 = vpop.f32.mrf.mxu0
        %1371 = vdwg.mxu0
        %v1372 = vsel %vm1316, %v1369, -inf
        %1373 = vmax.xlane.f32.xlu0 %v1372
        %v1374 = vpop.xlane.xlu0 %1373
        %v1375 = vsub.f32 %v1369, %v1374
        %v1376 = vmul.f32 %v1375, 1.442695
        %v1377 = vpow.pop %v1376
        %v1378 = vsel %vm1316, %v1377, 0.0
        %1379 = vadd.xlane.f32.xlu0 %v1378
        %v1380 = vpop.xlane.xlu0 %1379
        %v1381 = vrcp.pop %v1380
        %v1382 = vmul.f32 %v1377, %v1381
        %v1383 = vpack.c.bf16 %v1382, %v1382
        %1385 = vrot.lane.b32.xlu0 %v1329, 112
        %v1386 = vpop.permute.xlu0 %1385
        %v1388 = vsel %vm1316, %v1383, 0
        %v1391 = vsel %vm1133, %v1386, 0
        %1393 = vmatpush.bf16.msra.mxu0 0
        %1394 = vmatpush.bf16.msra.mxu0 0
        %1395 = vmatpush.bf16.msra.mxu0 0
        %1396 = vmatpush.bf16.msra.mxu0 0
        %1397 = vmatpush.bf16.msra.mxu0 0
        %1398 = vmatpush.bf16.msra.mxu0 0
        %1399 = vmatpush.bf16.msra.mxu0 0
        %1400 = vmatpush.bf16.msra.mxu0 %v1391
        %1401 = vmatmul.bf16.gmra.mxu0 %v1388
        %v1402 = vpop.f32.mrf.mxu0
        %v1403 = vadd.f32 0.0, %v1402
        %v1404 = vpop.f32.mrf.mxu0
        %1405 = vdwg.mxu0
        %1406 = vrot.lane.b32.xlu0 %v1289, 96
        %v1407 = vpop.permute.xlu0 %1406
        %1408 = vrot.lane.b32.xlu0 %v1289, 32
        %v1409 = vpop.permute.xlu0 %1408
        %v1411 = vsel %vm1296, %v1407, 0
        %v1414 = vsel %vm1296, %v1409, 0
        %1416 = vmatpush.bf16.xpose.msra.mxu0 0
        %1417 = vmatpush.bf16.xpose.msra.mxu0 0
        %1418 = vmatpush.bf16.xpose.msra.mxu0 0
        %1419 = vmatpush.bf16.xpose.msra.mxu0 0
        %1420 = vmatpush.bf16.xpose.msra.mxu0 0
        %1421 = vmatpush.bf16.xpose.msra.mxu0 0
        %1422 = vmatpush.bf16.xpose.msra.mxu0 0
        %1423 = vmatpush.bf16.xpose.msra.mxu0 %v1414
        %1424 = vmatmul.bf16.gmra.mxu0 %v1411
        %v1425 = vpop.f32.mrf.mxu0
        %v1426 = vadd.f32 %v1291, %v1425
        %v1427 = vpop.f32.mrf.mxu0
        %1428 = vdwg.mxu0
        %v1429 = vsel %vm1316, %v1426, -inf
        %1430 = vmax.xlane.f32.xlu0 %v1429
        %v1431 = vpop.xlane.xlu0 %1430
        %v1432 = vsub.f32 %v1426, %v1431
        %v1433 = vmul.f32 %v1432, 1.442695
        %v1434 = vpow.pop %v1433
        %v1435 = vsel %vm1316, %v1434, 0.0
        %1436 = vadd.xlane.f32.xlu0 %v1435
        %v1437 = vpop.xlane.xlu0 %1436
        %v1438 = vrcp.pop %v1437
        %v1439 = vmul.f32 %v1434, %v1438
        %v1440 = vpack.c.bf16 %v1439, %v1439
        %1441 = vrot.lane.b32.xlu0 %v1329, 96
        %v1442 = vpop.permute.xlu0 %1441
        %v1444 = vsel %vm1316, %v1440, 0
        %v1447 = vsel %vm1133, %v1442, 0
        %1449 = vmatpush.bf16.msra.mxu0 0
        %1450 = vmatpush.bf16.msra.mxu0 0
        %1451 = vmatpush.bf16.msra.mxu0 0
        %1452 = vmatpush.bf16.msra.mxu0 0
        %1453 = vmatpush.bf16.msra.mxu0 0
        %1454 = vmatpush.bf16.msra.mxu0 0
        %1455 = vmatpush.bf16.msra.mxu0 0
        %1456 = vmatpush.bf16.msra.mxu0 %v1447
        %1457 = vmatmul.bf16.gmra.mxu0 %v1444
        %v1458 = vpop.f32.mrf.mxu0
        %v1459 = vadd.f32 0.0, %v1458
        %v1460 = vpop.f32.mrf.mxu0
        %1461 = vdwg.mxu0
        %1462 = vrot.lane.b32.xlu0 %v1289, 80
        %v1463 = vpop.permute.xlu0 %1462
        %1464 = vrot.lane.b32.xlu0 %v1289, 16
        %v1465 = vpop.permute.xlu0 %1464
        %v1467 = vsel %vm1296, %v1463, 0
        %v1470 = vsel %vm1296, %v1465, 0
        %1472 = vmatpush.bf16.xpose.msra.mxu0 0
        %1473 = vmatpush.bf16.xpose.msra.mxu0 0
        %1474 = vmatpush.bf16.xpose.msra.mxu0 0
        %1475 = vmatpush.bf16.xpose.msra.mxu0 0
        %1476 = vmatpush.bf16.xpose.msra.mxu0 0
        %1477 = vmatpush.bf16.xpose.msra.mxu0 0
        %1478 = vmatpush.bf16.xpose.msra.mxu0 0
        %1479 = vmatpush.bf16.xpose.msra.mxu0 %v1470
        %1480 = vmatmul.bf16.gmra.mxu0 %v1467
        %v1481 = vpop.f32.mrf.mxu0
        %v1482 = vadd.f32 %v1291, %v1481
        %v1483 = vpop.f32.mrf.mxu0
        %1484 = vdwg.mxu0
        %v1485 = vsel %vm1316, %v1482, -inf
        %1486 = vmax.xlane.f32.xlu0 %v1485
        %v1487 = vpop.xlane.xlu0 %1486
        %v1488 = vsub.f32 %v1482, %v1487
        %v1489 = vmul.f32 %v1488, 1.442695
        %v1490 = vpow.pop %v1489
        %v1491 = vsel %vm1316, %v1490, 0.0
        %1492 = vadd.xlane.f32.xlu0 %v1491
        %v1493 = vpop.xlane.xlu0 %1492
        %v1494 = vrcp.pop %v1493
        %v1495 = vmul.f32 %v1490, %v1494
        %v1496 = vpack.c.bf16 %v1495, %v1495
        %1497 = vrot.lane.b32.xlu0 %v1329, 80
        %v1498 = vpop.permute.xlu0 %1497
        %v1500 = vsel %vm1316, %v1496, 0
        %v1503 = vsel %vm1133, %v1498, 0
        %1505 = vmatpush.bf16.msra.mxu0 0
        %1506 = vmatpush.bf16.msra.mxu0 0
        %1507 = vmatpush.bf16.msra.mxu0 0
        %1508 = vmatpush.bf16.msra.mxu0 0
        %1509 = vmatpush.bf16.msra.mxu0 0
        %1510 = vmatpush.bf16.msra.mxu0 0
        %1511 = vmatpush.bf16.msra.mxu0 0
        %1512 = vmatpush.bf16.msra.mxu0 %v1503
        %1513 = vmatmul.bf16.gmra.mxu0 %v1500
        %v1514 = vpop.f32.mrf.mxu0
        %v1515 = vadd.f32 0.0, %v1514
        %v1516 = vpop.f32.mrf.mxu0
        %1517 = vdwg.mxu0
        %1519 = vrot.lane.b32.xlu0 %v1403, 16
        %v1520 = vpop.permute.xlu0 %1519
        %1523 = vrot.lane.b32.xlu0 %v1459, 32
        %v1524 = vpop.permute.xlu0 %1523
        %1527 = vrot.lane.b32.xlu0 %v1515, 48
        %v1528 = vpop.permute.xlu0 %1527
        %v1530 = vsel %vm1296, %v1346, %v1520
        %vm1531 = vcmask 261120
        %v1532 = vsel %vm1531, %v1530, %v1524
        %vm1533 = vcmask 392192
        %v1534 = vsel %vm1533, %v1532, %v1528
        %v1535 = vpack.c.bf16 %v1534, %v1534
        %v1536 = vld [vmem:[%s19] sm:$0xf]
        %v1537 = vld [vmem:[%s19 + $0x4] sm:$0xf]
        %v1538 = vld [vmem:[%s19 + $0x8] sm:$0xf]
        %v1539 = vld [vmem:[%s19 + $0xc] sm:$0xf]
        %v1540 = vld [vmem:[%s19 + $0x10] sm:$0xf]
        %v1541 = vld [vmem:[%s19 + $0x14] sm:$0xf]
        %v1542 = vld [vmem:[%s19 + $0x18] sm:$0xf]
        %v1543 = vld [vmem:[%s19 + $0x1c] sm:$0xf]
        %v1544 = vld [vmem:[%s21] sm:$0x1]
        %v1546 = vperm.slane %v1544, 0
        %v1556 = vunpack.c.l.b16 %v1536
        %v1557 = vunpack.c.l.b16 %v1537
        %v1558 = vunpack.c.l.b16 %v1538
        %v1559 = vunpack.c.l.b16 %v1539
        %v1560 = vunpack.c.l.b16 %v1540
        %v1561 = vunpack.c.l.b16 %v1541
        %v1562 = vunpack.c.l.b16 %v1542
        %v1563 = vunpack.c.l.b16 %v1543
        %v1564 = vpack.c.b16 %v1557, %v1556
        %v1565 = vpack.c.b16 %v1559, %v1558
        %v1566 = vpack.c.b16 %v1561, %v1560
        %v1567 = vpack.c.b16 %v1563, %v1562
        %v1573 = vsel %vm1165, %v1535, 0
        %1575 = vmatpush.bf16.msra.mxu0 0
        %1576 = vmatpush.bf16.msra.mxu0 0
        %1577 = vmatpush.bf16.msra.mxu0 0
        %1578 = vmatpush.bf16.msra.mxu0 0
        %1579 = vmatpush.bf16.msra.mxu0 %v1567
        %1580 = vmatpush.bf16.msra.mxu0 %v1566
        %1581 = vmatpush.bf16.msra.mxu0 %v1565
        %1582 = vmatpush.bf16.msra.mxu0 %v1564
        %1583 = vmatmul.bf16.gmra.mxu0 %v1573
        %v1584 = vpop.f32.mrf.mxu0
        %v1585 = vadd.f32 %v1546, %v1584
        %v1586 = vpop.f32.mrf.mxu0
        %1587 = vdwg.mxu0
        %v1588 = vadd.f32 %v1204, %v1585
        %v1589 = vld [vmem:[%s23] sm:$0x1]
        %v1590 = vld [vmem:[%s25] sm:$0x1]
        %v1591 = vsel %vm1165, %v1588, 0.0
        %1592 = vadd.xlane.f32.xlu0 %v1591
        %v1593 = vpop.xlane.xlu0 %1592
        %v1594 = vmul.f32 %v1593, %v1175
        %v1595 = vsub.f32 %v1588, %v1594
        %v1596 = vmul.f32 %v1595, %v1595
        %v1597 = vsel %vm1165, %v1596, 0.0
        %1598 = vadd.xlane.f32.xlu0 %v1597
        %v1599 = vpop.xlane.xlu0 %1598
        %v1600 = vmul.f32 %v1599, %v1175
        %v1601 = vadd.f32 %v1600, 1e-05
        %v1602 = vrsqrt.pop %v1601
        %v1603 = vmul.f32 %v1602, %v1601
        %v1604 = vmul.f32 %v1603, %v1602
        %v1605 = vmul.f32 0.5, %v1604
        %v1606 = vsub.f32 1.5, %v1605
        %v1607 = vmul.f32 %v1602, %v1606
        %vm1608 = vweird.f32 %v1601
        %vm1609 = vweird.f32 %v1602
        %vm1610 = vmor %vm1608, %vm1609
        %v1611 = vsel %vm1610, %v1602, %v1607
        %v1612 = vmul.f32 %v1595, %v1611
        %v1614 = vperm.slane %v1589, 0
        %v1616 = vmul.f32 %v1612, %v1614
        %v1618 = vperm.slane %v1590, 0
        %v1620 = vadd.f32 %v1616, %v1618
        %v1621 = vpack.c.bf16 %v1620, %v1620
        %v1622 = vld [vmem:[%s27] sm:$0xff]
        %v1623 = vld [vmem:[%s27 + $0x8] sm:$0xff]
        %v1624 = vld [vmem:[%s27 + $0x10] sm:$0xff]
        %v1625 = vld [vmem:[%s27 + $0x18] sm:$0xff]
        %v1626 = vld [vmem:[%s27 + $0x20] sm:$0xff]
        %v1627 = vld [vmem:[%s27 + $0x28] sm:$0xff]
        %v1628 = vld [vmem:[%s27 + $0x30] sm:$0xff]
        %v1629 = vld [vmem:[%s27 + $0x38] sm:$0xff]
        %v1630 = vld [vmem:[%s27 + $0x40] sm:$0xff]
        %v1631 = vld [vmem:[%s27 + $0x48] sm:$0xff]
        %v1632 = vld [vmem:[%s27 + $0x50] sm:$0xff]
        %v1633 = vld [vmem:[%s27 + $0x58] sm:$0xff]
        %v1634 = vld [vmem:[%s27 + $0x60] sm:$0xff]
        %v1635 = vld [vmem:[%s27 + $0x68] sm:$0xff]
        %v1636 = vld [vmem:[%s27 + $0x70] sm:$0xff]
        %v1637 = vld [vmem:[%s27 + $0x78] sm:$0xff]
        %v1638 = vld [vmem:[%s27 + $0x80] sm:$0xff]
        %v1639 = vld [vmem:[%s27 + $0x88] sm:$0xff]
        %v1640 = vld [vmem:[%s27 + $0x90] sm:$0xff]
        %v1641 = vld [vmem:[%s27 + $0x98] sm:$0xff]
        %v1642 = vld [vmem:[%s27 + $0xa0] sm:$0xff]
        %v1643 = vld [vmem:[%s27 + $0xa8] sm:$0xff]
        %v1644 = vld [vmem:[%s27 + $0xb0] sm:$0xff]
        %v1645 = vld [vmem:[%s27 + $0xb8] sm:$0xff]
        %v1646 = vld [vmem:[%s27 + $0xc0] sm:$0xff]
        %v1647 = vld [vmem:[%s27 + $0xc8] sm:$0xff]
        %v1648 = vld [vmem:[%s27 + $0xd0] sm:$0xff]
        %v1649 = vld [vmem:[%s27 + $0xd8] sm:$0xff]
        %v1650 = vld [vmem:[%s27 + $0xe0] sm:$0xff]
        %v1651 = vld [vmem:[%s27 + $0xe8] sm:$0xff]
        %v1652 = vld [vmem:[%s27 + $0xf0] sm:$0xff]
        %v1653 = vld [vmem:[%s27 + $0xf8] sm:$0xff]
        %v1654 = vld [vmem:[%s27 + $0x100] sm:$0xff]
        %v1655 = vld [vmem:[%s27 + $0x108] sm:$0xff]
        %v1656 = vld [vmem:[%s27 + $0x110] sm:$0xff]
        %v1657 = vld [vmem:[%s27 + $0x118] sm:$0xff]
        %v1658 = vld [vmem:[%s27 + $0x120] sm:$0xff]
        %v1659 = vld [vmem:[%s27 + $0x128] sm:$0xff]
        %v1660 = vld [vmem:[%s27 + $0x130] sm:$0xff]
        %v1661 = vld [vmem:[%s27 + $0x138] sm:$0xff]
        %v1662 = vld [vmem:[%s27 + $0x140] sm:$0xff]
        %v1663 = vld [vmem:[%s27 + $0x148] sm:$0xff]
        %v1664 = vld [vmem:[%s27 + $0x150] sm:$0xff]
        %v1665 = vld [vmem:[%s27 + $0x158] sm:$0xff]
        %v1666 = vld [vmem:[%s27 + $0x160] sm:$0xff]
        %v1667 = vld [vmem:[%s27 + $0x168] sm:$0xff]
        %v1668 = vld [vmem:[%s27 + $0x170] sm:$0xff]
        %v1669 = vld [vmem:[%s27 + $0x178] sm:$0xff]
        %v1670 = vld [vmem:[%s27 + $0x180] sm:$0xff]
        %v1671 = vld [vmem:[%s27 + $0x188] sm:$0xff]
        %v1672 = vld [vmem:[%s27 + $0x190] sm:$0xff]
        %v1673 = vld [vmem:[%s27 + $0x198] sm:$0xff]
        %v1674 = vld [vmem:[%s27 + $0x1a0] sm:$0xff]
        %v1675 = vld [vmem:[%s27 + $0x1a8] sm:$0xff]
        %v1676 = vld [vmem:[%s27 + $0x1b0] sm:$0xff]
        %v1677 = vld [vmem:[%s27 + $0x1b8] sm:$0xff]
        %v1678 = vld [vmem:[%s27 + $0x1c0] sm:$0xff]
        %v1679 = vld [vmem:[%s27 + $0x1c8] sm:$0xff]
        %v1680 = vld [vmem:[%s27 + $0x1d0] sm:$0xff]
        %v1681 = vld [vmem:[%s27 + $0x1d8] sm:$0xff]
        %v1682 = vld [vmem:[%s27 + $0x1e0] sm:$0xff]
        %v1683 = vld [vmem:[%s27 + $0x1e8] sm:$0xff]
        %v1684 = vld [vmem:[%s27 + $0x1f0] sm:$0xff]
        %v1685 = vld [vmem:[%s27 + $0x1f8] sm:$0xff]
        %v1686 = vld [vmem:[%s29] sm:$0xff]
        %v1687 = vld [vmem:[%s29 + $0x8] sm:$0xff]
        %v1690 = vperm.slane %v1686, 0
        %v1691 = vperm.slane %v1686, 1
        %v1692 = vperm.slane %v1686, 2
        %v1693 = vperm.slane %v1686, 3
        %v1694 = vperm.slane %v1686, 4
        %v1695 = vperm.slane %v1686, 5
        %v1696 = vperm.slane %v1686, 6
        %v1697 = vperm.slane %v1686, 7
        %v1698 = vperm.slane %v1687, 0
        %v1699 = vperm.slane %v1687, 1
        %v1700 = vperm.slane %v1687, 2
        %v1701 = vperm.slane %v1687, 3
        %v1702 = vperm.slane %v1687, 4
        %v1703 = vperm.slane %v1687, 5
        %v1704 = vperm.slane %v1687, 6
        %v1705 = vperm.slane %v1687, 7
        %v1786 = vunpack.c.l.b16 %v1622
        %v1787 = vunpack.c.h.b16 %v1622
        %v1788 = vunpack.c.l.b16 %v1623
        %v1789 = vunpack.c.h.b16 %v1623
        %v1790 = vunpack.c.l.b16 %v1624
        %v1791 = vunpack.c.h.b16 %v1624
        %v1792 = vunpack.c.l.b16 %v1625
        %v1793 = vunpack.c.h.b16 %v1625
        %v1794 = vunpack.c.l.b16 %v1626
        %v1795 = vunpack.c.h.b16 %v1626
        %v1796 = vunpack.c.l.b16 %v1627
        %v1797 = vunpack.c.h.b16 %v1627
        %v1798 = vunpack.c.l.b16 %v1628
        %v1799 = vunpack.c.h.b16 %v1628
        %v1800 = vunpack.c.l.b16 %v1629
        %v1801 = vunpack.c.h.b16 %v1629
        %v1802 = vunpack.c.l.b16 %v1630
        %v1803 = vunpack.c.h.b16 %v1630
        %v1804 = vunpack.c.l.b16 %v1631
        %v1805 = vunpack.c.h.b16 %v1631
        %v1806 = vunpack.c.l.b16 %v1632
        %v1807 = vunpack.c.h.b16 %v1632
        %v1808 = vunpack.c.l.b16 %v1633
        %v1809 = vunpack.c.h.b16 %v1633
        %v1810 = vunpack.c.l.b16 %v1634
        %v1811 = vunpack.c.h.b16 %v1634
        %v1812 = vunpack.c.l.b16 %v1635
        %v1813 = vunpack.c.h.b16 %v1635
        %v1814 = vunpack.c.l.b16 %v1636
        %v1815 = vunpack.c.h.b16 %v1636
        %v1816 = vunpack.c.l.b16 %v1637
        %v1817 = vunpack.c.h.b16 %v1637
        %v1818 = vunpack.c.l.b16 %v1638
        %v1819 = vunpack.c.h.b16 %v1638
        %v1820 = vunpack.c.l.b16 %v1639
        %v1821 = vunpack.c.h.b16 %v1639
        %v1822 = vunpack.c.l.b16 %v1640
        %v1823 = vunpack.c.h.b16 %v1640
        %v1824 = vunpack.c.l.b16 %v1641
        %v1825 = vunpack.c.h.b16 %v1641
        %v1826 = vunpack.c.l.b16 %v1642
        %v1827 = vunpack.c.h.b16 %v1642
        %v1828 = vunpack.c.l.b16 %v1643
        %v1829 = vunpack.c.h.b16 %v1643
        %v1830 = vunpack.c.l.b16 %v1644
        %v1831 = vunpack.c.h.b16 %v1644
        %v1832 = vunpack.c.l.b16 %v1645
        %v1833 = vunpack.c.h.b16 %v1645
        %v1834 = vunpack.c.l.b16 %v1646
        %v1835 = vunpack.c.h.b16 %v1646
        %v1836 = vunpack.c.l.b16 %v1647
        %v1837 = vunpack.c.h.b16 %v1647
        %v1838 = vunpack.c.l.b16 %v1648
        %v1839 = vunpack.c.h.b16 %v1648
        %v1840 = vunpack.c.l.b16 %v1649
        %v1841 = vunpack.c.h.b16 %v1649
        %v1842 = vunpack.c.l.b16 %v1650
        %v1843 = vunpack.c.h.b16 %v1650
        %v1844 = vunpack.c.l.b16 %v1651
        %v1845 = vunpack.c.h.b16 %v1651
        %v1846 = vunpack.c.l.b16 %v1652
        %v1847 = vunpack.c.h.b16 %v1652
        %v1848 = vunpack.c.l.b16 %v1653
        %v1849 = vunpack.c.h.b16 %v1653
        %v1850 = vunpack.c.l.b16 %v1654
        %v1851 = vunpack.c.h.b16 %v1654
        %v1852 = vunpack.c.l.b16 %v1655
        %v1853 = vunpack.c.h.b16 %v1655
        %v1854 = vunpack.c.l.b16 %v1656
        %v1855 = vunpack.c.h.b16 %v1656
        %v1856 = vunpack.c.l.b16 %v1657
        %v1857 = vunpack.c.h.b16 %v1657
        %v1858 = vunpack.c.l.b16 %v1658
        %v1859 = vunpack.c.h.b16 %v1658
        %v1860 = vunpack.c.l.b16 %v1659
        %v1861 = vunpack.c.h.b16 %v1659
        %v1862 = vunpack.c.l.b16 %v1660
        %v1863 = vunpack.c.h.b16 %v1660
        %v1864 = vunpack.c.l.b16 %v1661
        %v1865 = vunpack.c.h.b16 %v1661
        %v1866 = vunpack.c.l.b16 %v1662
        %v1867 = vunpack.c.h.b16 %v1662
        %v1868 = vunpack.c.l.b16 %v1663
        %v1869 = vunpack.c.h.b16 %v1663
        %v1870 = vunpack.c.l.b16 %v1664
        %v1871 = vunpack.c.h.b16 %v1664
        %v1872 = vunpack.c.l.b16 %v1665
        %v1873 = vunpack.c.h.b16 %v1665
        %v1874 = vunpack.c.l.b16 %v1666
        %v1875 = vunpack.c.h.b16 %v1666
        %v1876 = vunpack.c.l.b16 %v1667
        %v1877 = vunpack.c.h.b16 %v1667
        %v1878 = vunpack.c.l.b16 %v1668
        %v1879 = vunpack.c.h.b16 %v1668
        %v1880 = vunpack.c.l.b16 %v1669
        %v1881 = vunpack.c.h.b16 %v1669
        %v1882 = vunpack.c.l.b16 %v1670
        %v1883 = vunpack.c.h.b16 %v1670
        %v1884 = vunpack.c.l.b16 %v1671
        %v1885 = vunpack.c.h.b16 %v1671
        %v1886 = vunpack.c.l.b16 %v1672
        %v1887 = vunpack.c.h.b16 %v1672
        %v1888 = vunpack.c.l.b16 %v1673
        %v1889 = vunpack.c.h.b16 %v1673
        %v1890 = vunpack.c.l.b16 %v1674
        %v1891 = vunpack.c.h.b16 %v1674
        %v1892 = vunpack.c.l.b16 %v1675
        %v1893 = vunpack.c.h.b16 %v1675
        %v1894 = vunpack.c.l.b16 %v1676
        %v1895 = vunpack.c.h.b16 %v1676
        %v1896 = vunpack.c.l.b16 %v1677
        %v1897 = vunpack.c.h.b16 %v1677
        %v1898 = vunpack.c.l.b16 %v1678
        %v1899 = vunpack.c.h.b16 %v1678
        %v1900 = vunpack.c.l.b16 %v1679
        %v1901 = vunpack.c.h.b16 %v1679
        %v1902 = vunpack.c.l.b16 %v1680
        %v1903 = vunpack.c.h.b16 %v1680
        %v1904 = vunpack.c.l.b16 %v1681
        %v1905 = vunpack.c.h.b16 %v1681
        %v1906 = vunpack.c.l.b16 %v1682
        %v1907 = vunpack.c.h.b16 %v1682
        %v1908 = vunpack.c.l.b16 %v1683
        %v1909 = vunpack.c.h.b16 %v1683
        %v1910 = vunpack.c.l.b16 %v1684
        %v1911 = vunpack.c.h.b16 %v1684
        %v1912 = vunpack.c.l.b16 %v1685
        %v1913 = vunpack.c.h.b16 %v1685
        %v1914 = vpack.c.b16 %v1802, %v1786
        %v1915 = vpack.c.b16 %v1803, %v1787
        %v1916 = vpack.c.b16 %v1804, %v1788
        %v1917 = vpack.c.b16 %v1805, %v1789
        %v1918 = vpack.c.b16 %v1806, %v1790
        %v1919 = vpack.c.b16 %v1807, %v1791
        %v1920 = vpack.c.b16 %v1808, %v1792
        %v1921 = vpack.c.b16 %v1809, %v1793
        %v1922 = vpack.c.b16 %v1810, %v1794
        %v1923 = vpack.c.b16 %v1811, %v1795
        %v1924 = vpack.c.b16 %v1812, %v1796
        %v1925 = vpack.c.b16 %v1813, %v1797
        %v1926 = vpack.c.b16 %v1814, %v1798
        %v1927 = vpack.c.b16 %v1815, %v1799
        %v1928 = vpack.c.b16 %v1816, %v1800
        %v1929 = vpack.c.b16 %v1817, %v1801
        %v1930 = vpack.c.b16 %v1834, %v1818
        %v1931 = vpack.c.b16 %v1835, %v1819
        %v1932 = vpack.c.b16 %v1836, %v1820
        %v1933 = vpack.c.b16 %v1837, %v1821
        %v1934 = vpack.c.b16 %v1838, %v1822
        %v1935 = vpack.c.b16 %v1839, %v1823
        %v1936 = vpack.c.b16 %v1840, %v1824
        %v1937 = vpack.c.b16 %v1841, %v1825
        %v1938 = vpack.c.b16 %v1842, %v1826
        %v1939 = vpack.c.b16 %v1843, %v1827
        %v1940 = vpack.c.b16 %v1844, %v1828
        %v1941 = vpack.c.b16 %v1845, %v1829
        %v1942 = vpack.c.b16 %v1846, %v1830
        %v1943 = vpack.c.b16 %v1847, %v1831
        %v1944 = vpack.c.b16 %v1848, %v1832
        %v1945 = vpack.c.b16 %v1849, %v1833
        %v1946 = vpack.c.b16 %v1866, %v1850
        %v1947 = vpack.c.b16 %v1867, %v1851
        %v1948 = vpack.c.b16 %v1868, %v1852
        %v1949 = vpack.c.b16 %v1869, %v1853
        %v1950 = vpack.c.b16 %v1870, %v1854
        %v1951 = vpack.c.b16 %v1871, %v1855
        %v1952 = vpack.c.b16 %v1872, %v1856
        %v1953 = vpack.c.b16 %v1873, %v1857
        %v1954 = vpack.c.b16 %v1874, %v1858
        %v1955 = vpack.c.b16 %v1875, %v1859
        %v1956 = vpack.c.b16 %v1876, %v1860
        %v1957 = vpack.c.b16 %v1877, %v1861
        %v1958 = vpack.c.b16 %v1878, %v1862
        %v1959 = vpack.c.b16 %v1879, %v1863
        %v1960 = vpack.c.b16 %v1880, %v1864
        %v1961 = vpack.c.b16 %v1881, %v1865
        %v1962 = vpack.c.b16 %v1898, %v1882
        %v1963 = vpack.c.b16 %v1899, %v1883
        %v1964 = vpack.c.b16 %v1900, %v1884
        %v1965 = vpack.c.b16 %v1901, %v1885
        %v1966 = vpack.c.b16 %v1902, %v1886
        %v1967 = vpack.c.b16 %v1903, %v1887
        %v1968 = vpack.c.b16 %v1904, %v1888
        %v1969 = vpack.c.b16 %v1905, %v1889
        %v1970 = vpack.c.b16 %v1906, %v1890
        %v1971 = vpack.c.b16 %v1907, %v1891
        %v1972 = vpack.c.b16 %v1908, %v1892
        %v1973 = vpack.c.b16 %v1909, %v1893
        %v1974 = vpack.c.b16 %v1910, %v1894
        %v1975 = vpack.c.b16 %v1911, %v1895
        %v1976 = vpack.c.b16 %v1912, %v1896
        %v1977 = vpack.c.b16 %v1913, %v1897
        %v2043 = vsel %vm1165, %v1621, 0
        %2045 = vmatpush.bf16.msra.mxu0 0
        %2046 = vmatpush.bf16.msra.mxu0 0
        %2047 = vmatpush.bf16.msra.mxu0 0
        %2048 = vmatpush.bf16.msra.mxu0 0
        %2049 = vmatpush.bf16.msra.mxu0 %v1962
        %2050 = vmatpush.bf16.msra.mxu0 %v1946
        %2051 = vmatpush.bf16.msra.mxu0 %v1930
        %2052 = vmatpush.bf16.msra.mxu0 %v1914
        %2053 = vmatmul.bf16.gmra.mxu0 %v2043
        %v2054 = vpop.f32.mrf.mxu0
        %v2055 = vadd.f32 %v1690, %v2054
        %v2056 = vpop.f32.mrf.mxu0
        %2057 = vdwg.mxu0
        %2058 = vmatpush.bf16.msra.mxu0 0
        %2059 = vmatpush.bf16.msra.mxu0 0
        %2060 = vmatpush.bf16.msra.mxu0 0
        %2061 = vmatpush.bf16.msra.mxu0 0
        %2062 = vmatpush.bf16.msra.mxu0 %v1963
        %2063 = vmatpush.bf16.msra.mxu0 %v1947
        %2064 = vmatpush.bf16.msra.mxu0 %v1931
        %2065 = vmatpush.bf16.msra.mxu0 %v1915
        %2066 = vmatmul.bf16.gmra.mxu0 %v2043
        %v2067 = vpop.f32.mrf.mxu0
        %v2068 = vadd.f32 %v1691, %v2067
        %v2069 = vpop.f32.mrf.mxu0
        %2070 = vdwg.mxu0
        %2071 = vmatpush.bf16.msra.mxu0 0
        %2072 = vmatpush.bf16.msra.mxu0 0
        %2073 = vmatpush.bf16.msra.mxu0 0
        %2074 = vmatpush.bf16.msra.mxu0 0
        %2075 = vmatpush.bf16.msra.mxu0 %v1964
        %2076 = vmatpush.bf16.msra.mxu0 %v1948
        %2077 = vmatpush.bf16.msra.mxu0 %v1932
        %2078 = vmatpush.bf16.msra.mxu0 %v1916
        %2079 = vmatmul.bf16.gmra.mxu0 %v2043
        %v2080 = vpop.f32.mrf.mxu0
        %v2081 = vadd.f32 %v1692, %v2080
        %v2082 = vpop.f32.mrf.mxu0
        %2083 = vdwg.mxu0
        %2084 = vmatpush.bf16.msra.mxu0 0
        %2085 = vmatpush.bf16.msra.mxu0 0
        %2086 = vmatpush.bf16.msra.mxu0 0
        %2087 = vmatpush.bf16.msra.mxu0 0
        %2088 = vmatpush.bf16.msra.mxu0 %v1965
        %2089 = vmatpush.bf16.msra.mxu0 %v1949
        %2090 = vmatpush.bf16.msra.mxu0 %v1933
        %2091 = vmatpush.bf16.msra.mxu0 %v1917
        %2092 = vmatmul.bf16.gmra.mxu0 %v2043
        %v2093 = vpop.f32.mrf.mxu0
        %v2094 = vadd.f32 %v1693, %v2093
        %v2095 = vpop.f32.mrf.mxu0
        %2096 = vdwg.mxu0
        %2097 = vmatpush.bf16.msra.mxu0 0
        %2098 = vmatpush.bf16.msra.mxu0 0
        %2099 = vmatpush.bf16.msra.mxu0 0
        %2100 = vmatpush.bf16.msra.mxu0 0
        %2101 = vmatpush.bf16.msra.mxu0 %v1966
        %2102 = vmatpush.bf16.msra.mxu0 %v1950
        %2103 = vmatpush.bf16.msra.mxu0 %v1934
        %2104 = vmatpush.bf16.msra.mxu0 %v1918
        %2105 = vmatmul.bf16.gmra.mxu0 %v2043
        %v2106 = vpop.f32.mrf.mxu0
        %v2107 = vadd.f32 %v1694, %v2106
        %v2108 = vpop.f32.mrf.mxu0
        %2109 = vdwg.mxu0
        %2110 = vmatpush.bf16.msra.mxu0 0
        %2111 = vmatpush.bf16.msra.mxu0 0
        %2112 = vmatpush.bf16.msra.mxu0 0
        %2113 = vmatpush.bf16.msra.mxu0 0
        %2114 = vmatpush.bf16.msra.mxu0 %v1967
        %2115 = vmatpush.bf16.msra.mxu0 %v1951
        %2116 = vmatpush.bf16.msra.mxu0 %v1935
        %2117 = vmatpush.bf16.msra.mxu0 %v1919
        %2118 = vmatmul.bf16.gmra.mxu0 %v2043
        %v2119 = vpop.f32.mrf.mxu0
        %v2120 = vadd.f32 %v1695, %v2119
        %v2121 = vpop.f32.mrf.mxu0
        %2122 = vdwg.mxu0
        %2123 = vmatpush.bf16.msra.mxu0 0
        %2124 = vmatpush.bf16.msra.mxu0 0
        %2125 = vmatpush.bf16.msra.mxu0 0
        %2126 = vmatpush.bf16.msra.mxu0 0
        %2127 = vmatpush.bf16.msra.mxu0 %v1968
        %2128 = vmatpush.bf16.msra.mxu0 %v1952
        %2129 = vmatpush.bf16.msra.mxu0 %v1936
        %2130 = vmatpush.bf16.msra.mxu0 %v1920
        %2131 = vmatmul.bf16.gmra.mxu0 %v2043
        %v2132 = vpop.f32.mrf.mxu0
        %v2133 = vadd.f32 %v1696, %v2132
        %v2134 = vpop.f32.mrf.mxu0
        %2135 = vdwg.mxu0
        %2136 = vmatpush.bf16.msra.mxu0 0
        %2137 = vmatpush.bf16.msra.mxu0 0
        %2138 = vmatpush.bf16.msra.mxu0 0
        %2139 = vmatpush.bf16.msra.mxu0 0
        %2140 = vmatpush.bf16.msra.mxu0 %v1969
        %2141 = vmatpush.bf16.msra.mxu0 %v1953
        %2142 = vmatpush.bf16.msra.mxu0 %v1937
        %2143 = vmatpush.bf16.msra.mxu0 %v1921
        %2144 = vmatmul.bf16.gmra.mxu0 %v2043
        %v2145 = vpop.f32.mrf.mxu0
        %v2146 = vadd.f32 %v1697, %v2145
        %v2147 = vpop.f32.mrf.mxu0
        %2148 = vdwg.mxu0
        %2149 = vmatpush.bf16.msra.mxu0 0
        %2150 = vmatpush.bf16.msra.mxu0 0
        %2151 = vmatpush.bf16.msra.mxu0 0
        %2152 = vmatpush.bf16.msra.mxu0 0
        %2153 = vmatpush.bf16.msra.mxu0 %v1970
        %2154 = vmatpush.bf16.msra.mxu0 %v1954
        %2155 = vmatpush.bf16.msra.mxu0 %v1938
        %2156 = vmatpush.bf16.msra.mxu0 %v1922
        %2157 = vmatmul.bf16.gmra.mxu0 %v2043
        %v2158 = vpop.f32.mrf.mxu0
        %v2159 = vadd.f32 %v1698, %v2158
        %v2160 = vpop.f32.mrf.mxu0
        %2161 = vdwg.mxu0
        %2162 = vmatpush.bf16.msra.mxu0 0
        %2163 = vmatpush.bf16.msra.mxu0 0
        %2164 = vmatpush.bf16.msra.mxu0 0
        %2165 = vmatpush.bf16.msra.mxu0 0
        %2166 = vmatpush.bf16.msra.mxu0 %v1971
        %2167 = vmatpush.bf16.msra.mxu0 %v1955
        %2168 = vmatpush.bf16.msra.mxu0 %v1939
        %2169 = vmatpush.bf16.msra.mxu0 %v1923
        %2170 = vmatmul.bf16.gmra.mxu0 %v2043
        %v2171 = vpop.f32.mrf.mxu0
        %v2172 = vadd.f32 %v1699, %v2171
        %v2173 = vpop.f32.mrf.mxu0
        %2174 = vdwg.mxu0
        %2175 = vmatpush.bf16.msra.mxu0 0
        %2176 = vmatpush.bf16.msra.mxu0 0
        %2177 = vmatpush.bf16.msra.mxu0 0
        %2178 = vmatpush.bf16.msra.mxu0 0
        %2179 = vmatpush.bf16.msra.mxu0 %v1972
        %2180 = vmatpush.bf16.msra.mxu0 %v1956
        %2181 = vmatpush.bf16.msra.mxu0 %v1940
        %2182 = vmatpush.bf16.msra.mxu0 %v1924
        %2183 = vmatmul.bf16.gmra.mxu0 %v2043
        %v2184 = vpop.f32.mrf.mxu0
        %v2185 = vadd.f32 %v1700, %v2184
        %v2186 = vpop.f32.mrf.mxu0
        %2187 = vdwg.mxu0
        %2188 = vmatpush.bf16.msra.mxu0 0
        %2189 = vmatpush.bf16.msra.mxu0 0
        %2190 = vmatpush.bf16.msra.mxu0 0
        %2191 = vmatpush.bf16.msra.mxu0 0
        %2192 = vmatpush.bf16.msra.mxu0 %v1973
        %2193 = vmatpush.bf16.msra.mxu0 %v1957
        %2194 = vmatpush.bf16.msra.mxu0 %v1941
        %2195 = vmatpush.bf16.msra.mxu0 %v1925
        %2196 = vmatmul.bf16.gmra.mxu0 %v2043
        %v2197 = vpop.f32.mrf.mxu0
        %v2198 = vadd.f32 %v1701, %v2197
        %v2199 = vpop.f32.mrf.mxu0
        %2200 = vdwg.mxu0
        %2201 = vmatpush.bf16.msra.mxu0 0
        %2202 = vmatpush.bf16.msra.mxu0 0
        %2203 = vmatpush.bf16.msra.mxu0 0
        %2204 = vmatpush.bf16.msra.mxu0 0
        %2205 = vmatpush.bf16.msra.mxu0 %v1974
        %2206 = vmatpush.bf16.msra.mxu0 %v1958
        %2207 = vmatpush.bf16.msra.mxu0 %v1942
        %2208 = vmatpush.bf16.msra.mxu0 %v1926
        %2209 = vmatmul.bf16.gmra.mxu0 %v2043
        %v2210 = vpop.f32.mrf.mxu0
        %v2211 = vadd.f32 %v1702, %v2210
        %v2212 = vpop.f32.mrf.mxu0
        %2213 = vdwg.mxu0
        %2214 = vmatpush.bf16.msra.mxu0 0
        %2215 = vmatpush.bf16.msra.mxu0 0
        %2216 = vmatpush.bf16.msra.mxu0 0
        %2217 = vmatpush.bf16.msra.mxu0 0
        %2218 = vmatpush.bf16.msra.mxu0 %v1975
        %2219 = vmatpush.bf16.msra.mxu0 %v1959
        %2220 = vmatpush.bf16.msra.mxu0 %v1943
        %2221 = vmatpush.bf16.msra.mxu0 %v1927
        %2222 = vmatmul.bf16.gmra.mxu0 %v2043
        %v2223 = vpop.f32.mrf.mxu0
        %v2224 = vadd.f32 %v1703, %v2223
        %v2225 = vpop.f32.mrf.mxu0
        %2226 = vdwg.mxu0
        %2227 = vmatpush.bf16.msra.mxu0 0
        %2228 = vmatpush.bf16.msra.mxu0 0
        %2229 = vmatpush.bf16.msra.mxu0 0
        %2230 = vmatpush.bf16.msra.mxu0 0
        %2231 = vmatpush.bf16.msra.mxu0 %v1976
        %2232 = vmatpush.bf16.msra.mxu0 %v1960
        %2233 = vmatpush.bf16.msra.mxu0 %v1944
        %2234 = vmatpush.bf16.msra.mxu0 %v1928
        %2235 = vmatmul.bf16.gmra.mxu0 %v2043
        %v2236 = vpop.f32.mrf.mxu0
        %v2237 = vadd.f32 %v1704, %v2236
        %v2238 = vpop.f32.mrf.mxu0
        %2239 = vdwg.mxu0
        %2240 = vmatpush.bf16.msra.mxu0 0
        %2241 = vmatpush.bf16.msra.mxu0 0
        %2242 = vmatpush.bf16.msra.mxu0 0
        %2243 = vmatpush.bf16.msra.mxu0 0
        %2244 = vmatpush.bf16.msra.mxu0 %v1977
        %2245 = vmatpush.bf16.msra.mxu0 %v1961
        %2246 = vmatpush.bf16.msra.mxu0 %v1945
        %2247 = vmatpush.bf16.msra.mxu0 %v1929
        %2248 = vmatmul.bf16.gmra.mxu0 %v2043
        %v2249 = vpop.f32.mrf.mxu0
        %v2250 = vadd.f32 %v1705, %v2249
        %v2251 = vpop.f32.mrf.mxu0
        %2252 = vdwg.mxu0
        %v2253 = vmax.f32 %v2055, 0.0
        %v2254 = vmax.f32 %v2068, 0.0
        %v2255 = vmax.f32 %v2081, 0.0
        %v2256 = vmax.f32 %v2094, 0.0
        %v2257 = vmax.f32 %v2107, 0.0
        %v2258 = vmax.f32 %v2120, 0.0
        %v2259 = vmax.f32 %v2133, 0.0
        %v2260 = vmax.f32 %v2146, 0.0
        %v2261 = vmax.f32 %v2159, 0.0
        %v2262 = vmax.f32 %v2172, 0.0
        %v2263 = vmax.f32 %v2185, 0.0
        %v2264 = vmax.f32 %v2198, 0.0
        %v2265 = vmax.f32 %v2211, 0.0
        %v2266 = vmax.f32 %v2224, 0.0
        %v2267 = vmax.f32 %v2237, 0.0
        %v2268 = vmax.f32 %v2250, 0.0
        %v2269 = vpack.c.bf16 %v2253, %v2253
        %v2270 = vpack.c.bf16 %v2254, %v2254
        %v2271 = vpack.c.bf16 %v2255, %v2255
        %v2272 = vpack.c.bf16 %v2256, %v2256
        %v2273 = vpack.c.bf16 %v2257, %v2257
        %v2274 = vpack.c.bf16 %v2258, %v2258
        %v2275 = vpack.c.bf16 %v2259, %v2259
        %v2276 = vpack.c.bf16 %v2260, %v2260
        %v2277 = vpack.c.bf16 %v2261, %v2261
        %v2278 = vpack.c.bf16 %v2262, %v2262
        %v2279 = vpack.c.bf16 %v2263, %v2263
        %v2280 = vpack.c.bf16 %v2264, %v2264
        %v2281 = vpack.c.bf16 %v2265, %v2265
        %v2282 = vpack.c.bf16 %v2266, %v2266
        %v2283 = vpack.c.bf16 %v2267, %v2267
        %v2284 = vpack.c.bf16 %v2268, %v2268
        %v2285 = vld [vmem:[%s31] sm:$0xf]
        %v2286 = vld [vmem:[%s31 + $0x4] sm:$0xf]
        %v2287 = vld [vmem:[%s31 + $0x8] sm:$0xf]
        %v2288 = vld [vmem:[%s31 + $0xc] sm:$0xf]
        %v2289 = vld [vmem:[%s31 + $0x10] sm:$0xf]
        %v2290 = vld [vmem:[%s31 + $0x14] sm:$0xf]
        %v2291 = vld [vmem:[%s31 + $0x18] sm:$0xf]
        %v2292 = vld [vmem:[%s31 + $0x1c] sm:$0xf]
        %v2293 = vld [vmem:[%s31 + $0x20] sm:$0xf]
        %v2294 = vld [vmem:[%s31 + $0x24] sm:$0xf]
        %v2295 = vld [vmem:[%s31 + $0x28] sm:$0xf]
        %v2296 = vld [vmem:[%s31 + $0x2c] sm:$0xf]
        %v2297 = vld [vmem:[%s31 + $0x30] sm:$0xf]
        %v2298 = vld [vmem:[%s31 + $0x34] sm:$0xf]
        %v2299 = vld [vmem:[%s31 + $0x38] sm:$0xf]
        %v2300 = vld [vmem:[%s31 + $0x3c] sm:$0xf]
        %v2301 = vld [vmem:[%s31 + $0x40] sm:$0xf]
        %v2302 = vld [vmem:[%s31 + $0x44] sm:$0xf]
        %v2303 = vld [vmem:[%s31 + $0x48] sm:$0xf]
        %v2304 = vld [vmem:[%s31 + $0x4c] sm:$0xf]
        %v2305 = vld [vmem:[%s31 + $0x50] sm:$0xf]
        %v2306 = vld [vmem:[%s31 + $0x54] sm:$0xf]
        %v2307 = vld [vmem:[%s31 + $0x58] sm:$0xf]
        %v2308 = vld [vmem:[%s31 + $0x5c] sm:$0xf]
        %v2309 = vld [vmem:[%s31 + $0x60] sm:$0xf]
        %v2310 = vld [vmem:[%s31 + $0x64] sm:$0xf]
        %v2311 = vld [vmem:[%s31 + $0x68] sm:$0xf]
        %v2312 = vld [vmem:[%s31 + $0x6c] sm:$0xf]
        %v2313 = vld [vmem:[%s31 + $0x70] sm:$0xf]
        %v2314 = vld [vmem:[%s31 + $0x74] sm:$0xf]
        %v2315 = vld [vmem:[%s31 + $0x78] sm:$0xf]
        %v2316 = vld [vmem:[%s31 + $0x7c] sm:$0xf]
        %v2317 = vld [vmem:[%s31 + $0x80] sm:$0xf]
        %v2318 = vld [vmem:[%s31 + $0x84] sm:$0xf]
        %v2319 = vld [vmem:[%s31 + $0x88] sm:$0xf]
        %v2320 = vld [vmem:[%s31 + $0x8c] sm:$0xf]
        %v2321 = vld [vmem:[%s31 + $0x90] sm:$0xf]
        %v2322 = vld [vmem:[%s31 + $0x94] sm:$0xf]
        %v2323 = vld [vmem:[%s31 + $0x98] sm:$0xf]
        %v2324 = vld [vmem:[%s31 + $0x9c] sm:$0xf]
        %v2325 = vld [vmem:[%s31 + $0xa0] sm:$0xf]
        %v2326 = vld [vmem:[%s31 + $0xa4] sm:$0xf]
        %v2327 = vld [vmem:[%s31 + $0xa8] sm:$0xf]
        %v2328 = vld [vmem:[%s31 + $0xac] sm:$0xf]
        %v2329 = vld [vmem:[%s31 + $0xb0] sm:$0xf]
        %v2330 = vld [vmem:[%s31 + $0xb4] sm:$0xf]
        %v2331 = vld [vmem:[%s31 + $0xb8] sm:$0xf]
        %v2332 = vld [vmem:[%s31 + $0xbc] sm:$0xf]
        %v2333 = vld [vmem:[%s31 + $0xc0] sm:$0xf]
        %v2334 = vld [vmem:[%s31 + $0xc4] sm:$0xf]
        %v2335 = vld [vmem:[%s31 + $0xc8] sm:$0xf]
        %v2336 = vld [vmem:[%s31 + $0xcc] sm:$0xf]
        %v2337 = vld [vmem:[%s31 + $0xd0] sm:$0xf]
        %v2338 = vld [vmem:[%s31 + $0xd4] sm:$0xf]
        %v2339 = vld [vmem:[%s31 + $0xd8] sm:$0xf]
        %v2340 = vld [vmem:[%s31 + $0xdc] sm:$0xf]
        %v2341 = vld [vmem:[%s31 + $0xe0] sm:$0xf]
        %v2342 = vld [vmem:[%s31 + $0xe4] sm:$0xf]
        %v2343 = vld [vmem:[%s31 + $0xe8] sm:$0xf]
        %v2344 = vld [vmem:[%s31 + $0xec] sm:$0xf]
        %v2345 = vld [vmem:[%s31 + $0xf0] sm:$0xf]
        %v2346 = vld [vmem:[%s31 + $0xf4] sm:$0xf]
        %v2347 = vld [vmem:[%s31 + $0xf8] sm:$0xf]
        %v2348 = vld [vmem:[%s31 + $0xfc] sm:$0xf]
        %v2349 = vld [vmem:[%s31 + $0x100] sm:$0xf]
        %v2350 = vld [vmem:[%s31 + $0x104] sm:$0xf]
        %v2351 = vld [vmem:[%s31 + $0x108] sm:$0xf]
        %v2352 = vld [vmem:[%s31 + $0x10c] sm:$0xf]
        %v2353 = vld [vmem:[%s31 + $0x110] sm:$0xf]
        %v2354 = vld [vmem:[%s31 + $0x114] sm:$0xf]
        %v2355 = vld [vmem:[%s31 + $0x118] sm:$0xf]
        %v2356 = vld [vmem:[%s31 + $0x11c] sm:$0xf]
        %v2357 = vld [vmem:[%s31 + $0x120] sm:$0xf]
        %v2358 = vld [vmem:[%s31 + $0x124] sm:$0xf]
        %v2359 = vld [vmem:[%s31 + $0x128] sm:$0xf]
        %v2360 = vld [vmem:[%s31 + $0x12c] sm:$0xf]
        %v2361 = vld [vmem:[%s31 + $0x130] sm:$0xf]
        %v2362 = vld [vmem:[%s31 + $0x134] sm:$0xf]
        %v2363 = vld [vmem:[%s31 + $0x138] sm:$0xf]
        %v2364 = vld [vmem:[%s31 + $0x13c] sm:$0xf]
        %v2365 = vld [vmem:[%s31 + $0x140] sm:$0xf]
        %v2366 = vld [vmem:[%s31 + $0x144] sm:$0xf]
        %v2367 = vld [vmem:[%s31 + $0x148] sm:$0xf]
        %v2368 = vld [vmem:[%s31 + $0x14c] sm:$0xf]
        %v2369 = vld [vmem:[%s31 + $0x150] sm:$0xf]
        %v2370 = vld [vmem:[%s31 + $0x154] sm:$0xf]
        %v2371 = vld [vmem:[%s31 + $0x158] sm:$0xf]
        %v2372 = vld [vmem:[%s31 + $0x15c] sm:$0xf]
        %v2373 = vld [vmem:[%s31 + $0x160] sm:$0xf]
        %v2374 = vld [vmem:[%s31 + $0x164] sm:$0xf]
        %v2375 = vld [vmem:[%s31 + $0x168] sm:$0xf]
        %v2376 = vld [vmem:[%s31 + $0x16c] sm:$0xf]
        %v2377 = vld [vmem:[%s31 + $0x170] sm:$0xf]
        %v2378 = vld [vmem:[%s31 + $0x174] sm:$0xf]
        %v2379 = vld [vmem:[%s31 + $0x178] sm:$0xf]
        %v2380 = vld [vmem:[%s31 + $0x17c] sm:$0xf]
        %v2381 = vld [vmem:[%s31 + $0x180] sm:$0xf]
        %v2382 = vld [vmem:[%s31 + $0x184] sm:$0xf]
        %v2383 = vld [vmem:[%s31 + $0x188] sm:$0xf]
        %v2384 = vld [vmem:[%s31 + $0x18c] sm:$0xf]
        %v2385 = vld [vmem:[%s31 + $0x190] sm:$0xf]
        %v2386 = vld [vmem:[%s31 + $0x194] sm:$0xf]
        %v2387 = vld [vmem:[%s31 + $0x198] sm:$0xf]
        %v2388 = vld [vmem:[%s31 + $0x19c] sm:$0xf]
        %v2389 = vld [vmem:[%s31 + $0x1a0] sm:$0xf]
        %v2390 = vld [vmem:[%s31 + $0x1a4] sm:$0xf]
        %v2391 = vld [vmem:[%s31 + $0x1a8] sm:$0xf]
        %v2392 = vld [vmem:[%s31 + $0x1ac] sm:$0xf]
        %v2393 = vld [vmem:[%s31 + $0x1b0] sm:$0xf]
        %v2394 = vld [vmem:[%s31 + $0x1b4] sm:$0xf]
        %v2395 = vld [vmem:[%s31 + $0x1b8] sm:$0xf]
        %v2396 = vld [vmem:[%s31 + $0x1bc] sm:$0xf]
        %v2397 = vld [vmem:[%s31 + $0x1c0] sm:$0xf]
        %v2398 = vld [vmem:[%s31 + $0x1c4] sm:$0xf]
        %v2399 = vld [vmem:[%s31 + $0x1c8] sm:$0xf]
        %v2400 = vld [vmem:[%s31 + $0x1cc] sm:$0xf]
        %v2401 = vld [vmem:[%s31 + $0x1d0] sm:$0xf]
        %v2402 = vld [vmem:[%s31 + $0x1d4] sm:$0xf]
        %v2403 = vld [vmem:[%s31 + $0x1d8] sm:$0xf]
        %v2404 = vld [vmem:[%s31 + $0x1dc] sm:$0xf]
        %v2405 = vld [vmem:[%s31 + $0x1e0] sm:$0xf]
        %v2406 = vld [vmem:[%s31 + $0x1e4] sm:$0xf]
        %v2407 = vld [vmem:[%s31 + $0x1e8] sm:$0xf]
        %v2408 = vld [vmem:[%s31 + $0x1ec] sm:$0xf]
        %v2409 = vld [vmem:[%s31 + $0x1f0] sm:$0xf]
        %v2410 = vld [vmem:[%s31 + $0x1f4] sm:$0xf]
        %v2411 = vld [vmem:[%s31 + $0x1f8] sm:$0xf]
        %v2412 = vld [vmem:[%s31 + $0x1fc] sm:$0xf]
        %v2413 = vld [vmem:[%s31 + $0x200] sm:$0xf]
        %v2414 = vld [vmem:[%s31 + $0x204] sm:$0xf]
        %v2415 = vld [vmem:[%s31 + $0x208] sm:$0xf]
        %v2416 = vld [vmem:[%s31 + $0x20c] sm:$0xf]
        %v2417 = vld [vmem:[%s31 + $0x210] sm:$0xf]
        %v2418 = vld [vmem:[%s31 + $0x214] sm:$0xf]
        %v2419 = vld [vmem:[%s31 + $0x218] sm:$0xf]
        %v2420 = vld [vmem:[%s31 + $0x21c] sm:$0xf]
        %v2421 = vld [vmem:[%s31 + $0x220] sm:$0xf]
        %v2422 = vld [vmem:[%s31 + $0x224] sm:$0xf]
        %v2423 = vld [vmem:[%s31 + $0x228] sm:$0xf]
        %v2424 = vld [vmem:[%s31 + $0x22c] sm:$0xf]
        %v2425 = vld [vmem:[%s31 + $0x230] sm:$0xf]
        %v2426 = vld [vmem:[%s31 + $0x234] sm:$0xf]
        %v2427 = vld [vmem:[%s31 + $0x238] sm:$0xf]
        %v2428 = vld [vmem:[%s31 + $0x23c] sm:$0xf]
        %v2429 = vld [vmem:[%s31 + $0x240] sm:$0xf]
        %v2430 = vld [vmem:[%s31 + $0x244] sm:$0xf]
        %v2431 = vld [vmem:[%s31 + $0x248] sm:$0xf]
        %v2432 = vld [vmem:[%s31 + $0x24c] sm:$0xf]
        %v2433 = vld [vmem:[%s31 + $0x250] sm:$0xf]
        %v2434 = vld [vmem:[%s31 + $0x254] sm:$0xf]
        %v2435 = vld [vmem:[%s31 + $0x258] sm:$0xf]
        %v2436 = vld [vmem:[%s31 + $0x25c] sm:$0xf]
        %v2437 = vld [vmem:[%s31 + $0x260] sm:$0xf]
        %v2438 = vld [vmem:[%s31 + $0x264] sm:$0xf]
        %v2439 = vld [vmem:[%s31 + $0x268] sm:$0xf]
        %v2440 = vld [vmem:[%s31 + $0x26c] sm:$0xf]
        %v2441 = vld [vmem:[%s31 + $0x270] sm:$0xf]
        %v2442 = vld [vmem:[%s31 + $0x274] sm:$0xf]
        %v2443 = vld [vmem:[%s31 + $0x278] sm:$0xf]
        %v2444 = vld [vmem:[%s31 + $0x27c] sm:$0xf]
        %v2445 = vld [vmem:[%s31 + $0x280] sm:$0xf]
        %v2446 = vld [vmem:[%s31 + $0x284] sm:$0xf]
        %v2447 = vld [vmem:[%s31 + $0x288] sm:$0xf]
        %v2448 = vld [vmem:[%s31 + $0x28c] sm:$0xf]
        %v2449 = vld [vmem:[%s31 + $0x290] sm:$0xf]
        %v2450 = vld [vmem:[%s31 + $0x294] sm:$0xf]
        %v2451 = vld [vmem:[%s31 + $0x298] sm:$0xf]
        %v2452 = vld [vmem:[%s31 + $0x29c] sm:$0xf]
        %v2453 = vld [vmem:[%s31 + $0x2a0] sm:$0xf]
        %v2454 = vld [vmem:[%s31 + $0x2a4] sm:$0xf]
        %v2455 = vld [vmem:[%s31 + $0x2a8] sm:$0xf]
        %v2456 = vld [vmem:[%s31 + $0x2ac] sm:$0xf]
        %v2457 = vld [vmem:[%s31 + $0x2b0] sm:$0xf]
        %v2458 = vld [vmem:[%s31 + $0x2b4] sm:$0xf]
        %v2459 = vld [vmem:[%s31 + $0x2b8] sm:$0xf]
        %v2460 = vld [vmem:[%s31 + $0x2bc] sm:$0xf]
        %v2461 = vld [vmem:[%s31 + $0x2c0] sm:$0xf]
        %v2462 = vld [vmem:[%s31 + $0x2c4] sm:$0xf]
        %v2463 = vld [vmem:[%s31 + $0x2c8] sm:$0xf]
        %v2464 = vld [vmem:[%s31 + $0x2cc] sm:$0xf]
        %v2465 = vld [vmem:[%s31 + $0x2d0] sm:$0xf]
        %v2466 = vld [vmem:[%s31 + $0x2d4] sm:$0xf]
        %v2467 = vld [vmem:[%s31 + $0x2d8] sm:$0xf]
        %v2468 = vld [vmem:[%s31 + $0x2dc] sm:$0xf]
        %v2469 = vld [vmem:[%s31 + $0x2e0] sm:$0xf]
        %v2470 = vld [vmem:[%s31 + $0x2e4] sm:$0xf]
        %v2471 = vld [vmem:[%s31 + $0x2e8] sm:$0xf]
        %v2472 = vld [vmem:[%s31 + $0x2ec] sm:$0xf]
        %v2473 = vld [vmem:[%s31 + $0x2f0] sm:$0xf]
        %v2474 = vld [vmem:[%s31 + $0x2f4] sm:$0xf]
        %v2475 = vld [vmem:[%s31 + $0x2f8] sm:$0xf]
        %v2476 = vld [vmem:[%s31 + $0x2fc] sm:$0xf]
        %v2477 = vld [vmem:[%s31 + $0x300] sm:$0xf]
        %v2478 = vld [vmem:[%s31 + $0x304] sm:$0xf]
        %v2479 = vld [vmem:[%s31 + $0x308] sm:$0xf]
        %v2480 = vld [vmem:[%s31 + $0x30c] sm:$0xf]
        %v2481 = vld [vmem:[%s31 + $0x310] sm:$0xf]
        %v2482 = vld [vmem:[%s31 + $0x314] sm:$0xf]
        %v2483 = vld [vmem:[%s31 + $0x318] sm:$0xf]
        %v2484 = vld [vmem:[%s31 + $0x31c] sm:$0xf]
        %v2485 = vld [vmem:[%s31 + $0x320] sm:$0xf]
        %v2486 = vld [vmem:[%s31 + $0x324] sm:$0xf]
        %v2487 = vld [vmem:[%s31 + $0x328] sm:$0xf]
        %v2488 = vld [vmem:[%s31 + $0x32c] sm:$0xf]
        %v2489 = vld [vmem:[%s31 + $0x330] sm:$0xf]
        %v2490 = vld [vmem:[%s31 + $0x334] sm:$0xf]
        %v2491 = vld [vmem:[%s31 + $0x338] sm:$0xf]
        %v2492 = vld [vmem:[%s31 + $0x33c] sm:$0xf]
        %v2493 = vld [vmem:[%s31 + $0x340] sm:$0xf]
        %v2494 = vld [vmem:[%s31 + $0x344] sm:$0xf]
        %v2495 = vld [vmem:[%s31 + $0x348] sm:$0xf]
        %v2496 = vld [vmem:[%s31 + $0x34c] sm:$0xf]
        %v2497 = vld [vmem:[%s31 + $0x350] sm:$0xf]
        %v2498 = vld [vmem:[%s31 + $0x354] sm:$0xf]
        %v2499 = vld [vmem:[%s31 + $0x358] sm:$0xf]
        %v2500 = vld [vmem:[%s31 + $0x35c] sm:$0xf]
        %v2501 = vld [vmem:[%s31 + $0x360] sm:$0xf]
        %v2502 = vld [vmem:[%s31 + $0x364] sm:$0xf]
        %v2503 = vld [vmem:[%s31 + $0x368] sm:$0xf]
        %v2504 = vld [vmem:[%s31 + $0x36c] sm:$0xf]
        %v2505 = vld [vmem:[%s31 + $0x370] sm:$0xf]
        %v2506 = vld [vmem:[%s31 + $0x374] sm:$0xf]
        %v2507 = vld [vmem:[%s31 + $0x378] sm:$0xf]
        %v2508 = vld [vmem:[%s31 + $0x37c] sm:$0xf]
        %v2509 = vld [vmem:[%s31 + $0x380] sm:$0xf]
        %v2510 = vld [vmem:[%s31 + $0x384] sm:$0xf]
        %v2511 = vld [vmem:[%s31 + $0x388] sm:$0xf]
        %v2512 = vld [vmem:[%s31 + $0x38c] sm:$0xf]
        %v2513 = vld [vmem:[%s31 + $0x390] sm:$0xf]
        %v2514 = vld [vmem:[%s31 + $0x394] sm:$0xf]
        %v2515 = vld [vmem:[%s31 + $0x398] sm:$0xf]
        %v2516 = vld [vmem:[%s31 + $0x39c] sm:$0xf]
        %v2517 = vld [vmem:[%s31 + $0x3a0] sm:$0xf]
        %v2518 = vld [vmem:[%s31 + $0x3a4] sm:$0xf]
        %v2519 = vld [vmem:[%s31 + $0x3a8] sm:$0xf]
        %v2520 = vld [vmem:[%s31 + $0x3ac] sm:$0xf]
        %v2521 = vld [vmem:[%s31 + $0x3b0] sm:$0xf]
        %v2522 = vld [vmem:[%s31 + $0x3b4] sm:$0xf]
        %v2523 = vld [vmem:[%s31 + $0x3b8] sm:$0xf]
        %v2524 = vld [vmem:[%s31 + $0x3bc] sm:$0xf]
        %v2525 = vld [vmem:[%s31 + $0x3c0] sm:$0xf]
        %v2526 = vld [vmem:[%s31 + $0x3c4] sm:$0xf]
        %v2527 = vld [vmem:[%s31 + $0x3c8] sm:$0xf]
        %v2528 = vld [vmem:[%s31 + $0x3cc] sm:$0xf]
        %v2529 = vld [vmem:[%s31 + $0x3d0] sm:$0xf]
        %v2530 = vld [vmem:[%s31 + $0x3d4] sm:$0xf]
        %v2531 = vld [vmem:[%s31 + $0x3d8] sm:$0xf]
        %v2532 = vld [vmem:[%s31 + $0x3dc] sm:$0xf]
        %v2533 = vld [vmem:[%s31 + $0x3e0] sm:$0xf]
        %v2534 = vld [vmem:[%s31 + $0x3e4] sm:$0xf]
        %v2535 = vld [vmem:[%s31 + $0x3e8] sm:$0xf]
        %v2536 = vld [vmem:[%s31 + $0x3ec] sm:$0xf]
        %v2537 = vld [vmem:[%s31 + $0x3f0] sm:$0xf]
        %v2538 = vld [vmem:[%s31 + $0x3f4] sm:$0xf]
        %v2539 = vld [vmem:[%s31 + $0x3f8] sm:$0xf]
        %v2540 = vld [vmem:[%s31 + $0x3fc] sm:$0xf]
        %v2541 = vld [vmem:[%s33] sm:$0x1]
        %v2543 = vperm.slane %v2541, 0
        %v2801 = vunpack.c.l.b16 %v2285
        %v2802 = vunpack.c.l.b16 %v2286
        %v2803 = vunpack.c.l.b16 %v2287
        %v2804 = vunpack.c.l.b16 %v2288
        %v2805 = vunpack.c.l.b16 %v2289
        %v2806 = vunpack.c.l.b16 %v2290
        %v2807 = vunpack.c.l.b16 %v2291
        %v2808 = vunpack.c.l.b16 %v2292
        %v2809 = vunpack.c.l.b16 %v2293
        %v2810 = vunpack.c.l.b16 %v2294
        %v2811 = vunpack.c.l.b16 %v2295
        %v2812 = vunpack.c.l.b16 %v2296
        %v2813 = vunpack.c.l.b16 %v2297
        %v2814 = vunpack.c.l.b16 %v2298
        %v2815 = vunpack.c.l.b16 %v2299
        %v2816 = vunpack.c.l.b16 %v2300
        %v2817 = vunpack.c.l.b16 %v2301
        %v2818 = vunpack.c.l.b16 %v2302
        %v2819 = vunpack.c.l.b16 %v2303
        %v2820 = vunpack.c.l.b16 %v2304
        %v2821 = vunpack.c.l.b16 %v2305
        %v2822 = vunpack.c.l.b16 %v2306
        %v2823 = vunpack.c.l.b16 %v2307
        %v2824 = vunpack.c.l.b16 %v2308
        %v2825 = vunpack.c.l.b16 %v2309
        %v2826 = vunpack.c.l.b16 %v2310
        %v2827 = vunpack.c.l.b16 %v2311
        %v2828 = vunpack.c.l.b16 %v2312
        %v2829 = vunpack.c.l.b16 %v2313
        %v2830 = vunpack.c.l.b16 %v2314
        %v2831 = vunpack.c.l.b16 %v2315
        %v2832 = vunpack.c.l.b16 %v2316
        %v2833 = vunpack.c.l.b16 %v2317
        %v2834 = vunpack.c.l.b16 %v2318
        %v2835 = vunpack.c.l.b16 %v2319
        %v2836 = vunpack.c.l.b16 %v2320
        %v2837 = vunpack.c.l.b16 %v2321
        %v2838 = vunpack.c.l.b16 %v2322
        %v2839 = vunpack.c.l.b16 %v2323
        %v2840 = vunpack.c.l.b16 %v2324
        %v2841 = vunpack.c.l.b16 %v2325
        %v2842 = vunpack.c.l.b16 %v2326
        %v2843 = vunpack.c.l.b16 %v2327
        %v2844 = vunpack.c.l.b16 %v2328
        %v2845 = vunpack.c.l.b16 %v2329
        %v2846 = vunpack.c.l.b16 %v2330
        %v2847 = vunpack.c.l.b16 %v2331
        %v2848 = vunpack.c.l.b16 %v2332
        %v2849 = vunpack.c.l.b16 %v2333
        %v2850 = vunpack.c.l.b16 %v2334
        %v2851 = vunpack.c.l.b16 %v2335
        %v2852 = vunpack.c.l.b16 %v2336
        %v2853 = vunpack.c.l.b16 %v2337
        %v2854 = vunpack.c.l.b16 %v2338
        %v2855 = vunpack.c.l.b16 %v2339
        %v2856 = vunpack.c.l.b16 %v2340
        %v2857 = vunpack.c.l.b16 %v2341
        %v2858 = vunpack.c.l.b16 %v2342
        %v2859 = vunpack.c.l.b16 %v2343
        %v2860 = vunpack.c.l.b16 %v2344
        %v2861 = vunpack.c.l.b16 %v2345
        %v2862 = vunpack.c.l.b16 %v2346
        %v2863 = vunpack.c.l.b16 %v2347
        %v2864 = vunpack.c.l.b16 %v2348
        %v2865 = vunpack.c.l.b16 %v2349
        %v2866 = vunpack.c.l.b16 %v2350
        %v2867 = vunpack.c.l.b16 %v2351
        %v2868 = vunpack.c.l.b16 %v2352
        %v2869 = vunpack.c.l.b16 %v2353
        %v2870 = vunpack.c.l.b16 %v2354
        %v2871 = vunpack.c.l.b16 %v2355
        %v2872 = vunpack.c.l.b16 %v2356
        %v2873 = vunpack.c.l.b16 %v2357
        %v2874 = vunpack.c.l.b16 %v2358
        %v2875 = vunpack.c.l.b16 %v2359
        %v2876 = vunpack.c.l.b16 %v2360
        %v2877 = vunpack.c.l.b16 %v2361
        %v2878 = vunpack.c.l.b16 %v2362
        %v2879 = vunpack.c.l.b16 %v2363
        %v2880 = vunpack.c.l.b16 %v2364
        %v2881 = vunpack.c.l.b16 %v2365
        %v2882 = vunpack.c.l.b16 %v2366
        %v2883 = vunpack.c.l.b16 %v2367
        %v2884 = vunpack.c.l.b16 %v2368
        %v2885 = vunpack.c.l.b16 %v2369
        %v2886 = vunpack.c.l.b16 %v2370
        %v2887 = vunpack.c.l.b16 %v2371
        %v2888 = vunpack.c.l.b16 %v2372
        %v2889 = vunpack.c.l.b16 %v2373
        %v2890 = vunpack.c.l.b16 %v2374
        %v2891 = vunpack.c.l.b16 %v2375
        %v2892 = vunpack.c.l.b16 %v2376
        %v2893 = vunpack.c.l.b16 %v2377
        %v2894 = vunpack.c.l.b16 %v2378
        %v2895 = vunpack.c.l.b16 %v2379
        %v2896 = vunpack.c.l.b16 %v2380
        %v2897 = vunpack.c.l.b16 %v2381
        %v2898 = vunpack.c.l.b16 %v2382
        %v2899 = vunpack.c.l.b16 %v2383
        %v2900 = vunpack.c.l.b16 %v2384
        %v2901 = vunpack.c.l.b16 %v2385
        %v2902 = vunpack.c.l.b16 %v2386
        %v2903 = vunpack.c.l.b16 %v2387
        %v2904 = vunpack.c.l.b16 %v2388
        %v2905 = vunpack.c.l.b16 %v2389
        %v2906 = vunpack.c.l.b16 %v2390
        %v2907 = vunpack.c.l.b16 %v2391
        %v2908 = vunpack.c.l.b16 %v2392
        %v2909 = vunpack.c.l.b16 %v2393
        %v2910 = vunpack.c.l.b16 %v2394
        %v2911 = vunpack.c.l.b16 %v2395
        %v2912 = vunpack.c.l.b16 %v2396
        %v2913 = vunpack.c.l.b16 %v2397
        %v2914 = vunpack.c.l.b16 %v2398
        %v2915 = vunpack.c.l.b16 %v2399
        %v2916 = vunpack.c.l.b16 %v2400
        %v2917 = vunpack.c.l.b16 %v2401
        %v2918 = vunpack.c.l.b16 %v2402
        %v2919 = vunpack.c.l.b16 %v2403
        %v2920 = vunpack.c.l.b16 %v2404
        %v2921 = vunpack.c.l.b16 %v2405
        %v2922 = vunpack.c.l.b16 %v2406
        %v2923 = vunpack.c.l.b16 %v2407
        %v2924 = vunpack.c.l.b16 %v2408
        %v2925 = vunpack.c.l.b16 %v2409
        %v2926 = vunpack.c.l.b16 %v2410
        %v2927 = vunpack.c.l.b16 %v2411
        %v2928 = vunpack.c.l.b16 %v2412
        %v2929 = vunpack.c.l.b16 %v2413
        %v2930 = vunpack.c.l.b16 %v2414
        %v2931 = vunpack.c.l.b16 %v2415
        %v2932 = vunpack.c.l.b16 %v2416
        %v2933 = vunpack.c.l.b16 %v2417
        %v2934 = vunpack.c.l.b16 %v2418
        %v2935 = vunpack.c.l.b16 %v2419
        %v2936 = vunpack.c.l.b16 %v2420
        %v2937 = vunpack.c.l.b16 %v2421
        %v2938 = vunpack.c.l.b16 %v2422
        %v2939 = vunpack.c.l.b16 %v2423
        %v2940 = vunpack.c.l.b16 %v2424
        %v2941 = vunpack.c.l.b16 %v2425
        %v2942 = vunpack.c.l.b16 %v2426
        %v2943 = vunpack.c.l.b16 %v2427
        %v2944 = vunpack.c.l.b16 %v2428
        %v2945 = vunpack.c.l.b16 %v2429
        %v2946 = vunpack.c.l.b16 %v2430
        %v2947 = vunpack.c.l.b16 %v2431
        %v2948 = vunpack.c.l.b16 %v2432
        %v2949 = vunpack.c.l.b16 %v2433
        %v2950 = vunpack.c.l.b16 %v2434
        %v2951 = vunpack.c.l.b16 %v2435
        %v2952 = vunpack.c.l.b16 %v2436
        %v2953 = vunpack.c.l.b16 %v2437
        %v2954 = vunpack.c.l.b16 %v2438
        %v2955 = vunpack.c.l.b16 %v2439
        %v2956 = vunpack.c.l.b16 %v2440
        %v2957 = vunpack.c.l.b16 %v2441
        %v2958 = vunpack.c.l.b16 %v2442
        %v2959 = vunpack.c.l.b16 %v2443
        %v2960 = vunpack.c.l.b16 %v2444
        %v2961 = vunpack.c.l.b16 %v2445
        %v2962 = vunpack.c.l.b16 %v2446
        %v2963 = vunpack.c.l.b16 %v2447
        %v2964 = vunpack.c.l.b16 %v2448
        %v2965 = vunpack.c.l.b16 %v2449
        %v2966 = vunpack.c.l.b16 %v2450
        %v2967 = vunpack.c.l.b16 %v2451
        %v2968 = vunpack.c.l.b16 %v2452
        %v2969 = vunpack.c.l.b16 %v2453
        %v2970 = vunpack.c.l.b16 %v2454
        %v2971 = vunpack.c.l.b16 %v2455
        %v2972 = vunpack.c.l.b16 %v2456
        %v2973 = vunpack.c.l.b16 %v2457
        %v2974 = vunpack.c.l.b16 %v2458
        %v2975 = vunpack.c.l.b16 %v2459
        %v2976 = vunpack.c.l.b16 %v2460
        %v2977 = vunpack.c.l.b16 %v2461
        %v2978 = vunpack.c.l.b16 %v2462
        %v2979 = vunpack.c.l.b16 %v2463
        %v2980 = vunpack.c.l.b16 %v2464
        %v2981 = vunpack.c.l.b16 %v2465
        %v2982 = vunpack.c.l.b16 %v2466
        %v2983 = vunpack.c.l.b16 %v2467
        %v2984 = vunpack.c.l.b16 %v2468
        %v2985 = vunpack.c.l.b16 %v2469
        %v2986 = vunpack.c.l.b16 %v2470
        %v2987 = vunpack.c.l.b16 %v2471
        %v2988 = vunpack.c.l.b16 %v2472
        %v2989 = vunpack.c.l.b16 %v2473
        %v2990 = vunpack.c.l.b16 %v2474
        %v2991 = vunpack.c.l.b16 %v2475
        %v2992 = vunpack.c.l.b16 %v2476
        %v2993 = vunpack.c.l.b16 %v2477
        %v2994 = vunpack.c.l.b16 %v2478
        %v2995 = vunpack.c.l.b16 %v2479
        %v2996 = vunpack.c.l.b16 %v2480
        %v2997 = vunpack.c.l.b16 %v2481
        %v2998 = vunpack.c.l.b16 %v2482
        %v2999 = vunpack.c.l.b16 %v2483
        %v3000 = vunpack.c.l.b16 %v2484
        %v3001 = vunpack.c.l.b16 %v2485
        %v3002 = vunpack.c.l.b16 %v2486
        %v3003 = vunpack.c.l.b16 %v2487
        %v3004 = vunpack.c.l.b16 %v2488
        %v3005 = vunpack.c.l.b16 %v2489
        %v3006 = vunpack.c.l.b16 %v2490
        %v3007 = vunpack.c.l.b16 %v2491
        %v3008 = vunpack.c.l.b16 %v2492
        %v3009 = vunpack.c.l.b16 %v2493
        %v3010 = vunpack.c.l.b16 %v2494
        %v3011 = vunpack.c.l.b16 %v2495
        %v3012 = vunpack.c.l.b16 %v2496
        %v3013 = vunpack.c.l.b16 %v2497
        %v3014 = vunpack.c.l.b16 %v2498
        %v3015 = vunpack.c.l.b16 %v2499
        %v3016 = vunpack.c.l.b16 %v2500
        %v3017 = vunpack.c.l.b16 %v2501
        %v3018 = vunpack.c.l.b16 %v2502
        %v3019 = vunpack.c.l.b16 %v2503
        %v3020 = vunpack.c.l.b16 %v2504
        %v3021 = vunpack.c.l.b16 %v2505
        %v3022 = vunpack.c.l.b16 %v2506
        %v3023 = vunpack.c.l.b16 %v2507
        %v3024 = vunpack.c.l.b16 %v2508
        %v3025 = vunpack.c.l.b16 %v2509
        %v3026 = vunpack.c.l.b16 %v2510
        %v3027 = vunpack.c.l.b16 %v2511
        %v3028 = vunpack.c.l.b16 %v2512
        %v3029 = vunpack.c.l.b16 %v2513
        %v3030 = vunpack.c.l.b16 %v2514
        %v3031 = vunpack.c.l.b16 %v2515
        %v3032 = vunpack.c.l.b16 %v2516
        %v3033 = vunpack.c.l.b16 %v2517
        %v3034 = vunpack.c.l.b16 %v2518
        %v3035 = vunpack.c.l.b16 %v2519
        %v3036 = vunpack.c.l.b16 %v2520
        %v3037 = vunpack.c.l.b16 %v2521
        %v3038 = vunpack.c.l.b16 %v2522
        %v3039 = vunpack.c.l.b16 %v2523
        %v3040 = vunpack.c.l.b16 %v2524
        %v3041 = vunpack.c.l.b16 %v2525
        %v3042 = vunpack.c.l.b16 %v2526
        %v3043 = vunpack.c.l.b16 %v2527
        %v3044 = vunpack.c.l.b16 %v2528
        %v3045 = vunpack.c.l.b16 %v2529
        %v3046 = vunpack.c.l.b16 %v2530
        %v3047 = vunpack.c.l.b16 %v2531
        %v3048 = vunpack.c.l.b16 %v2532
        %v3049 = vunpack.c.l.b16 %v2533
        %v3050 = vunpack.c.l.b16 %v2534
        %v3051 = vunpack.c.l.b16 %v2535
        %v3052 = vunpack.c.l.b16 %v2536
        %v3053 = vunpack.c.l.b16 %v2537
        %v3054 = vunpack.c.l.b16 %v2538
        %v3055 = vunpack.c.l.b16 %v2539
        %v3056 = vunpack.c.l.b16 %v2540
        %v3057 = vpack.c.b16 %v2802, %v2801
        %v3058 = vpack.c.b16 %v2804, %v2803
        %v3059 = vpack.c.b16 %v2806, %v2805
        %v3060 = vpack.c.b16 %v2808, %v2807
        %v3061 = vpack.c.b16 %v2810, %v2809
        %v3062 = vpack.c.b16 %v2812, %v2811
        %v3063 = vpack.c.b16 %v2814, %v2813
        %v3064 = vpack.c.b16 %v2816, %v2815
        %v3065 = vpack.c.b16 %v2818, %v2817
        %v3066 = vpack.c.b16 %v2820, %v2819
        %v3067 = vpack.c.b16 %v2822, %v2821
        %v3068 = vpack.c.b16 %v2824, %v2823
        %v3069 = vpack.c.b16 %v2826, %v2825
        %v3070 = vpack.c.b16 %v2828, %v2827
        %v3071 = vpack.c.b16 %v2830, %v2829
        %v3072 = vpack.c.b16 %v2832, %v2831
        %v3073 = vpack.c.b16 %v2834, %v2833
        %v3074 = vpack.c.b16 %v2836, %v2835
        %v3075 = vpack.c.b16 %v2838, %v2837
        %v3076 = vpack.c.b16 %v2840, %v2839
        %v3077 = vpack.c.b16 %v2842, %v2841
        %v3078 = vpack.c.b16 %v2844, %v2843
        %v3079 = vpack.c.b16 %v2846, %v2845
        %v3080 = vpack.c.b16 %v2848, %v2847
        %v3081 = vpack.c.b16 %v2850, %v2849
        %v3082 = vpack.c.b16 %v2852, %v2851
        %v3083 = vpack.c.b16 %v2854, %v2853
        %v3084 = vpack.c.b16 %v2856, %v2855
        %v3085 = vpack.c.b16 %v2858, %v2857
        %v3086 = vpack.c.b16 %v2860, %v2859
        %v3087 = vpack.c.b16 %v2862, %v2861
        %v3088 = vpack.c.b16 %v2864, %v2863
        %v3089 = vpack.c.b16 %v2866, %v2865
        %v3090 = vpack.c.b16 %v2868, %v2867
        %v3091 = vpack.c.b16 %v2870, %v2869
        %v3092 = vpack.c.b16 %v2872, %v2871
        %v3093 = vpack.c.b16 %v2874, %v2873
        %v3094 = vpack.c.b16 %v2876, %v2875
        %v3095 = vpack.c.b16 %v2878, %v2877
        %v3096 = vpack.c.b16 %v2880, %v2879
        %v3097 = vpack.c.b16 %v2882, %v2881
        %v3098 = vpack.c.b16 %v2884, %v2883
        %v3099 = vpack.c.b16 %v2886, %v2885
        %v3100 = vpack.c.b16 %v2888, %v2887
        %v3101 = vpack.c.b16 %v2890, %v2889
        %v3102 = vpack.c.b16 %v2892, %v2891
        %v3103 = vpack.c.b16 %v2894, %v2893
        %v3104 = vpack.c.b16 %v2896, %v2895
        %v3105 = vpack.c.b16 %v2898, %v2897
        %v3106 = vpack.c.b16 %v2900, %v2899
        %v3107 = vpack.c.b16 %v2902, %v2901
        %v3108 = vpack.c.b16 %v2904, %v2903
        %v3109 = vpack.c.b16 %v2906, %v2905
        %v3110 = vpack.c.b16 %v2908, %v2907
        %v3111 = vpack.c.b16 %v2910, %v2909
        %v3112 = vpack.c.b16 %v2912, %v2911
        %v3113 = vpack.c.b16 %v2914, %v2913
        %v3114 = vpack.c.b16 %v2916, %v2915
        %v3115 = vpack.c.b16 %v2918, %v2917
        %v3116 = vpack.c.b16 %v2920, %v2919
        %v3117 = vpack.c.b16 %v2922, %v2921
        %v3118 = vpack.c.b16 %v2924, %v2923
        %v3119 = vpack.c.b16 %v2926, %v2925
        %v3120 = vpack.c.b16 %v2928, %v2927
        %v3121 = vpack.c.b16 %v2930, %v2929
        %v3122 = vpack.c.b16 %v2932, %v2931
        %v3123 = vpack.c.b16 %v2934, %v2933
        %v3124 = vpack.c.b16 %v2936, %v2935
        %v3125 = vpack.c.b16 %v2938, %v2937
        %v3126 = vpack.c.b16 %v2940, %v2939
        %v3127 = vpack.c.b16 %v2942, %v2941
        %v3128 = vpack.c.b16 %v2944, %v2943
        %v3129 = vpack.c.b16 %v2946, %v2945
        %v3130 = vpack.c.b16 %v2948, %v2947
        %v3131 = vpack.c.b16 %v2950, %v2949
        %v3132 = vpack.c.b16 %v2952, %v2951
        %v3133 = vpack.c.b16 %v2954, %v2953
        %v3134 = vpack.c.b16 %v2956, %v2955
        %v3135 = vpack.c.b16 %v2958, %v2957
        %v3136 = vpack.c.b16 %v2960, %v2959
        %v3137 = vpack.c.b16 %v2962, %v2961
        %v3138 = vpack.c.b16 %v2964, %v2963
        %v3139 = vpack.c.b16 %v2966, %v2965
        %v3140 = vpack.c.b16 %v2968, %v2967
        %v3141 = vpack.c.b16 %v2970, %v2969
        %v3142 = vpack.c.b16 %v2972, %v2971
        %v3143 = vpack.c.b16 %v2974, %v2973
        %v3144 = vpack.c.b16 %v2976, %v2975
        %v3145 = vpack.c.b16 %v2978, %v2977
        %v3146 = vpack.c.b16 %v2980, %v2979
        %v3147 = vpack.c.b16 %v2982, %v2981
        %v3148 = vpack.c.b16 %v2984, %v2983
        %v3149 = vpack.c.b16 %v2986, %v2985
        %v3150 = vpack.c.b16 %v2988, %v2987
        %v3151 = vpack.c.b16 %v2990, %v2989
        %v3152 = vpack.c.b16 %v2992, %v2991
        %v3153 = vpack.c.b16 %v2994, %v2993
        %v3154 = vpack.c.b16 %v2996, %v2995
        %v3155 = vpack.c.b16 %v2998, %v2997
        %v3156 = vpack.c.b16 %v3000, %v2999
        %v3157 = vpack.c.b16 %v3002, %v3001
        %v3158 = vpack.c.b16 %v3004, %v3003
        %v3159 = vpack.c.b16 %v3006, %v3005
        %v3160 = vpack.c.b16 %v3008, %v3007
        %v3161 = vpack.c.b16 %v3010, %v3009
        %v3162 = vpack.c.b16 %v3012, %v3011
        %v3163 = vpack.c.b16 %v3014, %v3013
        %v3164 = vpack.c.b16 %v3016, %v3015
        %v3165 = vpack.c.b16 %v3018, %v3017
        %v3166 = vpack.c.b16 %v3020, %v3019
        %v3167 = vpack.c.b16 %v3022, %v3021
        %v3168 = vpack.c.b16 %v3024, %v3023
        %v3169 = vpack.c.b16 %v3026, %v3025
        %v3170 = vpack.c.b16 %v3028, %v3027
        %v3171 = vpack.c.b16 %v3030, %v3029
        %v3172 = vpack.c.b16 %v3032, %v3031
        %v3173 = vpack.c.b16 %v3034, %v3033
        %v3174 = vpack.c.b16 %v3036, %v3035
        %v3175 = vpack.c.b16 %v3038, %v3037
        %v3176 = vpack.c.b16 %v3040, %v3039
        %v3177 = vpack.c.b16 %v3042, %v3041
        %v3178 = vpack.c.b16 %v3044, %v3043
        %v3179 = vpack.c.b16 %v3046, %v3045
        %v3180 = vpack.c.b16 %v3048, %v3047
        %v3181 = vpack.c.b16 %v3050, %v3049
        %v3182 = vpack.c.b16 %v3052, %v3051
        %v3183 = vpack.c.b16 %v3054, %v3053
        %v3184 = vpack.c.b16 %v3056, %v3055
        %3313 = vmatpush.bf16.msra.mxu0 %v3064
        %3314 = vmatpush.bf16.msra.mxu0 %v3063
        %3315 = vmatpush.bf16.msra.mxu0 %v3062
        %3316 = vmatpush.bf16.msra.mxu0 %v3061
        %3317 = vmatpush.bf16.msra.mxu0 %v3060
        %3318 = vmatpush.bf16.msra.mxu0 %v3059
        %3319 = vmatpush.bf16.msra.mxu0 %v3058
        %3320 = vmatpush.bf16.msra.mxu0 %v3057
        %3321 = vmatmul.bf16.gmra.mxu0 %v2269
        %v3322 = vpop.f32.mrf.mxu0
        %v3323 = vadd.f32 %v2543, %v3322
        %v3324 = vpop.f32.mrf.mxu0
        %3325 = vdwg.mxu0
        %3326 = vmatpush.bf16.msra.mxu0 %v3072
        %3327 = vmatpush.bf16.msra.mxu0 %v3071
        %3328 = vmatpush.bf16.msra.mxu0 %v3070
        %3329 = vmatpush.bf16.msra.mxu0 %v3069
        %3330 = vmatpush.bf16.msra.mxu0 %v3068
        %3331 = vmatpush.bf16.msra.mxu0 %v3067
        %3332 = vmatpush.bf16.msra.mxu0 %v3066
        %3333 = vmatpush.bf16.msra.mxu0 %v3065
        %3334 = vmatmul.bf16.gmra.mxu0 %v2270
        %v3335 = vpop.f32.mrf.mxu0
        %v3336 = vadd.f32 %v3323, %v3335
        %v3337 = vpop.f32.mrf.mxu0
        %3338 = vdwg.mxu0
        %3339 = vmatpush.bf16.msra.mxu0 %v3080
        %3340 = vmatpush.bf16.msra.mxu0 %v3079
        %3341 = vmatpush.bf16.msra.mxu0 %v3078
        %3342 = vmatpush.bf16.msra.mxu0 %v3077
        %3343 = vmatpush.bf16.msra.mxu0 %v3076
        %3344 = vmatpush.bf16.msra.mxu0 %v3075
        %3345 = vmatpush.bf16.msra.mxu0 %v3074
        %3346 = vmatpush.bf16.msra.mxu0 %v3073
        %3347 = vmatmul.bf16.gmra.mxu0 %v2271
        %v3348 = vpop.f32.mrf.mxu0
        %v3349 = vadd.f32 %v3336, %v3348
        %v3350 = vpop.f32.mrf.mxu0
        %3351 = vdwg.mxu0
        %3352 = vmatpush.bf16.msra.mxu0 %v3088
        %3353 = vmatpush.bf16.msra.mxu0 %v3087
        %3354 = vmatpush.bf16.msra.mxu0 %v3086
        %3355 = vmatpush.bf16.msra.mxu0 %v3085
        %3356 = vmatpush.bf16.msra.mxu0 %v3084
        %3357 = vmatpush.bf16.msra.mxu0 %v3083
        %3358 = vmatpush.bf16.msra.mxu0 %v3082
        %3359 = vmatpush.bf16.msra.mxu0 %v3081
        %3360 = vmatmul.bf16.gmra.mxu0 %v2272
        %v3361 = vpop.f32.mrf.mxu0
        %v3362 = vadd.f32 %v3349, %v3361
        %v3363 = vpop.f32.mrf.mxu0
        %3364 = vdwg.mxu0
        %3365 = vmatpush.bf16.msra.mxu0 %v3096
        %3366 = vmatpush.bf16.msra.mxu0 %v3095
        %3367 = vmatpush.bf16.msra.mxu0 %v3094
        %3368 = vmatpush.bf16.msra.mxu0 %v3093
        %3369 = vmatpush.bf16.msra.mxu0 %v3092
        %3370 = vmatpush.bf16.msra.mxu0 %v3091
        %3371 = vmatpush.bf16.msra.mxu0 %v3090
        %3372 = vmatpush.bf16.msra.mxu0 %v3089
        %3373 = vmatmul.bf16.gmra.mxu0 %v2273
        %v3374 = vpop.f32.mrf.mxu0
        %v3375 = vadd.f32 %v3362, %v3374
        %v3376 = vpop.f32.mrf.mxu0
        %3377 = vdwg.mxu0
        %3378 = vmatpush.bf16.msra.mxu0 %v3104
        %3379 = vmatpush.bf16.msra.mxu0 %v3103
        %3380 = vmatpush.bf16.msra.mxu0 %v3102
        %3381 = vmatpush.bf16.msra.mxu0 %v3101
        %3382 = vmatpush.bf16.msra.mxu0 %v3100
        %3383 = vmatpush.bf16.msra.mxu0 %v3099
        %3384 = vmatpush.bf16.msra.mxu0 %v3098
        %3385 = vmatpush.bf16.msra.mxu0 %v3097
        %3386 = vmatmul.bf16.gmra.mxu0 %v2274
        %v3387 = vpop.f32.mrf.mxu0
        %v3388 = vadd.f32 %v3375, %v3387
        %v3389 = vpop.f32.mrf.mxu0
        %3390 = vdwg.mxu0
        %3391 = vmatpush.bf16.msra.mxu0 %v3112
        %3392 = vmatpush.bf16.msra.mxu0 %v3111
        %3393 = vmatpush.bf16.msra.mxu0 %v3110
        %3394 = vmatpush.bf16.msra.mxu0 %v3109
        %3395 = vmatpush.bf16.msra.mxu0 %v3108
        %3396 = vmatpush.bf16.msra.mxu0 %v3107
        %3397 = vmatpush.bf16.msra.mxu0 %v3106
        %3398 = vmatpush.bf16.msra.mxu0 %v3105
        %3399 = vmatmul.bf16.gmra.mxu0 %v2275
        %v3400 = vpop.f32.mrf.mxu0
        %v3401 = vadd.f32 %v3388, %v3400
        %v3402 = vpop.f32.mrf.mxu0
        %3403 = vdwg.mxu0
        %3404 = vmatpush.bf16.msra.mxu0 %v3120
        %3405 = vmatpush.bf16.msra.mxu0 %v3119
        %3406 = vmatpush.bf16.msra.mxu0 %v3118
        %3407 = vmatpush.bf16.msra.mxu0 %v3117
        %3408 = vmatpush.bf16.msra.mxu0 %v3116
        %3409 = vmatpush.bf16.msra.mxu0 %v3115
        %3410 = vmatpush.bf16.msra.mxu0 %v3114
        %3411 = vmatpush.bf16.msra.mxu0 %v3113
        %3412 = vmatmul.bf16.gmra.mxu0 %v2276
        %v3413 = vpop.f32.mrf.mxu0
        %v3414 = vadd.f32 %v3401, %v3413
        %v3415 = vpop.f32.mrf.mxu0
        %3416 = vdwg.mxu0
        %3417 = vmatpush.bf16.msra.mxu0 %v3128
        %3418 = vmatpush.bf16.msra.mxu0 %v3127
        %3419 = vmatpush.bf16.msra.mxu0 %v3126
        %3420 = vmatpush.bf16.msra.mxu0 %v3125
        %3421 = vmatpush.bf16.msra.mxu0 %v3124
        %3422 = vmatpush.bf16.msra.mxu0 %v3123
        %3423 = vmatpush.bf16.msra.mxu0 %v3122
        %3424 = vmatpush.bf16.msra.mxu0 %v3121
        %3425 = vmatmul.bf16.gmra.mxu0 %v2277
        %v3426 = vpop.f32.mrf.mxu0
        %v3427 = vadd.f32 %v3414, %v3426
        %v3428 = vpop.f32.mrf.mxu0
        %3429 = vdwg.mxu0
        %3430 = vmatpush.bf16.msra.mxu0 %v3136
        %3431 = vmatpush.bf16.msra.mxu0 %v3135
        %3432 = vmatpush.bf16.msra.mxu0 %v3134
        %3433 = vmatpush.bf16.msra.mxu0 %v3133
        %3434 = vmatpush.bf16.msra.mxu0 %v3132
        %3435 = vmatpush.bf16.msra.mxu0 %v3131
        %3436 = vmatpush.bf16.msra.mxu0 %v3130
        %3437 = vmatpush.bf16.msra.mxu0 %v3129
        %3438 = vmatmul.bf16.gmra.mxu0 %v2278
        %v3439 = vpop.f32.mrf.mxu0
        %v3440 = vadd.f32 %v3427, %v3439
        %v3441 = vpop.f32.mrf.mxu0
        %3442 = vdwg.mxu0
        %3443 = vmatpush.bf16.msra.mxu0 %v3144
        %3444 = vmatpush.bf16.msra.mxu0 %v3143
        %3445 = vmatpush.bf16.msra.mxu0 %v3142
        %3446 = vmatpush.bf16.msra.mxu0 %v3141
        %3447 = vmatpush.bf16.msra.mxu0 %v3140
        %3448 = vmatpush.bf16.msra.mxu0 %v3139
        %3449 = vmatpush.bf16.msra.mxu0 %v3138
        %3450 = vmatpush.bf16.msra.mxu0 %v3137
        %3451 = vmatmul.bf16.gmra.mxu0 %v2279
        %v3452 = vpop.f32.mrf.mxu0
        %v3453 = vadd.f32 %v3440, %v3452
        %v3454 = vpop.f32.mrf.mxu0
        %3455 = vdwg.mxu0
        %3456 = vmatpush.bf16.msra.mxu0 %v3152
        %3457 = vmatpush.bf16.msra.mxu0 %v3151
        %3458 = vmatpush.bf16.msra.mxu0 %v3150
        %3459 = vmatpush.bf16.msra.mxu0 %v3149
        %3460 = vmatpush.bf16.msra.mxu0 %v3148
        %3461 = vmatpush.bf16.msra.mxu0 %v3147
        %3462 = vmatpush.bf16.msra.mxu0 %v3146
        %3463 = vmatpush.bf16.msra.mxu0 %v3145
        %3464 = vmatmul.bf16.gmra.mxu0 %v2280
        %v3465 = vpop.f32.mrf.mxu0
        %v3466 = vadd.f32 %v3453, %v3465
        %v3467 = vpop.f32.mrf.mxu0
        %3468 = vdwg.mxu0
        %3469 = vmatpush.bf16.msra.mxu0 %v3160
        %3470 = vmatpush.bf16.msra.mxu0 %v3159
        %3471 = vmatpush.bf16.msra.mxu0 %v3158
        %3472 = vmatpush.bf16.msra.mxu0 %v3157
        %3473 = vmatpush.bf16.msra.mxu0 %v3156
        %3474 = vmatpush.bf16.msra.mxu0 %v3155
        %3475 = vmatpush.bf16.msra.mxu0 %v3154
        %3476 = vmatpush.bf16.msra.mxu0 %v3153
        %3477 = vmatmul.bf16.gmra.mxu0 %v2281
        %v3478 = vpop.f32.mrf.mxu0
        %v3479 = vadd.f32 %v3466, %v3478
        %v3480 = vpop.f32.mrf.mxu0
        %3481 = vdwg.mxu0
        %3482 = vmatpush.bf16.msra.mxu0 %v3168
        %3483 = vmatpush.bf16.msra.mxu0 %v3167
        %3484 = vmatpush.bf16.msra.mxu0 %v3166
        %3485 = vmatpush.bf16.msra.mxu0 %v3165
        %3486 = vmatpush.bf16.msra.mxu0 %v3164
        %3487 = vmatpush.bf16.msra.mxu0 %v3163
        %3488 = vmatpush.bf16.msra.mxu0 %v3162
        %3489 = vmatpush.bf16.msra.mxu0 %v3161
        %3490 = vmatmul.bf16.gmra.mxu0 %v2282
        %v3491 = vpop.f32.mrf.mxu0
        %v3492 = vadd.f32 %v3479, %v3491
        %v3493 = vpop.f32.mrf.mxu0
        %3494 = vdwg.mxu0
        %3495 = vmatpush.bf16.msra.mxu0 %v3176
        %3496 = vmatpush.bf16.msra.mxu0 %v3175
        %3497 = vmatpush.bf16.msra.mxu0 %v3174
        %3498 = vmatpush.bf16.msra.mxu0 %v3173
        %3499 = vmatpush.bf16.msra.mxu0 %v3172
        %3500 = vmatpush.bf16.msra.mxu0 %v3171
        %3501 = vmatpush.bf16.msra.mxu0 %v3170
        %3502 = vmatpush.bf16.msra.mxu0 %v3169
        %3503 = vmatmul.bf16.gmra.mxu0 %v2283
        %v3504 = vpop.f32.mrf.mxu0
        %v3505 = vadd.f32 %v3492, %v3504
        %v3506 = vpop.f32.mrf.mxu0
        %3507 = vdwg.mxu0
        %3508 = vmatpush.bf16.msra.mxu0 %v3184
        %3509 = vmatpush.bf16.msra.mxu0 %v3183
        %3510 = vmatpush.bf16.msra.mxu0 %v3182
        %3511 = vmatpush.bf16.msra.mxu0 %v3181
        %3512 = vmatpush.bf16.msra.mxu0 %v3180
        %3513 = vmatpush.bf16.msra.mxu0 %v3179
        %3514 = vmatpush.bf16.msra.mxu0 %v3178
        %3515 = vmatpush.bf16.msra.mxu0 %v3177
        %3516 = vmatmul.bf16.gmra.mxu0 %v2284
        %v3517 = vpop.f32.mrf.mxu0
        %v3518 = vadd.f32 %v3505, %v3517
        %v3519 = vpop.f32.mrf.mxu0
        %3520 = vdwg.mxu0
        %v3521 = vadd.f32 %v1620, %v3518
        %v3522 = vld [vmem:[%s35] sm:$0x1]
        %v3523 = vld [vmem:[%s37] sm:$0x1]
        %v3524 = vsel %vm1165, %v3521, 0.0
        %3525 = vadd.xlane.f32.xlu0 %v3524
        %v3526 = vpop.xlane.xlu0 %3525
        %v3527 = vmul.f32 %v3526, %v1175
        %v3528 = vsub.f32 %v3521, %v3527
        %v3529 = vmul.f32 %v3528, %v3528
        %v3530 = vsel %vm1165, %v3529, 0.0
        %3531 = vadd.xlane.f32.xlu0 %v3530
        %v3532 = vpop.xlane.xlu0 %3531
        %v3533 = vmul.f32 %v3532, %v1175
        %v3534 = vadd.f32 %v3533, 1e-05
        %v3535 = vrsqrt.pop %v3534
        %v3536 = vmul.f32 %v3535, %v3534
        %v3537 = vmul.f32 %v3536, %v3535
        %v3538 = vmul.f32 0.5, %v3537
        %v3539 = vsub.f32 1.5, %v3538
        %v3540 = vmul.f32 %v3535, %v3539
        %vm3541 = vweird.f32 %v3534
        %vm3542 = vweird.f32 %v3535
        %vm3543 = vmor %vm3541, %vm3542
        %v3544 = vsel %vm3543, %v3535, %v3540
        %v3545 = vmul.f32 %v3528, %v3544
        %v3547 = vperm.slane %v3522, 0
        %v3549 = vmul.f32 %v3545, %v3547
        %v3551 = vperm.slane %v3523, 0
        %v3553 = vadd.f32 %v3549, %v3551
        %v3554 = vpack.c.bf16 %v3553, %v3553
        %v3555 = vld [vmem:[%s39] sm:$0xff]
        %v3556 = vld [vmem:[%s39 + $0x8] sm:$0xff]
        %v3557 = vld [vmem:[%s39 + $0x10] sm:$0xff]
        %v3558 = vld [vmem:[%s39 + $0x18] sm:$0xff]
        %v3559 = vld [vmem:[%s39 + $0x20] sm:$0xff]
        %v3560 = vld [vmem:[%s39 + $0x28] sm:$0xff]
        %v3561 = vld [vmem:[%s39 + $0x30] sm:$0xff]
        %v3562 = vld [vmem:[%s39 + $0x38] sm:$0xff]
        %v3563 = vld [vmem:[%s41] sm:$0x3]
        %v3565 = vperm.slane %v3563, 0
        %v3566 = vperm.slane %v3563, 1
        %v3577 = vunpack.c.l.b16 %v3555
        %v3578 = vunpack.c.h.b16 %v3555
        %v3579 = vunpack.c.l.b16 %v3556
        %v3580 = vunpack.c.h.b16 %v3556
        %v3581 = vunpack.c.l.b16 %v3557
        %v3582 = vunpack.c.h.b16 %v3557
        %v3583 = vunpack.c.l.b16 %v3558
        %v3584 = vunpack.c.h.b16 %v3558
        %v3585 = vunpack.c.l.b16 %v3559
        %v3586 = vunpack.c.h.b16 %v3559
        %v3587 = vunpack.c.l.b16 %v3560
        %v3588 = vunpack.c.h.b16 %v3560
        %v3589 = vunpack.c.l.b16 %v3561
        %v3590 = vunpack.c.h.b16 %v3561
        %v3591 = vunpack.c.l.b16 %v3562
        %v3592 = vunpack.c.h.b16 %v3562
        %v3593 = vpack.c.b16 %v3579, %v3577
        %v3594 = vpack.c.b16 %v3580, %v3578
        %v3595 = vpack.c.b16 %v3583, %v3581
        %v3596 = vpack.c.b16 %v3584, %v3582
        %v3597 = vpack.c.b16 %v3587, %v3585
        %v3598 = vpack.c.b16 %v3588, %v3586
        %v3599 = vpack.c.b16 %v3591, %v3589
        %v3600 = vpack.c.b16 %v3592, %v3590
        %v3610 = vsel %vm1165, %v3554, 0
        %3612 = vmatpush.bf16.msra.mxu0 0
        %3613 = vmatpush.bf16.msra.mxu0 0
        %3614 = vmatpush.bf16.msra.mxu0 0
        %3615 = vmatpush.bf16.msra.mxu0 0
        %3616 = vmatpush.bf16.msra.mxu0 %v3599
        %3617 = vmatpush.bf16.msra.mxu0 %v3597
        %3618 = vmatpush.bf16.msra.mxu0 %v3595
        %3619 = vmatpush.bf16.msra.mxu0 %v3593
        %3620 = vmatmul.bf16.gmra.mxu0 %v3610
        %v3621 = vpop.f32.mrf.mxu0
        %v3622 = vadd.f32 %v3565, %v3621
        %v3623 = vpop.f32.mrf.mxu0
        %3624 = vdwg.mxu0
        %3625 = vmatpush.bf16.msra.mxu0 0
        %3626 = vmatpush.bf16.msra.mxu0 0
        %3627 = vmatpush.bf16.msra.mxu0 0
        %3628 = vmatpush.bf16.msra.mxu0 0
        %3629 = vmatpush.bf16.msra.mxu0 %v3600
        %3630 = vmatpush.bf16.msra.mxu0 %v3598
        %3631 = vmatpush.bf16.msra.mxu0 %v3596
        %3632 = vmatpush.bf16.msra.mxu0 %v3594
        %3633 = vmatmul.bf16.gmra.mxu0 %v3610
        %v3634 = vpop.f32.mrf.mxu0
        %v3635 = vadd.f32 %v3566, %v3634
        %v3636 = vpop.f32.mrf.mxu0
        %3637 = vdwg.mxu0
        %v3638 = vpack.c.bf16 %v3622, %v3622
        %v3640 = vshrl.u32 %v3638, 16
        %v3642 = vrot.slane %v3640, 3
        %3644 = vrot.lane.b32.xlu0 %v3638, 64
        %v3645 = vpop.permute.xlu0 %3644
        %v3647 = vsel %vm1296, %v3642, 0
        %v3650 = vsel %vm1296, %v3645, 0
        %3652 = vmatpush.bf16.xpose.msra.mxu0 0
        %3653 = vmatpush.bf16.xpose.msra.mxu0 0
        %3654 = vmatpush.bf16.xpose.msra.mxu0 0
        %3655 = vmatpush.bf16.xpose.msra.mxu0 0
        %3656 = vmatpush.bf16.xpose.msra.mxu0 0
        %3657 = vmatpush.bf16.xpose.msra.mxu0 0
        %3658 = vmatpush.bf16.xpose.msra.mxu0 0
        %3659 = vmatpush.bf16.xpose.msra.mxu0 %v3650
        %3660 = vmatmul.bf16.gmra.mxu0 %v3647
        %v3661 = vpop.f32.mrf.mxu0
        %v3662 = vadd.f32 %v1030, %v3661
        %v3663 = vpop.f32.mrf.mxu0
        %3664 = vdwg.mxu0
        %vm3665 = vcmask 57344
        %v3666 = vsel %vm3665, %v3662, -inf
        %3667 = vmax.xlane.f32.xlu0 %v3666
        %v3668 = vpop.xlane.xlu0 %3667
        %v3669 = vsub.f32 %v3662, %v3668
        %v3670 = vmul.f32 %v3669, 1.442695
        %v3671 = vpow.pop %v3670
        %v3672 = vsel %vm3665, %v3671, 0.0
        %3673 = vadd.xlane.f32.xlu0 %v3672
        %v3674 = vpop.xlane.xlu0 %3673
        %v3675 = vrcp.pop %v3674
        %v3676 = vmul.f32 %v3671, %v3675
        %v3677 = vpack.c.bf16 %v3676, %v3676
        %v3678 = vpack.c.bf16 %v3635, %v3635
        %v3680 = vsel %vm1316, %v3677, 0
        %v3683 = vsel %vm1133, %v3678, 0
        %3685 = vmatpush.bf16.msra.mxu0 0
        %3686 = vmatpush.bf16.msra.mxu0 0
        %3687 = vmatpush.bf16.msra.mxu0 0
        %3688 = vmatpush.bf16.msra.mxu0 0
        %3689 = vmatpush.bf16.msra.mxu0 0
        %3690 = vmatpush.bf16.msra.mxu0 0
        %3691 = vmatpush.bf16.msra.mxu0 0
        %3692 = vmatpush.bf16.msra.mxu0 %v3683
        %3693 = vmatmul.bf16.gmra.mxu0 %v3680
        %v3694 = vpop.f32.mrf.mxu0
        %v3695 = vadd.f32 0.0, %v3694
        %v3696 = vpop.f32.mrf.mxu0
        %3697 = vdwg.mxu0
        %3698 = vrot.lane.b32.xlu0 %v3642, 112
        %v3699 = vpop.permute.xlu0 %3698
        %3700 = vrot.lane.b32.xlu0 %v3638, 48
        %v3701 = vpop.permute.xlu0 %3700
        %v3703 = vsel %vm1296, %v3699, 0
        %v3706 = vsel %vm1296, %v3701, 0
        %3708 = vmatpush.bf16.xpose.msra.mxu0 0
        %3709 = vmatpush.bf16.xpose.msra.mxu0 0
        %3710 = vmatpush.bf16.xpose.msra.mxu0 0
        %3711 = vmatpush.bf16.xpose.msra.mxu0 0
        %3712 = vmatpush.bf16.xpose.msra.mxu0 0
        %3713 = vmatpush.bf16.xpose.msra.mxu0 0
        %3714 = vmatpush.bf16.xpose.msra.mxu0 0
        %3715 = vmatpush.bf16.xpose.msra.mxu0 %v3706
        %3716 = vmatmul.bf16.gmra.mxu0 %v3703
        %v3717 = vpop.f32.mrf.mxu0
        %v3718 = vadd.f32 %v1030, %v3717
        %v3719 = vpop.f32.mrf.mxu0
        %3720 = vdwg.mxu0
        %v3721 = vsel %vm3665, %v3718, -inf
        %3722 = vmax.xlane.f32.xlu0 %v3721
        %v3723 = vpop.xlane.xlu0 %3722
        %v3724 = vsub.f32 %v3718, %v3723
        %v3725 = vmul.f32 %v3724, 1.442695
        %v3726 = vpow.pop %v3725
        %v3727 = vsel %vm3665, %v3726, 0.0
        %3728 = vadd.xlane.f32.xlu0 %v3727
        %v3729 = vpop.xlane.xlu0 %3728
        %v3730 = vrcp.pop %v3729
        %v3731 = vmul.f32 %v3726, %v3730
        %v3732 = vpack.c.bf16 %v3731, %v3731
        %3734 = vrot.lane.b32.xlu0 %v3678, 112
        %v3735 = vpop.permute.xlu0 %3734
        %v3737 = vsel %vm1316, %v3732, 0
        %v3740 = vsel %vm1133, %v3735, 0
        %3742 = vmatpush.bf16.msra.mxu0 0
        %3743 = vmatpush.bf16.msra.mxu0 0
        %3744 = vmatpush.bf16.msra.mxu0 0
        %3745 = vmatpush.bf16.msra.mxu0 0
        %3746 = vmatpush.bf16.msra.mxu0 0
        %3747 = vmatpush.bf16.msra.mxu0 0
        %3748 = vmatpush.bf16.msra.mxu0 0
        %3749 = vmatpush.bf16.msra.mxu0 %v3740
        %3750 = vmatmul.bf16.gmra.mxu0 %v3737
        %v3751 = vpop.f32.mrf.mxu0
        %v3752 = vadd.f32 0.0, %v3751
        %v3753 = vpop.f32.mrf.mxu0
        %3754 = vdwg.mxu0
        %3755 = vrot.lane.b32.xlu0 %v3642, 96
        %v3756 = vpop.permute.xlu0 %3755
        %3757 = vrot.lane.b32.xlu0 %v3638, 32
        %v3758 = vpop.permute.xlu0 %3757
        %v3760 = vsel %vm1296, %v3756, 0
        %v3763 = vsel %vm1296, %v3758, 0
        %3765 = vmatpush.bf16.xpose.msra.mxu0 0
        %3766 = vmatpush.bf16.xpose.msra.mxu0 0
        %3767 = vmatpush.bf16.xpose.msra.mxu0 0
        %3768 = vmatpush.bf16.xpose.msra.mxu0 0
        %3769 = vmatpush.bf16.xpose.msra.mxu0 0
        %3770 = vmatpush.bf16.xpose.msra.mxu0 0
        %3771 = vmatpush.bf16.xpose.msra.mxu0 0
        %3772 = vmatpush.bf16.xpose.msra.mxu0 %v3763
        %3773 = vmatmul.bf16.gmra.mxu0 %v3760
        %v3774 = vpop.f32.mrf.mxu0
        %v3775 = vadd.f32 %v1030, %v3774
        %v3776 = vpop.f32.mrf.mxu0
        %3777 = vdwg.mxu0
        %v3778 = vsel %vm3665, %v3775, -inf
        %3779 = vmax.xlane.f32.xlu0 %v3778
        %v3780 = vpop.xlane.xlu0 %3779
        %v3781 = vsub.f32 %v3775, %v3780
        %v3782 = vmul.f32 %v3781, 1.442695
        %v3783 = vpow.pop %v3782
        %v3784 = vsel %vm3665, %v3783, 0.0
        %3785 = vadd.xlane.f32.xlu0 %v3784
        %v3786 = vpop.xlane.xlu0 %3785
        %v3787 = vrcp.pop %v3786
        %v3788 = vmul.f32 %v3783, %v3787
        %v3789 = vpack.c.bf16 %v3788, %v3788
        %3790 = vrot.lane.b32.xlu0 %v3678, 96
        %v3791 = vpop.permute.xlu0 %3790
        %v3793 = vsel %vm1316, %v3789, 0
        %v3796 = vsel %vm1133, %v3791, 0
        %3798 = vmatpush.bf16.msra.mxu0 0
        %3799 = vmatpush.bf16.msra.mxu0 0
        %3800 = vmatpush.bf16.msra.mxu0 0
        %3801 = vmatpush.bf16.msra.mxu0 0
        %3802 = vmatpush.bf16.msra.mxu0 0
        %3803 = vmatpush.bf16.msra.mxu0 0
        %3804 = vmatpush.bf16.msra.mxu0 0
        %3805 = vmatpush.bf16.msra.mxu0 %v3796
        %3806 = vmatmul.bf16.gmra.mxu0 %v3793
        %v3807 = vpop.f32.mrf.mxu0
        %v3808 = vadd.f32 0.0, %v3807
        %v3809 = vpop.f32.mrf.mxu0
        %3810 = vdwg.mxu0
        %3811 = vrot.lane.b32.xlu0 %v3642, 80
        %v3812 = vpop.permute.xlu0 %3811
        %3813 = vrot.lane.b32.xlu0 %v3638, 16
        %v3814 = vpop.permute.xlu0 %3813
        %v3816 = vsel %vm1296, %v3812, 0
        %v3819 = vsel %vm1296, %v3814, 0
        %3821 = vmatpush.bf16.xpose.msra.mxu0 0
        %3822 = vmatpush.bf16.xpose.msra.mxu0 0
        %3823 = vmatpush.bf16.xpose.msra.mxu0 0
        %3824 = vmatpush.bf16.xpose.msra.mxu0 0
        %3825 = vmatpush.bf16.xpose.msra.mxu0 0
        %3826 = vmatpush.bf16.xpose.msra.mxu0 0
        %3827 = vmatpush.bf16.xpose.msra.mxu0 0
        %3828 = vmatpush.bf16.xpose.msra.mxu0 %v3819
        %3829 = vmatmul.bf16.gmra.mxu0 %v3816
        %v3830 = vpop.f32.mrf.mxu0
        %v3831 = vadd.f32 %v1030, %v3830
        %v3832 = vpop.f32.mrf.mxu0
        %3833 = vdwg.mxu0
        %v3834 = vsel %vm3665, %v3831, -inf
        %3835 = vmax.xlane.f32.xlu0 %v3834
        %v3836 = vpop.xlane.xlu0 %3835
        %v3837 = vsub.f32 %v3831, %v3836
        %v3838 = vmul.f32 %v3837, 1.442695
        %v3839 = vpow.pop %v3838
        %v3840 = vsel %vm3665, %v3839, 0.0
        %3841 = vadd.xlane.f32.xlu0 %v3840
        %v3842 = vpop.xlane.xlu0 %3841
        %v3843 = vrcp.pop %v3842
        %v3844 = vmul.f32 %v3839, %v3843
        %v3845 = vpack.c.bf16 %v3844, %v3844
        %3846 = vrot.lane.b32.xlu0 %v3678, 80
        %v3847 = vpop.permute.xlu0 %3846
        %v3849 = vsel %vm1316, %v3845, 0
        %v3852 = vsel %vm1133, %v3847, 0
        %3854 = vmatpush.bf16.msra.mxu0 0
        %3855 = vmatpush.bf16.msra.mxu0 0
        %3856 = vmatpush.bf16.msra.mxu0 0
        %3857 = vmatpush.bf16.msra.mxu0 0
        %3858 = vmatpush.bf16.msra.mxu0 0
        %3859 = vmatpush.bf16.msra.mxu0 0
        %3860 = vmatpush.bf16.msra.mxu0 0
        %3861 = vmatpush.bf16.msra.mxu0 %v3852
        %3862 = vmatmul.bf16.gmra.mxu0 %v3849
        %v3863 = vpop.f32.mrf.mxu0
        %v3864 = vadd.f32 0.0, %v3863
        %v3865 = vpop.f32.mrf.mxu0
        %3866 = vdwg.mxu0
        %3868 = vrot.lane.b32.xlu0 %v3752, 16
        %v3869 = vpop.permute.xlu0 %3868
        %3872 = vrot.lane.b32.xlu0 %v3808, 32
        %v3873 = vpop.permute.xlu0 %3872
        %3876 = vrot.lane.b32.xlu0 %v3864, 48
        %v3877 = vpop.permute.xlu0 %3876
        %v3879 = vsel %vm1296, %v3695, %v3869
        %v3880 = vsel %vm1531, %v3879, %v3873
        %v3881 = vsel %vm1533, %v3880, %v3877
        %v3882 = vpack.c.bf16 %v3881, %v3881
        %v3883 = vld [vmem:[%s43] sm:$0xf]
        %v3884 = vld [vmem:[%s43 + $0x4] sm:$0xf]
        %v3885 = vld [vmem:[%s43 + $0x8] sm:$0xf]
        %v3886 = vld [vmem:[%s43 + $0xc] sm:$0xf]
        %v3887 = vld [vmem:[%s43 + $0x10] sm:$0xf]
        %v3888 = vld [vmem:[%s43 + $0x14] sm:$0xf]
        %v3889 = vld [vmem:[%s43 + $0x18] sm:$0xf]
        %v3890 = vld [vmem:[%s43 + $0x1c] sm:$0xf]
        %v3891 = vld [vmem:[%s45] sm:$0x1]
        %v3900 = vunpack.c.l.b16 %v3883
        %v3901 = vunpack.c.l.b16 %v3884
        %v3902 = vunpack.c.l.b16 %v3885
        %v3903 = vunpack.c.l.b16 %v3886
        %v3904 = vunpack.c.l.b16 %v3887
        %v3905 = vunpack.c.l.b16 %v3888
        %v3906 = vunpack.c.l.b16 %v3889
        %v3907 = vunpack.c.l.b16 %v3890
        %v3908 = vpack.c.b16 %v3901, %v3900
        %v3909 = vpack.c.b16 %v3903, %v3902
        %v3910 = vpack.c.b16 %v3905, %v3904
        %v3911 = vpack.c.b16 %v3907, %v3906
        %v3917 = vsel %vm1165, %v3882, 0
        %3919 = vmatpush.bf16.msra.mxu0 0
        %3920 = vmatpush.bf16.msra.mxu0 0
        %3921 = vmatpush.bf16.msra.mxu0 0
        %3922 = vmatpush.bf16.msra.mxu0 0
        %3923 = vmatpush.bf16.msra.mxu0 %v3911
        %3924 = vmatpush.bf16.msra.mxu0 %v3910
        %3925 = vmatpush.bf16.msra.mxu0 %v3909
        %3926 = vmatpush.bf16.msra.mxu0 %v3908
        %3927 = vmatmul.bf16.gmra.mxu0 %v3917
        %v3928 = vpop.f32.mrf.mxu0
        %v3929 = vadd.f32 %v3891, %v3928
        %v3930 = vpop.f32.mrf.mxu0
        %3931 = vdwg.mxu0
        %v3933 = vrot.slane %v3929, 1
        %v3935 = vadd.f32 %v3553, %v3933
        %v3936 = vld [vmem:[%s47] sm:$0x1]
        %v3937 = vld [vmem:[%s49] sm:$0x1]
        %vm3938 = vcmask 523271
        %v3939 = vsel %vm3938, %v3935, 0.0
        %3940 = vadd.xlane.f32.xlu0 %v3939
        %v3941 = vpop.xlane.xlu0 %3940
        %v3942 = vmul.f32 %v3941, %v1175
        %v3943 = vsub.f32 %v3935, %v3942
        %v3944 = vmul.f32 %v3943, %v3943
        %v3945 = vsel %vm3938, %v3944, 0.0
        %3946 = vadd.xlane.f32.xlu0 %v3945
        %v3947 = vpop.xlane.xlu0 %3946
        %v3948 = vmul.f32 %v3947, %v1175
        %v3949 = vadd.f32 %v3948, 1e-05
        %v3950 = vrsqrt.pop %v3949
        %v3951 = vmul.f32 %v3950, %v3949
        %v3952 = vmul.f32 %v3951, %v3950
        %v3953 = vmul.f32 0.5, %v3952
        %v3954 = vsub.f32 1.5, %v3953
        %v3955 = vmul.f32 %v3950, %v3954
        %vm3956 = vweird.f32 %v3949
        %vm3957 = vweird.f32 %v3950
        %vm3958 = vmor %vm3956, %vm3957
        %v3959 = vsel %vm3958, %v3950, %v3955
        %v3960 = vmul.f32 %v3943, %v3959
        %v3962 = vperm.slane %v3936, 0
        %v3964 = vmul.f32 %v3960, %v3962
        %v3966 = vperm.slane %v3937, 0
        %v3968 = vadd.f32 %v3964, %v3966
        %v3969 = vpack.c.bf16 %v3968, %v3968
        %v3970 = vld [vmem:[%s51] sm:$0xff]
        %v3971 = vld [vmem:[%s51 + $0x8] sm:$0xff]
        %v3972 = vld [vmem:[%s51 + $0x10] sm:$0xff]
        %v3973 = vld [vmem:[%s51 + $0x18] sm:$0xff]
        %v3974 = vld [vmem:[%s51 + $0x20] sm:$0xff]
        %v3975 = vld [vmem:[%s51 + $0x28] sm:$0xff]
        %v3976 = vld [vmem:[%s51 + $0x30] sm:$0xff]
        %v3977 = vld [vmem:[%s51 + $0x38] sm:$0xff]
        %v3978 = vld [vmem:[%s51 + $0x40] sm:$0xff]
        %v3979 = vld [vmem:[%s51 + $0x48] sm:$0xff]
        %v3980 = vld [vmem:[%s51 + $0x50] sm:$0xff]
        %v3981 = vld [vmem:[%s51 + $0x58] sm:$0xff]
        %v3982 = vld [vmem:[%s51 + $0x60] sm:$0xff]
        %v3983 = vld [vmem:[%s51 + $0x68] sm:$0xff]
        %v3984 = vld [vmem:[%s51 + $0x70] sm:$0xff]
        %v3985 = vld [vmem:[%s51 + $0x78] sm:$0xff]
        %v3986 = vld [vmem:[%s51 + $0x80] sm:$0xff]
        %v3987 = vld [vmem:[%s51 + $0x88] sm:$0xff]
        %v3988 = vld [vmem:[%s51 + $0x90] sm:$0xff]
        %v3989 = vld [vmem:[%s51 + $0x98] sm:$0xff]
        %v3990 = vld [vmem:[%s51 + $0xa0] sm:$0xff]
        %v3991 = vld [vmem:[%s51 + $0xa8] sm:$0xff]
        %v3992 = vld [vmem:[%s51 + $0xb0] sm:$0xff]
        %v3993 = vld [vmem:[%s51 + $0xb8] sm:$0xff]
        %v3994 = vld [vmem:[%s51 + $0xc0] sm:$0xff]
        %v3995 = vld [vmem:[%s51 + $0xc8] sm:$0xff]
        %v3996 = vld [vmem:[%s51 + $0xd0] sm:$0xff]
        %v3997 = vld [vmem:[%s51 + $0xd8] sm:$0xff]
        %v3998 = vld [vmem:[%s51 + $0xe0] sm:$0xff]
        %v3999 = vld [vmem:[%s51 + $0xe8] sm:$0xff]
        %v4000 = vld [vmem:[%s51 + $0xf0] sm:$0xff]
        %v4001 = vld [vmem:[%s51 + $0xf8] sm:$0xff]
        %v4002 = vld [vmem:[%s51 + $0x100] sm:$0xff]
        %v4003 = vld [vmem:[%s51 + $0x108] sm:$0xff]
        %v4004 = vld [vmem:[%s51 + $0x110] sm:$0xff]
        %v4005 = vld [vmem:[%s51 + $0x118] sm:$0xff]
        %v4006 = vld [vmem:[%s51 + $0x120] sm:$0xff]
        %v4007 = vld [vmem:[%s51 + $0x128] sm:$0xff]
        %v4008 = vld [vmem:[%s51 + $0x130] sm:$0xff]
        %v4009 = vld [vmem:[%s51 + $0x138] sm:$0xff]
        %v4010 = vld [vmem:[%s51 + $0x140] sm:$0xff]
        %v4011 = vld [vmem:[%s51 + $0x148] sm:$0xff]
        %v4012 = vld [vmem:[%s51 + $0x150] sm:$0xff]
        %v4013 = vld [vmem:[%s51 + $0x158] sm:$0xff]
        %v4014 = vld [vmem:[%s51 + $0x160] sm:$0xff]
        %v4015 = vld [vmem:[%s51 + $0x168] sm:$0xff]
        %v4016 = vld [vmem:[%s51 + $0x170] sm:$0xff]
        %v4017 = vld [vmem:[%s51 + $0x178] sm:$0xff]
        %v4018 = vld [vmem:[%s51 + $0x180] sm:$0xff]
        %v4019 = vld [vmem:[%s51 + $0x188] sm:$0xff]
        %v4020 = vld [vmem:[%s51 + $0x190] sm:$0xff]
        %v4021 = vld [vmem:[%s51 + $0x198] sm:$0xff]
        %v4022 = vld [vmem:[%s51 + $0x1a0] sm:$0xff]
        %v4023 = vld [vmem:[%s51 + $0x1a8] sm:$0xff]
        %v4024 = vld [vmem:[%s51 + $0x1b0] sm:$0xff]
        %v4025 = vld [vmem:[%s51 + $0x1b8] sm:$0xff]
        %v4026 = vld [vmem:[%s51 + $0x1c0] sm:$0xff]
        %v4027 = vld [vmem:[%s51 + $0x1c8] sm:$0xff]
        %v4028 = vld [vmem:[%s51 + $0x1d0] sm:$0xff]
        %v4029 = vld [vmem:[%s51 + $0x1d8] sm:$0xff]
        %v4030 = vld [vmem:[%s51 + $0x1e0] sm:$0xff]
        %v4031 = vld [vmem:[%s51 + $0x1e8] sm:$0xff]
        %v4032 = vld [vmem:[%s51 + $0x1f0] sm:$0xff]
        %v4033 = vld [vmem:[%s51 + $0x1f8] sm:$0xff]
        %v4034 = vld [vmem:[%s53] sm:$0xff]
        %v4035 = vld [vmem:[%s53 + $0x8] sm:$0xff]
        %v4037 = vshrl.u32 %v3969, 16
        %v4039 = vrot.slane %v4037, 3
        %v4104 = vunpack.c.l.b16 %v3970
        %v4105 = vunpack.c.h.b16 %v3970
        %v4106 = vunpack.c.l.b16 %v3971
        %v4107 = vunpack.c.h.b16 %v3971
        %v4108 = vunpack.c.l.b16 %v3972
        %v4109 = vunpack.c.h.b16 %v3972
        %v4110 = vunpack.c.l.b16 %v3973
        %v4111 = vunpack.c.h.b16 %v3973
        %v4112 = vunpack.c.l.b16 %v3974
        %v4113 = vunpack.c.h.b16 %v3974
        %v4114 = vunpack.c.l.b16 %v3975
        %v4115 = vunpack.c.h.b16 %v3975
        %v4116 = vunpack.c.l.b16 %v3976
        %v4117 = vunpack.c.h.b16 %v3976
        %v4118 = vunpack.c.l.b16 %v3977
        %v4119 = vunpack.c.h.b16 %v3977
        %v4120 = vunpack.c.l.b16 %v3978
        %v4121 = vunpack.c.h.b16 %v3978
        %v4122 = vunpack.c.l.b16 %v3979
        %v4123 = vunpack.c.h.b16 %v3979
        %v4124 = vunpack.c.l.b16 %v3980
        %v4125 = vunpack.c.h.b16 %v3980
        %v4126 = vunpack.c.l.b16 %v3981
        %v4127 = vunpack.c.h.b16 %v3981
        %v4128 = vunpack.c.l.b16 %v3982
        %v4129 = vunpack.c.h.b16 %v3982
        %v4130 = vunpack.c.l.b16 %v3983
        %v4131 = vunpack.c.h.b16 %v3983
        %v4132 = vunpack.c.l.b16 %v3984
        %v4133 = vunpack.c.h.b16 %v3984
        %v4134 = vunpack.c.l.b16 %v3985
        %v4135 = vunpack.c.h.b16 %v3985
        %v4136 = vunpack.c.l.b16 %v3986
        %v4137 = vunpack.c.h.b16 %v3986
        %v4138 = vunpack.c.l.b16 %v3987
        %v4139 = vunpack.c.h.b16 %v3987
        %v4140 = vunpack.c.l.b16 %v3988
        %v4141 = vunpack.c.h.b16 %v3988
        %v4142 = vunpack.c.l.b16 %v3989
        %v4143 = vunpack.c.h.b16 %v3989
        %v4144 = vunpack.c.l.b16 %v3990
        %v4145 = vunpack.c.h.b16 %v3990
        %v4146 = vunpack.c.l.b16 %v3991
        %v4147 = vunpack.c.h.b16 %v3991
        %v4148 = vunpack.c.l.b16 %v3992
        %v4149 = vunpack.c.h.b16 %v3992
        %v4150 = vunpack.c.l.b16 %v3993
        %v4151 = vunpack.c.h.b16 %v3993
        %v4152 = vunpack.c.l.b16 %v3994
        %v4153 = vunpack.c.h.b16 %v3994
        %v4154 = vunpack.c.l.b16 %v3995
        %v4155 = vunpack.c.h.b16 %v3995
        %v4156 = vunpack.c.l.b16 %v3996
        %v4157 = vunpack.c.h.b16 %v3996
        %v4158 = vunpack.c.l.b16 %v3997
        %v4159 = vunpack.c.h.b16 %v3997
        %v4160 = vunpack.c.l.b16 %v3998
        %v4161 = vunpack.c.h.b16 %v3998
        %v4162 = vunpack.c.l.b16 %v3999
        %v4163 = vunpack.c.h.b16 %v3999
        %v4164 = vunpack.c.l.b16 %v4000
        %v4165 = vunpack.c.h.b16 %v4000
        %v4166 = vunpack.c.l.b16 %v4001
        %v4167 = vunpack.c.h.b16 %v4001
        %v4168 = vunpack.c.l.b16 %v4002
        %v4169 = vunpack.c.h.b16 %v4002
        %v4170 = vunpack.c.l.b16 %v4003
        %v4171 = vunpack.c.h.b16 %v4003
        %v4172 = vunpack.c.l.b16 %v4004
        %v4173 = vunpack.c.h.b16 %v4004
        %v4174 = vunpack.c.l.b16 %v4005
        %v4175 = vunpack.c.h.b16 %v4005
        %v4176 = vunpack.c.l.b16 %v4006
        %v4177 = vunpack.c.h.b16 %v4006
        %v4178 = vunpack.c.l.b16 %v4007
        %v4179 = vunpack.c.h.b16 %v4007
        %v4180 = vunpack.c.l.b16 %v4008
        %v4181 = vunpack.c.h.b16 %v4008
        %v4182 = vunpack.c.l.b16 %v4009
        %v4183 = vunpack.c.h.b16 %v4009
        %v4184 = vunpack.c.l.b16 %v4010
        %v4185 = vunpack.c.h.b16 %v4010
        %v4186 = vunpack.c.l.b16 %v4011
        %v4187 = vunpack.c.h.b16 %v4011
        %v4188 = vunpack.c.l.b16 %v4012
        %v4189 = vunpack.c.h.b16 %v4012
        %v4190 = vunpack.c.l.b16 %v4013
        %v4191 = vunpack.c.h.b16 %v4013
        %v4192 = vunpack.c.l.b16 %v4014
        %v4193 = vunpack.c.h.b16 %v4014
        %v4194 = vunpack.c.l.b16 %v4015
        %v4195 = vunpack.c.h.b16 %v4015
        %v4196 = vunpack.c.l.b16 %v4016
        %v4197 = vunpack.c.h.b16 %v4016
        %v4198 = vunpack.c.l.b16 %v4017
        %v4199 = vunpack.c.h.b16 %v4017
        %v4200 = vunpack.c.l.b16 %v4018
        %v4201 = vunpack.c.h.b16 %v4018
        %v4202 = vunpack.c.l.b16 %v4019
        %v4203 = vunpack.c.h.b16 %v4019
        %v4204 = vunpack.c.l.b16 %v4020
        %v4205 = vunpack.c.h.b16 %v4020
        %v4206 = vunpack.c.l.b16 %v4021
        %v4207 = vunpack.c.h.b16 %v4021
        %v4208 = vunpack.c.l.b16 %v4022
        %v4209 = vunpack.c.h.b16 %v4022
        %v4210 = vunpack.c.l.b16 %v4023
        %v4211 = vunpack.c.h.b16 %v4023
        %v4212 = vunpack.c.l.b16 %v4024
        %v4213 = vunpack.c.h.b16 %v4024
        %v4214 = vunpack.c.l.b16 %v4025
        %v4215 = vunpack.c.h.b16 %v4025
        %v4216 = vunpack.c.l.b16 %v4026
        %v4217 = vunpack.c.h.b16 %v4026
        %v4218 = vunpack.c.l.b16 %v4027
        %v4219 = vunpack.c.h.b16 %v4027
        %v4220 = vunpack.c.l.b16 %v4028
        %v4221 = vunpack.c.h.b16 %v4028
        %v4222 = vunpack.c.l.b16 %v4029
        %v4223 = vunpack.c.h.b16 %v4029
        %v4224 = vunpack.c.l.b16 %v4030
        %v4225 = vunpack.c.h.b16 %v4030
        %v4226 = vunpack.c.l.b16 %v4031
        %v4227 = vunpack.c.h.b16 %v4031
        %v4228 = vunpack.c.l.b16 %v4032
        %v4229 = vunpack.c.h.b16 %v4032
        %v4230 = vunpack.c.l.b16 %v4033
        %v4231 = vunpack.c.h.b16 %v4033
        %v4232 = vpack.c.b16 %v4120, %v4104
        %v4233 = vpack.c.b16 %v4121, %v4105
        %v4234 = vpack.c.b16 %v4122, %v4106
        %v4235 = vpack.c.b16 %v4123, %v4107
        %v4236 = vpack.c.b16 %v4124, %v4108
        %v4237 = vpack.c.b16 %v4125, %v4109
        %v4238 = vpack.c.b16 %v4126, %v4110
        %v4239 = vpack.c.b16 %v4127, %v4111
        %v4240 = vpack.c.b16 %v4128, %v4112
        %v4241 = vpack.c.b16 %v4129, %v4113
        %v4242 = vpack.c.b16 %v4130, %v4114
        %v4243 = vpack.c.b16 %v4131, %v4115
        %v4244 = vpack.c.b16 %v4132, %v4116
        %v4245 = vpack.c.b16 %v4133, %v4117
        %v4246 = vpack.c.b16 %v4134, %v4118
        %v4247 = vpack.c.b16 %v4135, %v4119
        %v4248 = vpack.c.b16 %v4152, %v4136
        %v4249 = vpack.c.b16 %v4153, %v4137
        %v4250 = vpack.c.b16 %v4154, %v4138
        %v4251 = vpack.c.b16 %v4155, %v4139
        %v4252 = vpack.c.b16 %v4156, %v4140
        %v4253 = vpack.c.b16 %v4157, %v4141
        %v4254 = vpack.c.b16 %v4158, %v4142
        %v4255 = vpack.c.b16 %v4159, %v4143
        %v4256 = vpack.c.b16 %v4160, %v4144
        %v4257 = vpack.c.b16 %v4161, %v4145
        %v4258 = vpack.c.b16 %v4162, %v4146
        %v4259 = vpack.c.b16 %v4163, %v4147
        %v4260 = vpack.c.b16 %v4164, %v4148
        %v4261 = vpack.c.b16 %v4165, %v4149
        %v4262 = vpack.c.b16 %v4166, %v4150
        %v4263 = vpack.c.b16 %v4167, %v4151
        %v4264 = vpack.c.b16 %v4184, %v4168
        %v4265 = vpack.c.b16 %v4185, %v4169
        %v4266 = vpack.c.b16 %v4186, %v4170
        %v4267 = vpack.c.b16 %v4187, %v4171
        %v4268 = vpack.c.b16 %v4188, %v4172
        %v4269 = vpack.c.b16 %v4189, %v4173
        %v4270 = vpack.c.b16 %v4190, %v4174
        %v4271 = vpack.c.b16 %v4191, %v4175
        %v4272 = vpack.c.b16 %v4192, %v4176
        %v4273 = vpack.c.b16 %v4193, %v4177
        %v4274 = vpack.c.b16 %v4194, %v4178
        %v4275 = vpack.c.b16 %v4195, %v4179
        %v4276 = vpack.c.b16 %v4196, %v4180
        %v4277 = vpack.c.b16 %v4197, %v4181
        %v4278 = vpack.c.b16 %v4198, %v4182
        %v4279 = vpack.c.b16 %v4199, %v4183
        %v4280 = vpack.c.b16 %v4216, %v4200
        %v4281 = vpack.c.b16 %v4217, %v4201
        %v4282 = vpack.c.b16 %v4218, %v4202
        %v4283 = vpack.c.b16 %v4219, %v4203
        %v4284 = vpack.c.b16 %v4220, %v4204
        %v4285 = vpack.c.b16 %v4221, %v4205
        %v4286 = vpack.c.b16 %v4222, %v4206
        %v4287 = vpack.c.b16 %v4223, %v4207
        %v4288 = vpack.c.b16 %v4224, %v4208
        %v4289 = vpack.c.b16 %v4225, %v4209
        %v4290 = vpack.c.b16 %v4226, %v4210
        %v4291 = vpack.c.b16 %v4227, %v4211
        %v4292 = vpack.c.b16 %v4228, %v4212
        %v4293 = vpack.c.b16 %v4229, %v4213
        %v4294 = vpack.c.b16 %v4230, %v4214
        %v4295 = vpack.c.b16 %v4231, %v4215
        %v4362 = vperm.slane %v4034, 0
        %v4363 = vperm.slane %v4034, 1
        %v4364 = vperm.slane %v4034, 2
        %v4365 = vperm.slane %v4034, 3
        %v4366 = vperm.slane %v4034, 4
        %v4367 = vperm.slane %v4034, 5
        %v4368 = vperm.slane %v4034, 6
        %v4369 = vperm.slane %v4034, 7
        %v4370 = vperm.slane %v4035, 0
        %v4371 = vperm.slane %v4035, 1
        %v4372 = vperm.slane %v4035, 2
        %v4373 = vperm.slane %v4035, 3
        %v4374 = vperm.slane %v4035, 4
        %v4375 = vperm.slane %v4035, 5
        %v4376 = vperm.slane %v4035, 6
        %v4377 = vperm.slane %v4035, 7
        %v4395 = vsel %vm1165, %v4039, 0
        %4397 = vmatpush.bf16.msra.mxu0 0
        %4398 = vmatpush.bf16.msra.mxu0 0
        %4399 = vmatpush.bf16.msra.mxu0 0
        %4400 = vmatpush.bf16.msra.mxu0 0
        %4401 = vmatpush.bf16.msra.mxu0 %v4280
        %4402 = vmatpush.bf16.msra.mxu0 %v4264
        %4403 = vmatpush.bf16.msra.mxu0 %v4248
        %4404 = vmatpush.bf16.msra.mxu0 %v4232
        %4405 = vmatmul.bf16.gmra.mxu0 %v4395
        %v4406 = vpop.f32.mrf.mxu0
        %v4407 = vadd.f32 %v4362, %v4406
        %v4408 = vpop.f32.mrf.mxu0
        %4409 = vdwg.mxu0
        %4410 = vmatpush.bf16.msra.mxu0 0
        %4411 = vmatpush.bf16.msra.mxu0 0
        %4412 = vmatpush.bf16.msra.mxu0 0
        %4413 = vmatpush.bf16.msra.mxu0 0
        %4414 = vmatpush.bf16.msra.mxu0 %v4281
        %4415 = vmatpush.bf16.msra.mxu0 %v4265
        %4416 = vmatpush.bf16.msra.mxu0 %v4249
        %4417 = vmatpush.bf16.msra.mxu0 %v4233
        %4418 = vmatmul.bf16.gmra.mxu0 %v4395
        %v4419 = vpop.f32.mrf.mxu0
        %v4420 = vadd.f32 %v4363, %v4419
        %v4421 = vpop.f32.mrf.mxu0
        %4422 = vdwg.mxu0
        %4423 = vmatpush.bf16.msra.mxu0 0
        %4424 = vmatpush.bf16.msra.mxu0 0
        %4425 = vmatpush.bf16.msra.mxu0 0
        %4426 = vmatpush.bf16.msra.mxu0 0
        %4427 = vmatpush.bf16.msra.mxu0 %v4282
        %4428 = vmatpush.bf16.msra.mxu0 %v4266
        %4429 = vmatpush.bf16.msra.mxu0 %v4250
        %4430 = vmatpush.bf16.msra.mxu0 %v4234
        %4431 = vmatmul.bf16.gmra.mxu0 %v4395
        %v4432 = vpop.f32.mrf.mxu0
        %v4433 = vadd.f32 %v4364, %v4432
        %v4434 = vpop.f32.mrf.mxu0
        %4435 = vdwg.mxu0
        %4436 = vmatpush.bf16.msra.mxu0 0
        %4437 = vmatpush.bf16.msra.mxu0 0
        %4438 = vmatpush.bf16.msra.mxu0 0
        %4439 = vmatpush.bf16.msra.mxu0 0
        %4440 = vmatpush.bf16.msra.mxu0 %v4283
        %4441 = vmatpush.bf16.msra.mxu0 %v4267
        %4442 = vmatpush.bf16.msra.mxu0 %v4251
        %4443 = vmatpush.bf16.msra.mxu0 %v4235
        %4444 = vmatmul.bf16.gmra.mxu0 %v4395
        %v4445 = vpop.f32.mrf.mxu0
        %v4446 = vadd.f32 %v4365, %v4445
        %v4447 = vpop.f32.mrf.mxu0
        %4448 = vdwg.mxu0
        %4449 = vmatpush.bf16.msra.mxu0 0
        %4450 = vmatpush.bf16.msra.mxu0 0
        %4451 = vmatpush.bf16.msra.mxu0 0
        %4452 = vmatpush.bf16.msra.mxu0 0
        %4453 = vmatpush.bf16.msra.mxu0 %v4284
        %4454 = vmatpush.bf16.msra.mxu0 %v4268
        %4455 = vmatpush.bf16.msra.mxu0 %v4252
        %4456 = vmatpush.bf16.msra.mxu0 %v4236
        %4457 = vmatmul.bf16.gmra.mxu0 %v4395
        %v4458 = vpop.f32.mrf.mxu0
        %v4459 = vadd.f32 %v4366, %v4458
        %v4460 = vpop.f32.mrf.mxu0
        %4461 = vdwg.mxu0
        %4462 = vmatpush.bf16.msra.mxu0 0
        %4463 = vmatpush.bf16.msra.mxu0 0
        %4464 = vmatpush.bf16.msra.mxu0 0
        %4465 = vmatpush.bf16.msra.mxu0 0
        %4466 = vmatpush.bf16.msra.mxu0 %v4285
        %4467 = vmatpush.bf16.msra.mxu0 %v4269
        %4468 = vmatpush.bf16.msra.mxu0 %v4253
        %4469 = vmatpush.bf16.msra.mxu0 %v4237
        %4470 = vmatmul.bf16.gmra.mxu0 %v4395
        %v4471 = vpop.f32.mrf.mxu0
        %v4472 = vadd.f32 %v4367, %v4471
        %v4473 = vpop.f32.mrf.mxu0
        %4474 = vdwg.mxu0
        %4475 = vmatpush.bf16.msra.mxu0 0
        %4476 = vmatpush.bf16.msra.mxu0 0
        %4477 = vmatpush.bf16.msra.mxu0 0
        %4478 = vmatpush.bf16.msra.mxu0 0
        %4479 = vmatpush.bf16.msra.mxu0 %v4286
        %4480 = vmatpush.bf16.msra.mxu0 %v4270
        %4481 = vmatpush.bf16.msra.mxu0 %v4254
        %4482 = vmatpush.bf16.msra.mxu0 %v4238
        %4483 = vmatmul.bf16.gmra.mxu0 %v4395
        %v4484 = vpop.f32.mrf.mxu0
        %v4485 = vadd.f32 %v4368, %v4484
        %v4486 = vpop.f32.mrf.mxu0
        %4487 = vdwg.mxu0
        %4488 = vmatpush.bf16.msra.mxu0 0
        %4489 = vmatpush.bf16.msra.mxu0 0
        %4490 = vmatpush.bf16.msra.mxu0 0
        %4491 = vmatpush.bf16.msra.mxu0 0
        %4492 = vmatpush.bf16.msra.mxu0 %v4287
        %4493 = vmatpush.bf16.msra.mxu0 %v4271
        %4494 = vmatpush.bf16.msra.mxu0 %v4255
        %4495 = vmatpush.bf16.msra.mxu0 %v4239
        %4496 = vmatmul.bf16.gmra.mxu0 %v4395
        %v4497 = vpop.f32.mrf.mxu0
        %v4498 = vadd.f32 %v4369, %v4497
        %v4499 = vpop.f32.mrf.mxu0
        %4500 = vdwg.mxu0
        %4501 = vmatpush.bf16.msra.mxu0 0
        %4502 = vmatpush.bf16.msra.mxu0 0
        %4503 = vmatpush.bf16.msra.mxu0 0
        %4504 = vmatpush.bf16.msra.mxu0 0
        %4505 = vmatpush.bf16.msra.mxu0 %v4288
        %4506 = vmatpush.bf16.msra.mxu0 %v4272
        %4507 = vmatpush.bf16.msra.mxu0 %v4256
        %4508 = vmatpush.bf16.msra.mxu0 %v4240
        %4509 = vmatmul.bf16.gmra.mxu0 %v4395
        %v4510 = vpop.f32.mrf.mxu0
        %v4511 = vadd.f32 %v4370, %v4510
        %v4512 = vpop.f32.mrf.mxu0
        %4513 = vdwg.mxu0
        %4514 = vmatpush.bf16.msra.mxu0 0
        %4515 = vmatpush.bf16.msra.mxu0 0
        %4516 = vmatpush.bf16.msra.mxu0 0
        %4517 = vmatpush.bf16.msra.mxu0 0
        %4518 = vmatpush.bf16.msra.mxu0 %v4289
        %4519 = vmatpush.bf16.msra.mxu0 %v4273
        %4520 = vmatpush.bf16.msra.mxu0 %v4257
        %4521 = vmatpush.bf16.msra.mxu0 %v4241
        %4522 = vmatmul.bf16.gmra.mxu0 %v4395
        %v4523 = vpop.f32.mrf.mxu0
        %v4524 = vadd.f32 %v4371, %v4523
        %v4525 = vpop.f32.mrf.mxu0
        %4526 = vdwg.mxu0
        %4527 = vmatpush.bf16.msra.mxu0 0
        %4528 = vmatpush.bf16.msra.mxu0 0
        %4529 = vmatpush.bf16.msra.mxu0 0
        %4530 = vmatpush.bf16.msra.mxu0 0
        %4531 = vmatpush.bf16.msra.mxu0 %v4290
        %4532 = vmatpush.bf16.msra.mxu0 %v4274
        %4533 = vmatpush.bf16.msra.mxu0 %v4258
        %4534 = vmatpush.bf16.msra.mxu0 %v4242
        %4535 = vmatmul.bf16.gmra.mxu0 %v4395
        %v4536 = vpop.f32.mrf.mxu0
        %v4537 = vadd.f32 %v4372, %v4536
        %v4538 = vpop.f32.mrf.mxu0
        %4539 = vdwg.mxu0
        %4540 = vmatpush.bf16.msra.mxu0 0
        %4541 = vmatpush.bf16.msra.mxu0 0
        %4542 = vmatpush.bf16.msra.mxu0 0
        %4543 = vmatpush.bf16.msra.mxu0 0
        %4544 = vmatpush.bf16.msra.mxu0 %v4291
        %4545 = vmatpush.bf16.msra.mxu0 %v4275
        %4546 = vmatpush.bf16.msra.mxu0 %v4259
        %4547 = vmatpush.bf16.msra.mxu0 %v4243
        %4548 = vmatmul.bf16.gmra.mxu0 %v4395
        %v4549 = vpop.f32.mrf.mxu0
        %v4550 = vadd.f32 %v4373, %v4549
        %v4551 = vpop.f32.mrf.mxu0
        %4552 = vdwg.mxu0
        %4553 = vmatpush.bf16.msra.mxu0 0
        %4554 = vmatpush.bf16.msra.mxu0 0
        %4555 = vmatpush.bf16.msra.mxu0 0
        %4556 = vmatpush.bf16.msra.mxu0 0
        %4557 = vmatpush.bf16.msra.mxu0 %v4292
        %4558 = vmatpush.bf16.msra.mxu0 %v4276
        %4559 = vmatpush.bf16.msra.mxu0 %v4260
        %4560 = vmatpush.bf16.msra.mxu0 %v4244
        %4561 = vmatmul.bf16.gmra.mxu0 %v4395
        %v4562 = vpop.f32.mrf.mxu0
        %v4563 = vadd.f32 %v4374, %v4562
        %v4564 = vpop.f32.mrf.mxu0
        %4565 = vdwg.mxu0
        %4566 = vmatpush.bf16.msra.mxu0 0
        %4567 = vmatpush.bf16.msra.mxu0 0
        %4568 = vmatpush.bf16.msra.mxu0 0
        %4569 = vmatpush.bf16.msra.mxu0 0
        %4570 = vmatpush.bf16.msra.mxu0 %v4293
        %4571 = vmatpush.bf16.msra.mxu0 %v4277
        %4572 = vmatpush.bf16.msra.mxu0 %v4261
        %4573 = vmatpush.bf16.msra.mxu0 %v4245
        %4574 = vmatmul.bf16.gmra.mxu0 %v4395
        %v4575 = vpop.f32.mrf.mxu0
        %v4576 = vadd.f32 %v4375, %v4575
        %v4577 = vpop.f32.mrf.mxu0
        %4578 = vdwg.mxu0
        %4579 = vmatpush.bf16.msra.mxu0 0
        %4580 = vmatpush.bf16.msra.mxu0 0
        %4581 = vmatpush.bf16.msra.mxu0 0
        %4582 = vmatpush.bf16.msra.mxu0 0
        %4583 = vmatpush.bf16.msra.mxu0 %v4294
        %4584 = vmatpush.bf16.msra.mxu0 %v4278
        %4585 = vmatpush.bf16.msra.mxu0 %v4262
        %4586 = vmatpush.bf16.msra.mxu0 %v4246
        %4587 = vmatmul.bf16.gmra.mxu0 %v4395
        %v4588 = vpop.f32.mrf.mxu0
        %v4589 = vadd.f32 %v4376, %v4588
        %v4590 = vpop.f32.mrf.mxu0
        %4591 = vdwg.mxu0
        %4592 = vmatpush.bf16.msra.mxu0 0
        %4593 = vmatpush.bf16.msra.mxu0 0
        %4594 = vmatpush.bf16.msra.mxu0 0
        %4595 = vmatpush.bf16.msra.mxu0 0
        %4596 = vmatpush.bf16.msra.mxu0 %v4295
        %4597 = vmatpush.bf16.msra.mxu0 %v4279
        %4598 = vmatpush.bf16.msra.mxu0 %v4263
        %4599 = vmatpush.bf16.msra.mxu0 %v4247
        %4600 = vmatmul.bf16.gmra.mxu0 %v4395
        %v4601 = vpop.f32.mrf.mxu0
        %v4602 = vadd.f32 %v4377, %v4601
        %v4603 = vpop.f32.mrf.mxu0
        %4604 = vdwg.mxu0
        %v4605 = vmax.f32 %v4407, 0.0
        %v4606 = vmax.f32 %v4420, 0.0
        %v4607 = vmax.f32 %v4433, 0.0
        %v4608 = vmax.f32 %v4446, 0.0
        %v4609 = vmax.f32 %v4459, 0.0
        %v4610 = vmax.f32 %v4472, 0.0
        %v4611 = vmax.f32 %v4485, 0.0
        %v4612 = vmax.f32 %v4498, 0.0
        %v4613 = vmax.f32 %v4511, 0.0
        %v4614 = vmax.f32 %v4524, 0.0
        %v4615 = vmax.f32 %v4537, 0.0
        %v4616 = vmax.f32 %v4550, 0.0
        %v4617 = vmax.f32 %v4563, 0.0
        %v4618 = vmax.f32 %v4576, 0.0
        %v4619 = vmax.f32 %v4589, 0.0
        %v4620 = vmax.f32 %v4602, 0.0
        %v4621 = vpack.c.bf16 %v4605, %v4605
        %v4622 = vpack.c.bf16 %v4606, %v4606
        %v4623 = vpack.c.bf16 %v4607, %v4607
        %v4624 = vpack.c.bf16 %v4608, %v4608
        %v4625 = vpack.c.bf16 %v4609, %v4609
        %v4626 = vpack.c.bf16 %v4610, %v4610
        %v4627 = vpack.c.bf16 %v4611, %v4611
        %v4628 = vpack.c.bf16 %v4612, %v4612
        %v4629 = vpack.c.bf16 %v4613, %v4613
        %v4630 = vpack.c.bf16 %v4614, %v4614
        %v4631 = vpack.c.bf16 %v4615, %v4615
        %v4632 = vpack.c.bf16 %v4616, %v4616
        %v4633 = vpack.c.bf16 %v4617, %v4617
        %v4634 = vpack.c.bf16 %v4618, %v4618
        %v4635 = vpack.c.bf16 %v4619, %v4619
        %v4636 = vpack.c.bf16 %v4620, %v4620
        %v4637 = vld [vmem:[%s55] sm:$0xf]
        %v4638 = vld [vmem:[%s55 + $0x4] sm:$0xf]
        %v4639 = vld [vmem:[%s55 + $0x8] sm:$0xf]
        %v4640 = vld [vmem:[%s55 + $0xc] sm:$0xf]
        %v4641 = vld [vmem:[%s55 + $0x10] sm:$0xf]
        %v4642 = vld [vmem:[%s55 + $0x14] sm:$0xf]
        %v4643 = vld [vmem:[%s55 + $0x18] sm:$0xf]
        %v4644 = vld [vmem:[%s55 + $0x1c] sm:$0xf]
        %v4645 = vld [vmem:[%s55 + $0x20] sm:$0xf]
        %v4646 = vld [vmem:[%s55 + $0x24] sm:$0xf]
        %v4647 = vld [vmem:[%s55 + $0x28] sm:$0xf]
        %v4648 = vld [vmem:[%s55 + $0x2c] sm:$0xf]
        %v4649 = vld [vmem:[%s55 + $0x30] sm:$0xf]
        %v4650 = vld [vmem:[%s55 + $0x34] sm:$0xf]
        %v4651 = vld [vmem:[%s55 + $0x38] sm:$0xf]
        %v4652 = vld [vmem:[%s55 + $0x3c] sm:$0xf]
        %v4653 = vld [vmem:[%s55 + $0x40] sm:$0xf]
        %v4654 = vld [vmem:[%s55 + $0x44] sm:$0xf]
        %v4655 = vld [vmem:[%s55 + $0x48] sm:$0xf]
        %v4656 = vld [vmem:[%s55 + $0x4c] sm:$0xf]
        %v4657 = vld [vmem:[%s55 + $0x50] sm:$0xf]
        %v4658 = vld [vmem:[%s55 + $0x54] sm:$0xf]
        %v4659 = vld [vmem:[%s55 + $0x58] sm:$0xf]
        %v4660 = vld [vmem:[%s55 + $0x5c] sm:$0xf]
        %v4661 = vld [vmem:[%s55 + $0x60] sm:$0xf]
        %v4662 = vld [vmem:[%s55 + $0x64] sm:$0xf]
        %v4663 = vld [vmem:[%s55 + $0x68] sm:$0xf]
        %v4664 = vld [vmem:[%s55 + $0x6c] sm:$0xf]
        %v4665 = vld [vmem:[%s55 + $0x70] sm:$0xf]
        %v4666 = vld [vmem:[%s55 + $0x74] sm:$0xf]
        %v4667 = vld [vmem:[%s55 + $0x78] sm:$0xf]
        %v4668 = vld [vmem:[%s55 + $0x7c] sm:$0xf]
        %v4669 = vld [vmem:[%s55 + $0x80] sm:$0xf]
        %v4670 = vld [vmem:[%s55 + $0x84] sm:$0xf]
        %v4671 = vld [vmem:[%s55 + $0x88] sm:$0xf]
        %v4672 = vld [vmem:[%s55 + $0x8c] sm:$0xf]
        %v4673 = vld [vmem:[%s55 + $0x90] sm:$0xf]
        %v4674 = vld [vmem:[%s55 + $0x94] sm:$0xf]
        %v4675 = vld [vmem:[%s55 + $0x98] sm:$0xf]
        %v4676 = vld [vmem:[%s55 + $0x9c] sm:$0xf]
        %v4677 = vld [vmem:[%s55 + $0xa0] sm:$0xf]
        %v4678 = vld [vmem:[%s55 + $0xa4] sm:$0xf]
        %v4679 = vld [vmem:[%s55 + $0xa8] sm:$0xf]
        %v4680 = vld [vmem:[%s55 + $0xac] sm:$0xf]
        %v4681 = vld [vmem:[%s55 + $0xb0] sm:$0xf]
        %v4682 = vld [vmem:[%s55 + $0xb4] sm:$0xf]
        %v4683 = vld [vmem:[%s55 + $0xb8] sm:$0xf]
        %v4684 = vld [vmem:[%s55 + $0xbc] sm:$0xf]
        %v4685 = vld [vmem:[%s55 + $0xc0] sm:$0xf]
        %v4686 = vld [vmem:[%s55 + $0xc4] sm:$0xf]
        %v4687 = vld [vmem:[%s55 + $0xc8] sm:$0xf]
        %v4688 = vld [vmem:[%s55 + $0xcc] sm:$0xf]
        %v4689 = vld [vmem:[%s55 + $0xd0] sm:$0xf]
        %v4690 = vld [vmem:[%s55 + $0xd4] sm:$0xf]
        %v4691 = vld [vmem:[%s55 + $0xd8] sm:$0xf]
        %v4692 = vld [vmem:[%s55 + $0xdc] sm:$0xf]
        %v4693 = vld [vmem:[%s55 + $0xe0] sm:$0xf]
        %v4694 = vld [vmem:[%s55 + $0xe4] sm:$0xf]
        %v4695 = vld [vmem:[%s55 + $0xe8] sm:$0xf]
        %v4696 = vld [vmem:[%s55 + $0xec] sm:$0xf]
        %v4697 = vld [vmem:[%s55 + $0xf0] sm:$0xf]
        %v4698 = vld [vmem:[%s55 + $0xf4] sm:$0xf]
        %v4699 = vld [vmem:[%s55 + $0xf8] sm:$0xf]
        %v4700 = vld [vmem:[%s55 + $0xfc] sm:$0xf]
        %v4701 = vld [vmem:[%s55 + $0x100] sm:$0xf]
        %v4702 = vld [vmem:[%s55 + $0x104] sm:$0xf]
        %v4703 = vld [vmem:[%s55 + $0x108] sm:$0xf]
        %v4704 = vld [vmem:[%s55 + $0x10c] sm:$0xf]
        %v4705 = vld [vmem:[%s55 + $0x110] sm:$0xf]
        %v4706 = vld [vmem:[%s55 + $0x114] sm:$0xf]
        %v4707 = vld [vmem:[%s55 + $0x118] sm:$0xf]
        %v4708 = vld [vmem:[%s55 + $0x11c] sm:$0xf]
        %v4709 = vld [vmem:[%s55 + $0x120] sm:$0xf]
        %v4710 = vld [vmem:[%s55 + $0x124] sm:$0xf]
        %v4711 = vld [vmem:[%s55 + $0x128] sm:$0xf]
        %v4712 = vld [vmem:[%s55 + $0x12c] sm:$0xf]
        %v4713 = vld [vmem:[%s55 + $0x130] sm:$0xf]
        %v4714 = vld [vmem:[%s55 + $0x134] sm:$0xf]
        %v4715 = vld [vmem:[%s55 + $0x138] sm:$0xf]
        %v4716 = vld [vmem:[%s55 + $0x13c] sm:$0xf]
        %v4717 = vld [vmem:[%s55 + $0x140] sm:$0xf]
        %v4718 = vld [vmem:[%s55 + $0x144] sm:$0xf]
        %v4719 = vld [vmem:[%s55 + $0x148] sm:$0xf]
        %v4720 = vld [vmem:[%s55 + $0x14c] sm:$0xf]
        %v4721 = vld [vmem:[%s55 + $0x150] sm:$0xf]
        %v4722 = vld [vmem:[%s55 + $0x154] sm:$0xf]
        %v4723 = vld [vmem:[%s55 + $0x158] sm:$0xf]
        %v4724 = vld [vmem:[%s55 + $0x15c] sm:$0xf]
        %v4725 = vld [vmem:[%s55 + $0x160] sm:$0xf]
        %v4726 = vld [vmem:[%s55 + $0x164] sm:$0xf]
        %v4727 = vld [vmem:[%s55 + $0x168] sm:$0xf]
        %v4728 = vld [vmem:[%s55 + $0x16c] sm:$0xf]
        %v4729 = vld [vmem:[%s55 + $0x170] sm:$0xf]
        %v4730 = vld [vmem:[%s55 + $0x174] sm:$0xf]
        %v4731 = vld [vmem:[%s55 + $0x178] sm:$0xf]
        %v4732 = vld [vmem:[%s55 + $0x17c] sm:$0xf]
        %v4733 = vld [vmem:[%s55 + $0x180] sm:$0xf]
        %v4734 = vld [vmem:[%s55 + $0x184] sm:$0xf]
        %v4735 = vld [vmem:[%s55 + $0x188] sm:$0xf]
        %v4736 = vld [vmem:[%s55 + $0x18c] sm:$0xf]
        %v4737 = vld [vmem:[%s55 + $0x190] sm:$0xf]
        %v4738 = vld [vmem:[%s55 + $0x194] sm:$0xf]
        %v4739 = vld [vmem:[%s55 + $0x198] sm:$0xf]
        %v4740 = vld [vmem:[%s55 + $0x19c] sm:$0xf]
        %v4741 = vld [vmem:[%s55 + $0x1a0] sm:$0xf]
        %v4742 = vld [vmem:[%s55 + $0x1a4] sm:$0xf]
        %v4743 = vld [vmem:[%s55 + $0x1a8] sm:$0xf]
        %v4744 = vld [vmem:[%s55 + $0x1ac] sm:$0xf]
        %v4745 = vld [vmem:[%s55 + $0x1b0] sm:$0xf]
        %v4746 = vld [vmem:[%s55 + $0x1b4] sm:$0xf]
        %v4747 = vld [vmem:[%s55 + $0x1b8] sm:$0xf]
        %v4748 = vld [vmem:[%s55 + $0x1bc] sm:$0xf]
        %v4749 = vld [vmem:[%s55 + $0x1c0] sm:$0xf]
        %v4750 = vld [vmem:[%s55 + $0x1c4] sm:$0xf]
        %v4751 = vld [vmem:[%s55 + $0x1c8] sm:$0xf]
        %v4752 = vld [vmem:[%s55 + $0x1cc] sm:$0xf]
        %v4753 = vld [vmem:[%s55 + $0x1d0] sm:$0xf]
        %v4754 = vld [vmem:[%s55 + $0x1d4] sm:$0xf]
        %v4755 = vld [vmem:[%s55 + $0x1d8] sm:$0xf]
        %v4756 = vld [vmem:[%s55 + $0x1dc] sm:$0xf]
        %v4757 = vld [vmem:[%s55 + $0x1e0] sm:$0xf]
        %v4758 = vld [vmem:[%s55 + $0x1e4] sm:$0xf]
        %v4759 = vld [vmem:[%s55 + $0x1e8] sm:$0xf]
        %v4760 = vld [vmem:[%s55 + $0x1ec] sm:$0xf]
        %v4761 = vld [vmem:[%s55 + $0x1f0] sm:$0xf]
        %v4762 = vld [vmem:[%s55 + $0x1f4] sm:$0xf]
        %v4763 = vld [vmem:[%s55 + $0x1f8] sm:$0xf]
        %v4764 = vld [vmem:[%s55 + $0x1fc] sm:$0xf]
        %v4765 = vld [vmem:[%s55 + $0x200] sm:$0xf]
        %v4766 = vld [vmem:[%s55 + $0x204] sm:$0xf]
        %v4767 = vld [vmem:[%s55 + $0x208] sm:$0xf]
        %v4768 = vld [vmem:[%s55 + $0x20c] sm:$0xf]
        %v4769 = vld [vmem:[%s55 + $0x210] sm:$0xf]
        %v4770 = vld [vmem:[%s55 + $0x214] sm:$0xf]
        %v4771 = vld [vmem:[%s55 + $0x218] sm:$0xf]
        %v4772 = vld [vmem:[%s55 + $0x21c] sm:$0xf]
        %v4773 = vld [vmem:[%s55 + $0x220] sm:$0xf]
        %v4774 = vld [vmem:[%s55 + $0x224] sm:$0xf]
        %v4775 = vld [vmem:[%s55 + $0x228] sm:$0xf]
        %v4776 = vld [vmem:[%s55 + $0x22c] sm:$0xf]
        %v4777 = vld [vmem:[%s55 + $0x230] sm:$0xf]
        %v4778 = vld [vmem:[%s55 + $0x234] sm:$0xf]
        %v4779 = vld [vmem:[%s55 + $0x238] sm:$0xf]
        %v4780 = vld [vmem:[%s55 + $0x23c] sm:$0xf]
        %v4781 = vld [vmem:[%s55 + $0x240] sm:$0xf]
        %v4782 = vld [vmem:[%s55 + $0x244] sm:$0xf]
        %v4783 = vld [vmem:[%s55 + $0x248] sm:$0xf]
        %v4784 = vld [vmem:[%s55 + $0x24c] sm:$0xf]
        %v4785 = vld [vmem:[%s55 + $0x250] sm:$0xf]
        %v4786 = vld [vmem:[%s55 + $0x254] sm:$0xf]
        %v4787 = vld [vmem:[%s55 + $0x258] sm:$0xf]
        %v4788 = vld [vmem:[%s55 + $0x25c] sm:$0xf]
        %v4789 = vld [vmem:[%s55 + $0x260] sm:$0xf]
        %v4790 = vld [vmem:[%s55 + $0x264] sm:$0xf]
        %v4791 = vld [vmem:[%s55 + $0x268] sm:$0xf]
        %v4792 = vld [vmem:[%s55 + $0x26c] sm:$0xf]
        %v4793 = vld [vmem:[%s55 + $0x270] sm:$0xf]
        %v4794 = vld [vmem:[%s55 + $0x274] sm:$0xf]
        %v4795 = vld [vmem:[%s55 + $0x278] sm:$0xf]
        %v4796 = vld [vmem:[%s55 + $0x27c] sm:$0xf]
        %v4797 = vld [vmem:[%s55 + $0x280] sm:$0xf]
        %v4798 = vld [vmem:[%s55 + $0x284] sm:$0xf]
        %v4799 = vld [vmem:[%s55 + $0x288] sm:$0xf]
        %v4800 = vld [vmem:[%s55 + $0x28c] sm:$0xf]
        %v4801 = vld [vmem:[%s55 + $0x290] sm:$0xf]
        %v4802 = vld [vmem:[%s55 + $0x294] sm:$0xf]
        %v4803 = vld [vmem:[%s55 + $0x298] sm:$0xf]
        %v4804 = vld [vmem:[%s55 + $0x29c] sm:$0xf]
        %v4805 = vld [vmem:[%s55 + $0x2a0] sm:$0xf]
        %v4806 = vld [vmem:[%s55 + $0x2a4] sm:$0xf]
        %v4807 = vld [vmem:[%s55 + $0x2a8] sm:$0xf]
        %v4808 = vld [vmem:[%s55 + $0x2ac] sm:$0xf]
        %v4809 = vld [vmem:[%s55 + $0x2b0] sm:$0xf]
        %v4810 = vld [vmem:[%s55 + $0x2b4] sm:$0xf]
        %v4811 = vld [vmem:[%s55 + $0x2b8] sm:$0xf]
        %v4812 = vld [vmem:[%s55 + $0x2bc] sm:$0xf]
        %v4813 = vld [vmem:[%s55 + $0x2c0] sm:$0xf]
        %v4814 = vld [vmem:[%s55 + $0x2c4] sm:$0xf]
        %v4815 = vld [vmem:[%s55 + $0x2c8] sm:$0xf]
        %v4816 = vld [vmem:[%s55 + $0x2cc] sm:$0xf]
        %v4817 = vld [vmem:[%s55 + $0x2d0] sm:$0xf]
        %v4818 = vld [vmem:[%s55 + $0x2d4] sm:$0xf]
        %v4819 = vld [vmem:[%s55 + $0x2d8] sm:$0xf]
        %v4820 = vld [vmem:[%s55 + $0x2dc] sm:$0xf]
        %v4821 = vld [vmem:[%s55 + $0x2e0] sm:$0xf]
        %v4822 = vld [vmem:[%s55 + $0x2e4] sm:$0xf]
        %v4823 = vld [vmem:[%s55 + $0x2e8] sm:$0xf]
        %v4824 = vld [vmem:[%s55 + $0x2ec] sm:$0xf]
        %v4825 = vld [vmem:[%s55 + $0x2f0] sm:$0xf]
        %v4826 = vld [vmem:[%s55 + $0x2f4] sm:$0xf]
        %v4827 = vld [vmem:[%s55 + $0x2f8] sm:$0xf]
        %v4828 = vld [vmem:[%s55 + $0x2fc] sm:$0xf]
        %v4829 = vld [vmem:[%s55 + $0x300] sm:$0xf]
        %v4830 = vld [vmem:[%s55 + $0x304] sm:$0xf]
        %v4831 = vld [vmem:[%s55 + $0x308] sm:$0xf]
        %v4832 = vld [vmem:[%s55 + $0x30c] sm:$0xf]
        %v4833 = vld [vmem:[%s55 + $0x310] sm:$0xf]
        %v4834 = vld [vmem:[%s55 + $0x314] sm:$0xf]
        %v4835 = vld [vmem:[%s55 + $0x318] sm:$0xf]
        %v4836 = vld [vmem:[%s55 + $0x31c] sm:$0xf]
        %v4837 = vld [vmem:[%s55 + $0x320] sm:$0xf]
        %v4838 = vld [vmem:[%s55 + $0x324] sm:$0xf]
        %v4839 = vld [vmem:[%s55 + $0x328] sm:$0xf]
        %v4840 = vld [vmem:[%s55 + $0x32c] sm:$0xf]
        %v4841 = vld [vmem:[%s55 + $0x330] sm:$0xf]
        %v4842 = vld [vmem:[%s55 + $0x334] sm:$0xf]
        %v4843 = vld [vmem:[%s55 + $0x338] sm:$0xf]
        %v4844 = vld [vmem:[%s55 + $0x33c] sm:$0xf]
        %v4845 = vld [vmem:[%s55 + $0x340] sm:$0xf]
        %v4846 = vld [vmem:[%s55 + $0x344] sm:$0xf]
        %v4847 = vld [vmem:[%s55 + $0x348] sm:$0xf]
        %v4848 = vld [vmem:[%s55 + $0x34c] sm:$0xf]
        %v4849 = vld [vmem:[%s55 + $0x350] sm:$0xf]
        %v4850 = vld [vmem:[%s55 + $0x354] sm:$0xf]
        %v4851 = vld [vmem:[%s55 + $0x358] sm:$0xf]
        %v4852 = vld [vmem:[%s55 + $0x35c] sm:$0xf]
        %v4853 = vld [vmem:[%s55 + $0x360] sm:$0xf]
        %v4854 = vld [vmem:[%s55 + $0x364] sm:$0xf]
        %v4855 = vld [vmem:[%s55 + $0x368] sm:$0xf]
        %v4856 = vld [vmem:[%s55 + $0x36c] sm:$0xf]
        %v4857 = vld [vmem:[%s55 + $0x370] sm:$0xf]
        %v4858 = vld [vmem:[%s55 + $0x374] sm:$0xf]
        %v4859 = vld [vmem:[%s55 + $0x378] sm:$0xf]
        %v4860 = vld [vmem:[%s55 + $0x37c] sm:$0xf]
        %v4861 = vld [vmem:[%s55 + $0x380] sm:$0xf]
        %v4862 = vld [vmem:[%s55 + $0x384] sm:$0xf]
        %v4863 = vld [vmem:[%s55 + $0x388] sm:$0xf]
        %v4864 = vld [vmem:[%s55 + $0x38c] sm:$0xf]
        %v4865 = vld [vmem:[%s55 + $0x390] sm:$0xf]
        %v4866 = vld [vmem:[%s55 + $0x394] sm:$0xf]
        %v4867 = vld [vmem:[%s55 + $0x398] sm:$0xf]
        %v4868 = vld [vmem:[%s55 + $0x39c] sm:$0xf]
        %v4869 = vld [vmem:[%s55 + $0x3a0] sm:$0xf]
        %v4870 = vld [vmem:[%s55 + $0x3a4] sm:$0xf]
        %v4871 = vld [vmem:[%s55 + $0x3a8] sm:$0xf]
        %v4872 = vld [vmem:[%s55 + $0x3ac] sm:$0xf]
        %v4873 = vld [vmem:[%s55 + $0x3b0] sm:$0xf]
        %v4874 = vld [vmem:[%s55 + $0x3b4] sm:$0xf]
        %v4875 = vld [vmem:[%s55 + $0x3b8] sm:$0xf]
        %v4876 = vld [vmem:[%s55 + $0x3bc] sm:$0xf]
        %v4877 = vld [vmem:[%s55 + $0x3c0] sm:$0xf]
        %v4878 = vld [vmem:[%s55 + $0x3c4] sm:$0xf]
        %v4879 = vld [vmem:[%s55 + $0x3c8] sm:$0xf]
        %v4880 = vld [vmem:[%s55 + $0x3cc] sm:$0xf]
        %v4881 = vld [vmem:[%s55 + $0x3d0] sm:$0xf]
        %v4882 = vld [vmem:[%s55 + $0x3d4] sm:$0xf]
        %v4883 = vld [vmem:[%s55 + $0x3d8] sm:$0xf]
        %v4884 = vld [vmem:[%s55 + $0x3dc] sm:$0xf]
        %v4885 = vld [vmem:[%s55 + $0x3e0] sm:$0xf]
        %v4886 = vld [vmem:[%s55 + $0x3e4] sm:$0xf]
        %v4887 = vld [vmem:[%s55 + $0x3e8] sm:$0xf]
        %v4888 = vld [vmem:[%s55 + $0x3ec] sm:$0xf]
        %v4889 = vld [vmem:[%s55 + $0x3f0] sm:$0xf]
        %v4890 = vld [vmem:[%s55 + $0x3f4] sm:$0xf]
        %v4891 = vld [vmem:[%s55 + $0x3f8] sm:$0xf]
        %v4892 = vld [vmem:[%s55 + $0x3fc] sm:$0xf]
        %v4893 = vld [vmem:[%s57] sm:$0x1]
        %v5150 = vunpack.c.l.b16 %v4637
        %v5151 = vunpack.c.l.b16 %v4638
        %v5152 = vunpack.c.l.b16 %v4639
        %v5153 = vunpack.c.l.b16 %v4640
        %v5154 = vunpack.c.l.b16 %v4641
        %v5155 = vunpack.c.l.b16 %v4642
        %v5156 = vunpack.c.l.b16 %v4643
        %v5157 = vunpack.c.l.b16 %v4644
        %v5158 = vunpack.c.l.b16 %v4645
        %v5159 = vunpack.c.l.b16 %v4646
        %v5160 = vunpack.c.l.b16 %v4647
        %v5161 = vunpack.c.l.b16 %v4648
        %v5162 = vunpack.c.l.b16 %v4649
        %v5163 = vunpack.c.l.b16 %v4650
        %v5164 = vunpack.c.l.b16 %v4651
        %v5165 = vunpack.c.l.b16 %v4652
        %v5166 = vunpack.c.l.b16 %v4653
        %v5167 = vunpack.c.l.b16 %v4654
        %v5168 = vunpack.c.l.b16 %v4655
        %v5169 = vunpack.c.l.b16 %v4656
        %v5170 = vunpack.c.l.b16 %v4657
        %v5171 = vunpack.c.l.b16 %v4658
        %v5172 = vunpack.c.l.b16 %v4659
        %v5173 = vunpack.c.l.b16 %v4660
        %v5174 = vunpack.c.l.b16 %v4661
        %v5175 = vunpack.c.l.b16 %v4662
        %v5176 = vunpack.c.l.b16 %v4663
        %v5177 = vunpack.c.l.b16 %v4664
        %v5178 = vunpack.c.l.b16 %v4665
        %v5179 = vunpack.c.l.b16 %v4666
        %v5180 = vunpack.c.l.b16 %v4667
        %v5181 = vunpack.c.l.b16 %v4668
        %v5182 = vunpack.c.l.b16 %v4669
        %v5183 = vunpack.c.l.b16 %v4670
        %v5184 = vunpack.c.l.b16 %v4671
        %v5185 = vunpack.c.l.b16 %v4672
        %v5186 = vunpack.c.l.b16 %v4673
        %v5187 = vunpack.c.l.b16 %v4674
        %v5188 = vunpack.c.l.b16 %v4675
        %v5189 = vunpack.c.l.b16 %v4676
        %v5190 = vunpack.c.l.b16 %v4677
        %v5191 = vunpack.c.l.b16 %v4678
        %v5192 = vunpack.c.l.b16 %v4679
        %v5193 = vunpack.c.l.b16 %v4680
        %v5194 = vunpack.c.l.b16 %v4681
        %v5195 = vunpack.c.l.b16 %v4682
        %v5196 = vunpack.c.l.b16 %v4683
        %v5197 = vunpack.c.l.b16 %v4684
        %v5198 = vunpack.c.l.b16 %v4685
        %v5199 = vunpack.c.l.b16 %v4686
        %v5200 = vunpack.c.l.b16 %v4687
        %v5201 = vunpack.c.l.b16 %v4688
        %v5202 = vunpack.c.l.b16 %v4689
        %v5203 = vunpack.c.l.b16 %v4690
        %v5204 = vunpack.c.l.b16 %v4691
        %v5205 = vunpack.c.l.b16 %v4692
        %v5206 = vunpack.c.l.b16 %v4693
        %v5207 = vunpack.c.l.b16 %v4694
        %v5208 = vunpack.c.l.b16 %v4695
        %v5209 = vunpack.c.l.b16 %v4696
        %v5210 = vunpack.c.l.b16 %v4697
        %v5211 = vunpack.c.l.b16 %v4698
        %v5212 = vunpack.c.l.b16 %v4699
        %v5213 = vunpack.c.l.b16 %v4700
        %v5214 = vunpack.c.l.b16 %v4701
        %v5215 = vunpack.c.l.b16 %v4702
        %v5216 = vunpack.c.l.b16 %v4703
        %v5217 = vunpack.c.l.b16 %v4704
        %v5218 = vunpack.c.l.b16 %v4705
        %v5219 = vunpack.c.l.b16 %v4706
        %v5220 = vunpack.c.l.b16 %v4707
        %v5221 = vunpack.c.l.b16 %v4708
        %v5222 = vunpack.c.l.b16 %v4709
        %v5223 = vunpack.c.l.b16 %v4710
        %v5224 = vunpack.c.l.b16 %v4711
        %v5225 = vunpack.c.l.b16 %v4712
        %v5226 = vunpack.c.l.b16 %v4713
        %v5227 = vunpack.c.l.b16 %v4714
        %v5228 = vunpack.c.l.b16 %v4715
        %v5229 = vunpack.c.l.b16 %v4716
        %v5230 = vunpack.c.l.b16 %v4717
        %v5231 = vunpack.c.l.b16 %v4718
        %v5232 = vunpack.c.l.b16 %v4719
        %v5233 = vunpack.c.l.b16 %v4720
        %v5234 = vunpack.c.l.b16 %v4721
        %v5235 = vunpack.c.l.b16 %v4722
        %v5236 = vunpack.c.l.b16 %v4723
        %v5237 = vunpack.c.l.b16 %v4724
        %v5238 = vunpack.c.l.b16 %v4725
        %v5239 = vunpack.c.l.b16 %v4726
        %v5240 = vunpack.c.l.b16 %v4727
        %v5241 = vunpack.c.l.b16 %v4728
        %v5242 = vunpack.c.l.b16 %v4729
        %v5243 = vunpack.c.l.b16 %v4730
        %v5244 = vunpack.c.l.b16 %v4731
        %v5245 = vunpack.c.l.b16 %v4732
        %v5246 = vunpack.c.l.b16 %v4733
        %v5247 = vunpack.c.l.b16 %v4734
        %v5248 = vunpack.c.l.b16 %v4735
        %v5249 = vunpack.c.l.b16 %v4736
        %v5250 = vunpack.c.l.b16 %v4737
        %v5251 = vunpack.c.l.b16 %v4738
        %v5252 = vunpack.c.l.b16 %v4739
        %v5253 = vunpack.c.l.b16 %v4740
        %v5254 = vunpack.c.l.b16 %v4741
        %v5255 = vunpack.c.l.b16 %v4742
        %v5256 = vunpack.c.l.b16 %v4743
        %v5257 = vunpack.c.l.b16 %v4744
        %v5258 = vunpack.c.l.b16 %v4745
        %v5259 = vunpack.c.l.b16 %v4746
        %v5260 = vunpack.c.l.b16 %v4747
        %v5261 = vunpack.c.l.b16 %v4748
        %v5262 = vunpack.c.l.b16 %v4749
        %v5263 = vunpack.c.l.b16 %v4750
        %v5264 = vunpack.c.l.b16 %v4751
        %v5265 = vunpack.c.l.b16 %v4752
        %v5266 = vunpack.c.l.b16 %v4753
        %v5267 = vunpack.c.l.b16 %v4754
        %v5268 = vunpack.c.l.b16 %v4755
        %v5269 = vunpack.c.l.b16 %v4756
        %v5270 = vunpack.c.l.b16 %v4757
        %v5271 = vunpack.c.l.b16 %v4758
        %v5272 = vunpack.c.l.b16 %v4759
        %v5273 = vunpack.c.l.b16 %v4760
        %v5274 = vunpack.c.l.b16 %v4761
        %v5275 = vunpack.c.l.b16 %v4762
        %v5276 = vunpack.c.l.b16 %v4763
        %v5277 = vunpack.c.l.b16 %v4764
        %v5278 = vunpack.c.l.b16 %v4765
        %v5279 = vunpack.c.l.b16 %v4766
        %v5280 = vunpack.c.l.b16 %v4767
        %v5281 = vunpack.c.l.b16 %v4768
        %v5282 = vunpack.c.l.b16 %v4769
        %v5283 = vunpack.c.l.b16 %v4770
        %v5284 = vunpack.c.l.b16 %v4771
        %v5285 = vunpack.c.l.b16 %v4772
        %v5286 = vunpack.c.l.b16 %v4773
        %v5287 = vunpack.c.l.b16 %v4774
        %v5288 = vunpack.c.l.b16 %v4775
        %v5289 = vunpack.c.l.b16 %v4776
        %v5290 = vunpack.c.l.b16 %v4777
        %v5291 = vunpack.c.l.b16 %v4778
        %v5292 = vunpack.c.l.b16 %v4779
        %v5293 = vunpack.c.l.b16 %v4780
        %v5294 = vunpack.c.l.b16 %v4781
        %v5295 = vunpack.c.l.b16 %v4782
        %v5296 = vunpack.c.l.b16 %v4783
        %v5297 = vunpack.c.l.b16 %v4784
        %v5298 = vunpack.c.l.b16 %v4785
        %v5299 = vunpack.c.l.b16 %v4786
        %v5300 = vunpack.c.l.b16 %v4787
        %v5301 = vunpack.c.l.b16 %v4788
        %v5302 = vunpack.c.l.b16 %v4789
        %v5303 = vunpack.c.l.b16 %v4790
        %v5304 = vunpack.c.l.b16 %v4791
        %v5305 = vunpack.c.l.b16 %v4792
        %v5306 = vunpack.c.l.b16 %v4793
        %v5307 = vunpack.c.l.b16 %v4794
        %v5308 = vunpack.c.l.b16 %v4795
        %v5309 = vunpack.c.l.b16 %v4796
        %v5310 = vunpack.c.l.b16 %v4797
        %v5311 = vunpack.c.l.b16 %v4798
        %v5312 = vunpack.c.l.b16 %v4799
        %v5313 = vunpack.c.l.b16 %v4800
        %v5314 = vunpack.c.l.b16 %v4801
        %v5315 = vunpack.c.l.b16 %v4802
        %v5316 = vunpack.c.l.b16 %v4803
        %v5317 = vunpack.c.l.b16 %v4804
        %v5318 = vunpack.c.l.b16 %v4805
        %v5319 = vunpack.c.l.b16 %v4806
        %v5320 = vunpack.c.l.b16 %v4807
        %v5321 = vunpack.c.l.b16 %v4808
        %v5322 = vunpack.c.l.b16 %v4809
        %v5323 = vunpack.c.l.b16 %v4810
        %v5324 = vunpack.c.l.b16 %v4811
        %v5325 = vunpack.c.l.b16 %v4812
        %v5326 = vunpack.c.l.b16 %v4813
        %v5327 = vunpack.c.l.b16 %v4814
        %v5328 = vunpack.c.l.b16 %v4815
        %v5329 = vunpack.c.l.b16 %v4816
        %v5330 = vunpack.c.l.b16 %v4817
        %v5331 = vunpack.c.l.b16 %v4818
        %v5332 = vunpack.c.l.b16 %v4819
        %v5333 = vunpack.c.l.b16 %v4820
        %v5334 = vunpack.c.l.b16 %v4821
        %v5335 = vunpack.c.l.b16 %v4822
        %v5336 = vunpack.c.l.b16 %v4823
        %v5337 = vunpack.c.l.b16 %v4824
        %v5338 = vunpack.c.l.b16 %v4825
        %v5339 = vunpack.c.l.b16 %v4826
        %v5340 = vunpack.c.l.b16 %v4827
        %v5341 = vunpack.c.l.b16 %v4828
        %v5342 = vunpack.c.l.b16 %v4829
        %v5343 = vunpack.c.l.b16 %v4830
        %v5344 = vunpack.c.l.b16 %v4831
        %v5345 = vunpack.c.l.b16 %v4832
        %v5346 = vunpack.c.l.b16 %v4833
        %v5347 = vunpack.c.l.b16 %v4834
        %v5348 = vunpack.c.l.b16 %v4835
        %v5349 = vunpack.c.l.b16 %v4836
        %v5350 = vunpack.c.l.b16 %v4837
        %v5351 = vunpack.c.l.b16 %v4838
        %v5352 = vunpack.c.l.b16 %v4839
        %v5353 = vunpack.c.l.b16 %v4840
        %v5354 = vunpack.c.l.b16 %v4841
        %v5355 = vunpack.c.l.b16 %v4842
        %v5356 = vunpack.c.l.b16 %v4843
        %v5357 = vunpack.c.l.b16 %v4844
        %v5358 = vunpack.c.l.b16 %v4845
        %v5359 = vunpack.c.l.b16 %v4846
        %v5360 = vunpack.c.l.b16 %v4847
        %v5361 = vunpack.c.l.b16 %v4848
        %v5362 = vunpack.c.l.b16 %v4849
        %v5363 = vunpack.c.l.b16 %v4850
        %v5364 = vunpack.c.l.b16 %v4851
        %v5365 = vunpack.c.l.b16 %v4852
        %v5366 = vunpack.c.l.b16 %v4853
        %v5367 = vunpack.c.l.b16 %v4854
        %v5368 = vunpack.c.l.b16 %v4855
        %v5369 = vunpack.c.l.b16 %v4856
        %v5370 = vunpack.c.l.b16 %v4857
        %v5371 = vunpack.c.l.b16 %v4858
        %v5372 = vunpack.c.l.b16 %v4859
        %v5373 = vunpack.c.l.b16 %v4860
        %v5374 = vunpack.c.l.b16 %v4861
        %v5375 = vunpack.c.l.b16 %v4862
        %v5376 = vunpack.c.l.b16 %v4863
        %v5377 = vunpack.c.l.b16 %v4864
        %v5378 = vunpack.c.l.b16 %v4865
        %v5379 = vunpack.c.l.b16 %v4866
        %v5380 = vunpack.c.l.b16 %v4867
        %v5381 = vunpack.c.l.b16 %v4868
        %v5382 = vunpack.c.l.b16 %v4869
        %v5383 = vunpack.c.l.b16 %v4870
        %v5384 = vunpack.c.l.b16 %v4871
        %v5385 = vunpack.c.l.b16 %v4872
        %v5386 = vunpack.c.l.b16 %v4873
        %v5387 = vunpack.c.l.b16 %v4874
        %v5388 = vunpack.c.l.b16 %v4875
        %v5389 = vunpack.c.l.b16 %v4876
        %v5390 = vunpack.c.l.b16 %v4877
        %v5391 = vunpack.c.l.b16 %v4878
        %v5392 = vunpack.c.l.b16 %v4879
        %v5393 = vunpack.c.l.b16 %v4880
        %v5394 = vunpack.c.l.b16 %v4881
        %v5395 = vunpack.c.l.b16 %v4882
        %v5396 = vunpack.c.l.b16 %v4883
        %v5397 = vunpack.c.l.b16 %v4884
        %v5398 = vunpack.c.l.b16 %v4885
        %v5399 = vunpack.c.l.b16 %v4886
        %v5400 = vunpack.c.l.b16 %v4887
        %v5401 = vunpack.c.l.b16 %v4888
        %v5402 = vunpack.c.l.b16 %v4889
        %v5403 = vunpack.c.l.b16 %v4890
        %v5404 = vunpack.c.l.b16 %v4891
        %v5405 = vunpack.c.l.b16 %v4892
        %v5406 = vpack.c.b16 %v5151, %v5150
        %v5407 = vpack.c.b16 %v5153, %v5152
        %v5408 = vpack.c.b16 %v5155, %v5154
        %v5409 = vpack.c.b16 %v5157, %v5156
        %v5410 = vpack.c.b16 %v5159, %v5158
        %v5411 = vpack.c.b16 %v5161, %v5160
        %v5412 = vpack.c.b16 %v5163, %v5162
        %v5413 = vpack.c.b16 %v5165, %v5164
        %v5414 = vpack.c.b16 %v5167, %v5166
        %v5415 = vpack.c.b16 %v5169, %v5168
        %v5416 = vpack.c.b16 %v5171, %v5170
        %v5417 = vpack.c.b16 %v5173, %v5172
        %v5418 = vpack.c.b16 %v5175, %v5174
        %v5419 = vpack.c.b16 %v5177, %v5176
        %v5420 = vpack.c.b16 %v5179, %v5178
        %v5421 = vpack.c.b16 %v5181, %v5180
        %v5422 = vpack.c.b16 %v5183, %v5182
        %v5423 = vpack.c.b16 %v5185, %v5184
        %v5424 = vpack.c.b16 %v5187, %v5186
        %v5425 = vpack.c.b16 %v5189, %v5188
        %v5426 = vpack.c.b16 %v5191, %v5190
        %v5427 = vpack.c.b16 %v5193, %v5192
        %v5428 = vpack.c.b16 %v5195, %v5194
        %v5429 = vpack.c.b16 %v5197, %v5196
        %v5430 = vpack.c.b16 %v5199, %v5198
        %v5431 = vpack.c.b16 %v5201, %v5200
        %v5432 = vpack.c.b16 %v5203, %v5202
        %v5433 = vpack.c.b16 %v5205, %v5204
        %v5434 = vpack.c.b16 %v5207, %v5206
        %v5435 = vpack.c.b16 %v5209, %v5208
        %v5436 = vpack.c.b16 %v5211, %v5210
        %v5437 = vpack.c.b16 %v5213, %v5212
        %v5438 = vpack.c.b16 %v5215, %v5214
        %v5439 = vpack.c.b16 %v5217, %v5216
        %v5440 = vpack.c.b16 %v5219, %v5218
        %v5441 = vpack.c.b16 %v5221, %v5220
        %v5442 = vpack.c.b16 %v5223, %v5222
        %v5443 = vpack.c.b16 %v5225, %v5224
        %v5444 = vpack.c.b16 %v5227, %v5226
        %v5445 = vpack.c.b16 %v5229, %v5228
        %v5446 = vpack.c.b16 %v5231, %v5230
        %v5447 = vpack.c.b16 %v5233, %v5232
        %v5448 = vpack.c.b16 %v5235, %v5234
        %v5449 = vpack.c.b16 %v5237, %v5236
        %v5450 = vpack.c.b16 %v5239, %v5238
        %v5451 = vpack.c.b16 %v5241, %v5240
        %v5452 = vpack.c.b16 %v5243, %v5242
        %v5453 = vpack.c.b16 %v5245, %v5244
        %v5454 = vpack.c.b16 %v5247, %v5246
        %v5455 = vpack.c.b16 %v5249, %v5248
        %v5456 = vpack.c.b16 %v5251, %v5250
        %v5457 = vpack.c.b16 %v5253, %v5252
        %v5458 = vpack.c.b16 %v5255, %v5254
        %v5459 = vpack.c.b16 %v5257, %v5256
        %v5460 = vpack.c.b16 %v5259, %v5258
        %v5461 = vpack.c.b16 %v5261, %v5260
        %v5462 = vpack.c.b16 %v5263, %v5262
        %v5463 = vpack.c.b16 %v5265, %v5264
        %v5464 = vpack.c.b16 %v5267, %v5266
        %v5465 = vpack.c.b16 %v5269, %v5268
        %v5466 = vpack.c.b16 %v5271, %v5270
        %v5467 = vpack.c.b16 %v5273, %v5272
        %v5468 = vpack.c.b16 %v5275, %v5274
        %v5469 = vpack.c.b16 %v5277, %v5276
        %v5470 = vpack.c.b16 %v5279, %v5278
        %v5471 = vpack.c.b16 %v5281, %v5280
        %v5472 = vpack.c.b16 %v5283, %v5282
        %v5473 = vpack.c.b16 %v5285, %v5284
        %v5474 = vpack.c.b16 %v5287, %v5286
        %v5475 = vpack.c.b16 %v5289, %v5288
        %v5476 = vpack.c.b16 %v5291, %v5290
        %v5477 = vpack.c.b16 %v5293, %v5292
        %v5478 = vpack.c.b16 %v5295, %v5294
        %v5479 = vpack.c.b16 %v5297, %v5296
        %v5480 = vpack.c.b16 %v5299, %v5298
        %v5481 = vpack.c.b16 %v5301, %v5300
        %v5482 = vpack.c.b16 %v5303, %v5302
        %v5483 = vpack.c.b16 %v5305, %v5304
        %v5484 = vpack.c.b16 %v5307, %v5306
        %v5485 = vpack.c.b16 %v5309, %v5308
        %v5486 = vpack.c.b16 %v5311, %v5310
        %v5487 = vpack.c.b16 %v5313, %v5312
        %v5488 = vpack.c.b16 %v5315, %v5314
        %v5489 = vpack.c.b16 %v5317, %v5316
        %v5490 = vpack.c.b16 %v5319, %v5318
        %v5491 = vpack.c.b16 %v5321, %v5320
        %v5492 = vpack.c.b16 %v5323, %v5322
        %v5493 = vpack.c.b16 %v5325, %v5324
        %v5494 = vpack.c.b16 %v5327, %v5326
        %v5495 = vpack.c.b16 %v5329, %v5328
        %v5496 = vpack.c.b16 %v5331, %v5330
        %v5497 = vpack.c.b16 %v5333, %v5332
        %v5498 = vpack.c.b16 %v5335, %v5334
        %v5499 = vpack.c.b16 %v5337, %v5336
        %v5500 = vpack.c.b16 %v5339, %v5338
        %v5501 = vpack.c.b16 %v5341, %v5340
        %v5502 = vpack.c.b16 %v5343, %v5342
        %v5503 = vpack.c.b16 %v5345, %v5344
        %v5504 = vpack.c.b16 %v5347, %v5346
        %v5505 = vpack.c.b16 %v5349, %v5348
        %v5506 = vpack.c.b16 %v5351, %v5350
        %v5507 = vpack.c.b16 %v5353, %v5352
        %v5508 = vpack.c.b16 %v5355, %v5354
        %v5509 = vpack.c.b16 %v5357, %v5356
        %v5510 = vpack.c.b16 %v5359, %v5358
        %v5511 = vpack.c.b16 %v5361, %v5360
        %v5512 = vpack.c.b16 %v5363, %v5362
        %v5513 = vpack.c.b16 %v5365, %v5364
        %v5514 = vpack.c.b16 %v5367, %v5366
        %v5515 = vpack.c.b16 %v5369, %v5368
        %v5516 = vpack.c.b16 %v5371, %v5370
        %v5517 = vpack.c.b16 %v5373, %v5372
        %v5518 = vpack.c.b16 %v5375, %v5374
        %v5519 = vpack.c.b16 %v5377, %v5376
        %v5520 = vpack.c.b16 %v5379, %v5378
        %v5521 = vpack.c.b16 %v5381, %v5380
        %v5522 = vpack.c.b16 %v5383, %v5382
        %v5523 = vpack.c.b16 %v5385, %v5384
        %v5524 = vpack.c.b16 %v5387, %v5386
        %v5525 = vpack.c.b16 %v5389, %v5388
        %v5526 = vpack.c.b16 %v5391, %v5390
        %v5527 = vpack.c.b16 %v5393, %v5392
        %v5528 = vpack.c.b16 %v5395, %v5394
        %v5529 = vpack.c.b16 %v5397, %v5396
        %v5530 = vpack.c.b16 %v5399, %v5398
        %v5531 = vpack.c.b16 %v5401, %v5400
        %v5532 = vpack.c.b16 %v5403, %v5402
        %v5533 = vpack.c.b16 %v5405, %v5404
        %5662 = vmatpush.bf16.msra.mxu0 %v5413
        %5663 = vmatpush.bf16.msra.mxu0 %v5412
        %5664 = vmatpush.bf16.msra.mxu0 %v5411
        %5665 = vmatpush.bf16.msra.mxu0 %v5410
        %5666 = vmatpush.bf16.msra.mxu0 %v5409
        %5667 = vmatpush.bf16.msra.mxu0 %v5408
        %5668 = vmatpush.bf16.msra.mxu0 %v5407
        %5669 = vmatpush.bf16.msra.mxu0 %v5406
        %5670 = vmatmul.bf16.gmra.mxu0 %v4621
        %v5671 = vpop.f32.mrf.mxu0
        %v5672 = vadd.f32 %v4893, %v5671
        %v5673 = vpop.f32.mrf.mxu0
        %5674 = vdwg.mxu0
        %5675 = vmatpush.bf16.msra.mxu0 %v5421
        %5676 = vmatpush.bf16.msra.mxu0 %v5420
        %5677 = vmatpush.bf16.msra.mxu0 %v5419
        %5678 = vmatpush.bf16.msra.mxu0 %v5418
        %5679 = vmatpush.bf16.msra.mxu0 %v5417
        %5680 = vmatpush.bf16.msra.mxu0 %v5416
        %5681 = vmatpush.bf16.msra.mxu0 %v5415
        %5682 = vmatpush.bf16.msra.mxu0 %v5414
        %5683 = vmatmul.bf16.gmra.mxu0 %v4622
        %v5684 = vpop.f32.mrf.mxu0
        %v5685 = vadd.f32 %v5672, %v5684
        %v5686 = vpop.f32.mrf.mxu0
        %5687 = vdwg.mxu0
        %5688 = vmatpush.bf16.msra.mxu0 %v5429
        %5689 = vmatpush.bf16.msra.mxu0 %v5428
        %5690 = vmatpush.bf16.msra.mxu0 %v5427
        %5691 = vmatpush.bf16.msra.mxu0 %v5426
        %5692 = vmatpush.bf16.msra.mxu0 %v5425
        %5693 = vmatpush.bf16.msra.mxu0 %v5424
        %5694 = vmatpush.bf16.msra.mxu0 %v5423
        %5695 = vmatpush.bf16.msra.mxu0 %v5422
        %5696 = vmatmul.bf16.gmra.mxu0 %v4623
        %v5697 = vpop.f32.mrf.mxu0
        %v5698 = vadd.f32 %v5685, %v5697
        %v5699 = vpop.f32.mrf.mxu0
        %5700 = vdwg.mxu0
        %5701 = vmatpush.bf16.msra.mxu0 %v5437
        %5702 = vmatpush.bf16.msra.mxu0 %v5436
        %5703 = vmatpush.bf16.msra.mxu0 %v5435
        %5704 = vmatpush.bf16.msra.mxu0 %v5434
        %5705 = vmatpush.bf16.msra.mxu0 %v5433
        %5706 = vmatpush.bf16.msra.mxu0 %v5432
        %5707 = vmatpush.bf16.msra.mxu0 %v5431
        %5708 = vmatpush.bf16.msra.mxu0 %v5430
        %5709 = vmatmul.bf16.gmra.mxu0 %v4624
        %v5710 = vpop.f32.mrf.mxu0
        %v5711 = vadd.f32 %v5698, %v5710
        %v5712 = vpop.f32.mrf.mxu0
        %5713 = vdwg.mxu0
        %5714 = vmatpush.bf16.msra.mxu0 %v5445
        %5715 = vmatpush.bf16.msra.mxu0 %v5444
        %5716 = vmatpush.bf16.msra.mxu0 %v5443
        %5717 = vmatpush.bf16.msra.mxu0 %v5442
        %5718 = vmatpush.bf16.msra.mxu0 %v5441
        %5719 = vmatpush.bf16.msra.mxu0 %v5440
        %5720 = vmatpush.bf16.msra.mxu0 %v5439
        %5721 = vmatpush.bf16.msra.mxu0 %v5438
        %5722 = vmatmul.bf16.gmra.mxu0 %v4625
        %v5723 = vpop.f32.mrf.mxu0
        %v5724 = vadd.f32 %v5711, %v5723
        %v5725 = vpop.f32.mrf.mxu0
        %5726 = vdwg.mxu0
        %5727 = vmatpush.bf16.msra.mxu0 %v5453
        %5728 = vmatpush.bf16.msra.mxu0 %v5452
        %5729 = vmatpush.bf16.msra.mxu0 %v5451
        %5730 = vmatpush.bf16.msra.mxu0 %v5450
        %5731 = vmatpush.bf16.msra.mxu0 %v5449
        %5732 = vmatpush.bf16.msra.mxu0 %v5448
        %5733 = vmatpush.bf16.msra.mxu0 %v5447
        %5734 = vmatpush.bf16.msra.mxu0 %v5446
        %5735 = vmatmul.bf16.gmra.mxu0 %v4626
        %v5736 = vpop.f32.mrf.mxu0
        %v5737 = vadd.f32 %v5724, %v5736
        %v5738 = vpop.f32.mrf.mxu0
        %5739 = vdwg.mxu0
        %5740 = vmatpush.bf16.msra.mxu0 %v5461
        %5741 = vmatpush.bf16.msra.mxu0 %v5460
        %5742 = vmatpush.bf16.msra.mxu0 %v5459
        %5743 = vmatpush.bf16.msra.mxu0 %v5458
        %5744 = vmatpush.bf16.msra.mxu0 %v5457
        %5745 = vmatpush.bf16.msra.mxu0 %v5456
        %5746 = vmatpush.bf16.msra.mxu0 %v5455
        %5747 = vmatpush.bf16.msra.mxu0 %v5454
        %5748 = vmatmul.bf16.gmra.mxu0 %v4627
        %v5749 = vpop.f32.mrf.mxu0
        %v5750 = vadd.f32 %v5737, %v5749
        %v5751 = vpop.f32.mrf.mxu0
        %5752 = vdwg.mxu0
        %5753 = vmatpush.bf16.msra.mxu0 %v5469
        %5754 = vmatpush.bf16.msra.mxu0 %v5468
        %5755 = vmatpush.bf16.msra.mxu0 %v5467
        %5756 = vmatpush.bf16.msra.mxu0 %v5466
        %5757 = vmatpush.bf16.msra.mxu0 %v5465
        %5758 = vmatpush.bf16.msra.mxu0 %v5464
        %5759 = vmatpush.bf16.msra.mxu0 %v5463
        %5760 = vmatpush.bf16.msra.mxu0 %v5462
        %5761 = vmatmul.bf16.gmra.mxu0 %v4628
        %v5762 = vpop.f32.mrf.mxu0
        %v5763 = vadd.f32 %v5750, %v5762
        %v5764 = vpop.f32.mrf.mxu0
        %5765 = vdwg.mxu0
        %5766 = vmatpush.bf16.msra.mxu0 %v5477
        %5767 = vmatpush.bf16.msra.mxu0 %v5476
        %5768 = vmatpush.bf16.msra.mxu0 %v5475
        %5769 = vmatpush.bf16.msra.mxu0 %v5474
        %5770 = vmatpush.bf16.msra.mxu0 %v5473
        %5771 = vmatpush.bf16.msra.mxu0 %v5472
        %5772 = vmatpush.bf16.msra.mxu0 %v5471
        %5773 = vmatpush.bf16.msra.mxu0 %v5470
        %5774 = vmatmul.bf16.gmra.mxu0 %v4629
        %v5775 = vpop.f32.mrf.mxu0
        %v5776 = vadd.f32 %v5763, %v5775
        %v5777 = vpop.f32.mrf.mxu0
        %5778 = vdwg.mxu0
        %5779 = vmatpush.bf16.msra.mxu0 %v5485
        %5780 = vmatpush.bf16.msra.mxu0 %v5484
        %5781 = vmatpush.bf16.msra.mxu0 %v5483
        %5782 = vmatpush.bf16.msra.mxu0 %v5482
        %5783 = vmatpush.bf16.msra.mxu0 %v5481
        %5784 = vmatpush.bf16.msra.mxu0 %v5480
        %5785 = vmatpush.bf16.msra.mxu0 %v5479
        %5786 = vmatpush.bf16.msra.mxu0 %v5478
        %5787 = vmatmul.bf16.gmra.mxu0 %v4630
        %v5788 = vpop.f32.mrf.mxu0
        %v5789 = vadd.f32 %v5776, %v5788
        %v5790 = vpop.f32.mrf.mxu0
        %5791 = vdwg.mxu0
        %5792 = vmatpush.bf16.msra.mxu0 %v5493
        %5793 = vmatpush.bf16.msra.mxu0 %v5492
        %5794 = vmatpush.bf16.msra.mxu0 %v5491
        %5795 = vmatpush.bf16.msra.mxu0 %v5490
        %5796 = vmatpush.bf16.msra.mxu0 %v5489
        %5797 = vmatpush.bf16.msra.mxu0 %v5488
        %5798 = vmatpush.bf16.msra.mxu0 %v5487
        %5799 = vmatpush.bf16.msra.mxu0 %v5486
        %5800 = vmatmul.bf16.gmra.mxu0 %v4631
        %v5801 = vpop.f32.mrf.mxu0
        %v5802 = vadd.f32 %v5789, %v5801
        %v5803 = vpop.f32.mrf.mxu0
        %5804 = vdwg.mxu0
        %5805 = vmatpush.bf16.msra.mxu0 %v5501
        %5806 = vmatpush.bf16.msra.mxu0 %v5500
        %5807 = vmatpush.bf16.msra.mxu0 %v5499
        %5808 = vmatpush.bf16.msra.mxu0 %v5498
        %5809 = vmatpush.bf16.msra.mxu0 %v5497
        %5810 = vmatpush.bf16.msra.mxu0 %v5496
        %5811 = vmatpush.bf16.msra.mxu0 %v5495
        %5812 = vmatpush.bf16.msra.mxu0 %v5494
        %5813 = vmatmul.bf16.gmra.mxu0 %v4632
        %v5814 = vpop.f32.mrf.mxu0
        %v5815 = vadd.f32 %v5802, %v5814
        %v5816 = vpop.f32.mrf.mxu0
        %5817 = vdwg.mxu0
        %5818 = vmatpush.bf16.msra.mxu0 %v5509
        %5819 = vmatpush.bf16.msra.mxu0 %v5508
        %5820 = vmatpush.bf16.msra.mxu0 %v5507
        %5821 = vmatpush.bf16.msra.mxu0 %v5506
        %5822 = vmatpush.bf16.msra.mxu0 %v5505
        %5823 = vmatpush.bf16.msra.mxu0 %v5504
        %5824 = vmatpush.bf16.msra.mxu0 %v5503
        %5825 = vmatpush.bf16.msra.mxu0 %v5502
        %5826 = vmatmul.bf16.gmra.mxu0 %v4633
        %v5827 = vpop.f32.mrf.mxu0
        %v5828 = vadd.f32 %v5815, %v5827
        %v5829 = vpop.f32.mrf.mxu0
        %5830 = vdwg.mxu0
        %5831 = vmatpush.bf16.msra.mxu0 %v5517
        %5832 = vmatpush.bf16.msra.mxu0 %v5516
        %5833 = vmatpush.bf16.msra.mxu0 %v5515
        %5834 = vmatpush.bf16.msra.mxu0 %v5514
        %5835 = vmatpush.bf16.msra.mxu0 %v5513
        %5836 = vmatpush.bf16.msra.mxu0 %v5512
        %5837 = vmatpush.bf16.msra.mxu0 %v5511
        %5838 = vmatpush.bf16.msra.mxu0 %v5510
        %5839 = vmatmul.bf16.gmra.mxu0 %v4634
        %v5840 = vpop.f32.mrf.mxu0
        %v5841 = vadd.f32 %v5828, %v5840
        %v5842 = vpop.f32.mrf.mxu0
        %5843 = vdwg.mxu0
        %5844 = vmatpush.bf16.msra.mxu0 %v5525
        %5845 = vmatpush.bf16.msra.mxu0 %v5524
        %5846 = vmatpush.bf16.msra.mxu0 %v5523
        %5847 = vmatpush.bf16.msra.mxu0 %v5522
        %5848 = vmatpush.bf16.msra.mxu0 %v5521
        %5849 = vmatpush.bf16.msra.mxu0 %v5520
        %5850 = vmatpush.bf16.msra.mxu0 %v5519
        %5851 = vmatpush.bf16.msra.mxu0 %v5518
        %5852 = vmatmul.bf16.gmra.mxu0 %v4635
        %v5853 = vpop.f32.mrf.mxu0
        %v5854 = vadd.f32 %v5841, %v5853
        %v5855 = vpop.f32.mrf.mxu0
        %5856 = vdwg.mxu0
        %5857 = vmatpush.bf16.msra.mxu0 %v5533
        %5858 = vmatpush.bf16.msra.mxu0 %v5532
        %5859 = vmatpush.bf16.msra.mxu0 %v5531
        %5860 = vmatpush.bf16.msra.mxu0 %v5530
        %5861 = vmatpush.bf16.msra.mxu0 %v5529
        %5862 = vmatpush.bf16.msra.mxu0 %v5528
        %5863 = vmatpush.bf16.msra.mxu0 %v5527
        %5864 = vmatpush.bf16.msra.mxu0 %v5526
        %5865 = vmatmul.bf16.gmra.mxu0 %v4636
        %v5866 = vpop.f32.mrf.mxu0
        %v5867 = vadd.f32 %v5854, %v5866
        %v5868 = vpop.f32.mrf.mxu0
        %5869 = vdwg.mxu0
        %v5871 = vrot.slane %v5867, 1
        %v5873 = vadd.f32 %v3968, %v5871
        %v5874 = vld [vmem:[%s59] sm:$0x1]
        %v5875 = vld [vmem:[%s61] sm:$0x1]
        %v5876 = vsel %vm3938, %v5873, 0.0
        %5877 = vadd.xlane.f32.xlu0 %v5876
        %v5878 = vpop.xlane.xlu0 %5877
        %v5879 = vmul.f32 %v5878, %v1175
        %v5880 = vsub.f32 %v5873, %v5879
        %v5881 = vmul.f32 %v5880, %v5880
        %v5882 = vsel %vm3938, %v5881, 0.0
        %5883 = vadd.xlane.f32.xlu0 %v5882
        %v5884 = vpop.xlane.xlu0 %5883
        %v5885 = vmul.f32 %v5884, %v1175
        %v5886 = vadd.f32 %v5885, 1e-05
        %v5887 = vrsqrt.pop %v5886
        %v5888 = vmul.f32 %v5887, %v5886
        %v5889 = vmul.f32 %v5888, %v5887
        %v5890 = vmul.f32 0.5, %v5889
        %v5891 = vsub.f32 1.5, %v5890
        %v5892 = vmul.f32 %v5887, %v5891
        %vm5893 = vweird.f32 %v5886
        %vm5894 = vweird.f32 %v5887
        %vm5895 = vmor %vm5893, %vm5894
        %v5896 = vsel %vm5895, %v5887, %v5892
        %v5897 = vmul.f32 %v5880, %v5896
        %v5899 = vperm.slane %v5874, 0
        %v5901 = vmul.f32 %v5897, %v5899
        %v5903 = vperm.slane %v5875, 0
        %v5905 = vadd.f32 %v5901, %v5903
        %v5906 = vpack.c.bf16 %v5905, %v5905
        %v5907 = vld [vmem:[%s63] sm:$0xff]
        %v5908 = vld [vmem:[%s63 + $0x8] sm:$0xff]
        %v5909 = vld [vmem:[%s63 + $0x10] sm:$0xff]
        %v5910 = vld [vmem:[%s63 + $0x18] sm:$0xff]
        %v5911 = vld [vmem:[%s63 + $0x20] sm:$0xff]
        %v5912 = vld [vmem:[%s63 + $0x28] sm:$0xff]
        %v5913 = vld [vmem:[%s63 + $0x30] sm:$0xff]
        %v5914 = vld [vmem:[%s63 + $0x38] sm:$0xff]
        %v5915 = vld [vmem:[%s65] sm:$0x3]
        %v5917 = vshrl.u32 %v5906, 16
        %v5919 = vrot.slane %v5917, 3
        %v5928 = vunpack.c.l.b16 %v5907
        %v5929 = vunpack.c.h.b16 %v5907
        %v5930 = vunpack.c.l.b16 %v5908
        %v5931 = vunpack.c.h.b16 %v5908
        %v5932 = vunpack.c.l.b16 %v5909
        %v5933 = vunpack.c.h.b16 %v5909
        %v5934 = vunpack.c.l.b16 %v5910
        %v5935 = vunpack.c.h.b16 %v5910
        %v5936 = vunpack.c.l.b16 %v5911
        %v5937 = vunpack.c.h.b16 %v5911
        %v5938 = vunpack.c.l.b16 %v5912
        %v5939 = vunpack.c.h.b16 %v5912
        %v5940 = vunpack.c.l.b16 %v5913
        %v5941 = vunpack.c.h.b16 %v5913
        %v5942 = vunpack.c.l.b16 %v5914
        %v5943 = vunpack.c.h.b16 %v5914
        %v5944 = vpack.c.b16 %v5930, %v5928
        %v5945 = vpack.c.b16 %v5931, %v5929
        %v5946 = vpack.c.b16 %v5934, %v5932
        %v5947 = vpack.c.b16 %v5935, %v5933
        %v5948 = vpack.c.b16 %v5938, %v5936
        %v5949 = vpack.c.b16 %v5939, %v5937
        %v5950 = vpack.c.b16 %v5942, %v5940
        %v5951 = vpack.c.b16 %v5943, %v5941
        %v5961 = vperm.slane %v5915, 0
        %v5962 = vperm.slane %v5915, 1
        %v5966 = vsel %vm1165, %v5919, 0
        %5968 = vmatpush.bf16.msra.mxu0 0
        %5969 = vmatpush.bf16.msra.mxu0 0
        %5970 = vmatpush.bf16.msra.mxu0 0
        %5971 = vmatpush.bf16.msra.mxu0 0
        %5972 = vmatpush.bf16.msra.mxu0 %v5950
        %5973 = vmatpush.bf16.msra.mxu0 %v5948
        %5974 = vmatpush.bf16.msra.mxu0 %v5946
        %5975 = vmatpush.bf16.msra.mxu0 %v5944
        %5976 = vmatmul.bf16.gmra.mxu0 %v5966
        %v5977 = vpop.f32.mrf.mxu0
        %v5978 = vadd.f32 %v5961, %v5977
        %v5979 = vpop.f32.mrf.mxu0
        %5980 = vdwg.mxu0
        %5981 = vmatpush.bf16.msra.mxu0 0
        %5982 = vmatpush.bf16.msra.mxu0 0
        %5983 = vmatpush.bf16.msra.mxu0 0
        %5984 = vmatpush.bf16.msra.mxu0 0
        %5985 = vmatpush.bf16.msra.mxu0 %v5951
        %5986 = vmatpush.bf16.msra.mxu0 %v5949
        %5987 = vmatpush.bf16.msra.mxu0 %v5947
        %5988 = vmatpush.bf16.msra.mxu0 %v5945
        %5989 = vmatmul.bf16.gmra.mxu0 %v5966
        %v5990 = vpop.f32.mrf.mxu0
        %v5991 = vadd.f32 %v5962, %v5990
        %v5992 = vpop.f32.mrf.mxu0
        %5993 = vdwg.mxu0
        %v5996 = vrot.slane %v5991, 7
        %vm5997 = vcmask 1040384
        %v5998 = vsel %vm5997, %v5978, %v5996
        %v6000 = vlaneseq
        %vm6001 = vcmp.ge.s32.totalorder %v6000, 0
        %vm6002 = vcmp.lt.s32.totalorder %v6000, 256
        %vm6003 = vmand %vm6001, %vm6002
        %6004 = vst.msk [vmem:[%s1018] sm:$0x3] %vm6003, %v5998
        %s6005 = sand.u32 %s792, 1
        %s6006 = scalar_lea.sflag [#allocation3], %s6005
        %s6007 = sand.u32 %s792, 1
        %s6008 = smul.addr %s6007, 2
        %s6009 = scalar_lea.vmem [#allocation2], %s6008
        // Predicated region
        $region153: #{tpu_custom_call.1} parent=151 // pred_check
          %p6010 = pneg %p802
        $region154: #{tpu_custom_call.1} parent=151 // pred_check_branch
          %6012 = sbr.rel (%p6010) target = $region156
        $region155: #{tpu_custom_call.1} parent=151 // pred_region
          %6014 = vsyncadd %s6006, 0
          %s6015 = smul.addr %s81, 2
          %s6016 = scalar_lea.hbm %s67, %s6015
          %s6018 = sshll.u32 %s6009, 4
          %s6019 = int_to_ptr.vmem [resolvable:$true] %s6018
          %s6020 = sshll.u32 %s6016, 4
          %s6021 = int_to_ptr.hbm [resolvable:$true] %s6020
          %6023 = dma.vmem_to_hbm [thread:$0]  %s6019, 32, %s6021, %s6006
        $region156: #{tpu_custom_call.1} parent=151 // pred_fallthru
          _
      $region152: #{tpu_custom_call.1} parent=5 // pred_fallthru
        _
      %p6024 = scmp.le.s32.totalorder 2, %s76
      // Predicated region
      $region157: #{tpu_custom_call.1} parent=5 // pred_check
        %p6025 = pneg %p6024
      $region158: #{tpu_custom_call.1} parent=5 // pred_check_branch
        %6027 = sbr.rel (%p6025) target = $region160
      $region159: #{tpu_custom_call.1} parent=5 // pred_region
        %s6028 = ssub.s32 %s76, 2
        // Predicated region
        $region161: #{tpu_custom_call.1} parent=159 // pred_check
          %p6029 = pneg %p808
        $region162: #{tpu_custom_call.1} parent=159 // pred_check_branch
          %6031 = sbr.rel (%p6029) target = $region164
        $region163: #{tpu_custom_call.1} parent=159 // pred_region
          %s6032 = sand.u32 %s793, 1
          %s6033 = scalar_lea.sflag [#allocation3], %s6032
          %s6034 = sand.u32 %s793, 1
          %s6035 = smul.addr %s6034, 2
          %s6036 = scalar_lea.vmem [#allocation2], %s6035
          %6038 = dma.done %s6033, 32
        $region164: #{tpu_custom_call.1} parent=159 // pred_fallthru
          _
      $region160: #{tpu_custom_call.1} parent=5 // pred_fallthru
        _
    $region6: #{tpu_custom_call.1} parent=1 // loop_footer
      %s80 = sadd.s32 1, %s76
    $region7: #{tpu_custom_call.1} parent=1 // loop_footer_branch
      %75 = sbr.rel target = $region3
    $region8: #{tpu_custom_call.1} parent=1 // loop_exit
      _
    %6039 = vsyncpa [#allocation3], 1
    %s6040 = scalar_lea.sflag [#allocation3], 1
    %6041 = vsyncpa %s6040, 1

</llo_original>
